<compile_context>
chip_gen: v5e
topology: v5e:2x2
jax: 0.10.0
libtpu: 0.0.40
codegen_flags: <defaults>
</compile_context>

<pallas_src>
import numpy as np
import jax
import jax.numpy as jnp
from jax.experimental import pallas as pl
from jax.experimental.pallas import tpu as pltpu

# ---------------- model hyper-parameters (small, consistent with the module) --
BATCH = 2
C, H, W = 4, 16, 16              # NCHW input to the (synthetic) pretrained backbone
D_IN = C * H * W                 # 1024
D_FEAT = 1000                    # pretrained_model output width (per the module)
D_FEAT_PAD = 1024                # lane-aligned padding of the 1000-wide feature
NUM_LEV1 = 8                     # num_lev1_categories
NUM_LEV2 = 16                    # num_lev2_categories
D_OUT = NUM_LEV1 + NUM_LEV2      # 24
OUT_PAD = 128                    # lane-aligned padded head width


def simple_layers_kernel(x_ref, wp_ref, bp_ref, w12_ref, b12_ref, out_ref):
    # Backbone: feat = relu(x @ wp + bp). The activation stream arrives as f32
    # and is cast to bf16 on the VPU (cheaper than a separate wrapper cast).
    x = x_ref[...].astype(jnp.bfloat16)
    feat = jnp.dot(x, wp_ref[...],
                   preferred_element_type=jnp.float32) + bp_ref[...]
    feat = jnp.maximum(feat, 0.0).astype(jnp.bfloat16)

    # Fused + folded heads:  out = feat @ W12_eff + b12_eff, where
    #   cols [0:8)    = x1 = feat @ w1 + b1
    #   cols [8:24)   = x2 = feat @ (w2a + w1 @ w2b) + (b2 + b1 @ w2b)
    #   cols [24:128) = 0 (lane padding)
    # i.e. the original x1 @ w2b correction matmul is pre-folded into W12_eff.
    out = jnp.dot(feat, w12_ref[...],
                  preferred_element_type=jnp.float32) + b12_ref[...]
    out_ref[...] = out.astype(out_ref.dtype)


def prep_kernel_params(params):
    """f32 module params -> padded / bf16 / algebraically-folded kernel operands."""
    wp, bp, w1, b1, w2a, w2b, b2 = params

    wp_p = jnp.zeros((D_IN, D_FEAT_PAD), jnp.float32).at[:, :D_FEAT].set(wp)
    wp_p = wp_p.astype(jnp.bfloat16)

    bp_p = jnp.zeros((1, D_FEAT_PAD), jnp.float32).at[:, :D_FEAT].set(bp)

    # Fold the lev2 dependence on x1 into the head weight/bias (all in f32):
    #   x2 = feat @ w2a + (feat @ w1 + b1) @ w2b + b2
    #      = feat @ (w2a + w1 @ w2b) + (b2 + b1 @ w2b)
    w12_eff = jnp.zeros((D_FEAT_PAD, OUT_PAD), jnp.float32)
    w12_eff = w12_eff.at[:D_FEAT, :NUM_LEV1].set(w1)
    w12_eff = w12_eff.at[:D_FEAT, NUM_LEV1:D_OUT].set(w2a + w1 @ w2b)
    w12_eff = w12_eff.astype(jnp.bfloat16)

    b12_eff = jnp.zeros((1, OUT_PAD), jnp.float32)
    b12_eff = b12_eff.at[:, :NUM_LEV1].set(b1)
    b12_eff = b12_eff.at[:, NUM_LEV1:D_OUT].set(b2 + b1 @ w2b)

    return wp_p, bp_p, w12_eff, b12_eff


def simple_layers_model(x_nchw, kernel_params, m_tile=None):
    """x_nchw: (B, C, H, W) float32. Returns (B, NUM_LEV1 + NUM_LEV2) f32."""
    wp_p, bp_p, w12_eff, b12_eff = kernel_params
    B = x_nchw.shape[0]
    if m_tile is None:
        m_tile = 256 if B >= 256 else 8          # full-sublane minimum tile
    n_m = pl.cdiv(B, m_tile)
    B_pad = n_m * m_tile

    # glue: flatten NCHW -> (B_pad, D_IN); keep f32 (cast happens in-kernel)
    x_flat = x_nchw.reshape(B, -1).astype(jnp.float32)
    if B_pad != B:
        x_flat = jnp.pad(x_flat, ((0, B_pad - B), (0, 0)))

    out_pad = pl.pallas_call(
        simple_layers_kernel,
        out_shape=jax.ShapeDtypeStruct((B_pad, OUT_PAD), jnp.float32),
        grid=(n_m,),
        in_specs=[
            pl.BlockSpec((m_tile, D_IN), lambda i: (i, 0)),        # x streams over M
            pl.BlockSpec((D_IN, D_FEAT_PAD), lambda i: (0, 0)),    # wp  (VMEM-resident)
            pl.BlockSpec((1, D_FEAT_PAD), lambda i: (0, 0)),       # bp  (VMEM-resident)
            pl.BlockSpec((D_FEAT_PAD, OUT_PAD), lambda i: (0, 0)), # W12_eff (resident)
            pl.BlockSpec((1, OUT_PAD), lambda i: (0, 0)),          # b12_eff (resident)
        ],
        out_specs=pl.BlockSpec((m_tile, OUT_PAD), lambda i: (i, 0)),
        compiler_params=pltpu.CompilerParams(
            dimension_semantics=("parallel",),       # shard M across TCs on v7x
            vmem_limit_bytes=32 * 1024 * 1024),
    )(x_flat, wp_p, bp_p, w12_eff, b12_eff)

    return out_pad[:B, :D_OUT]                    # drop batch + lane padding


def init_params(key):
    """Deterministic f32 parameter init; shapes follow the module's __init__."""
    ks = jax.random.split(key, 7)
    # synthetic pretrained backbone: Linear(D_IN -> D_FEAT)
    wp = jax.random.normal(ks[0], (D_IN, D_FEAT), jnp.float32) * 0.02
    bp = jax.random.normal(ks[1], (1, D_FEAT), jnp.float32) * 0.02
    # lev1 = Linear(1000 -> NUM_LEV1)
    w1 = jax.random.normal(ks[2], (D_FEAT, NUM_LEV1), jnp.float32) * 0.02
    b1 = jax.random.normal(ks[3], (1, NUM_LEV1), jnp.float32) * 0.02
    # lev2 = Linear(1000 + NUM_LEV1 -> NUM_LEV2), stored split as W2a / W2b
    w2a = jax.random.normal(ks[4], (D_FEAT, NUM_LEV2), jnp.float32) * 0.02
    w2b = jax.random.normal(ks[5], (NUM_LEV1, NUM_LEV2), jnp.float32) * 0.02
    b2 = jax.random.normal(ks[6], (1, NUM_LEV2), jnp.float32) * 0.02
    return wp, bp, w1, b1, w2a, w2b, b2


def reference_forward(x_nchw, params):
    """Pure-JAX f32 reference of SimpleLayersModel.forward for verification."""
    wp, bp, w1, b1, w2a, w2b, b2 = params
    x = x_nchw.reshape(x_nchw.shape[0], -1)
    feat = jnp.maximum(x @ wp + bp, 0.0)           # relu(pretrained_model(x))
    x1 = feat @ w1 + b1                            # lev1
    x2cat = jnp.concatenate([feat, x1], axis=1)    # torch.cat((x, x1), 1)
    w2 = jnp.concatenate([w2a, w2b], axis=0)
    x2 = x2cat @ w2 + b2                           # lev2
    return jnp.concatenate([x1, x2], axis=1)       # torch.cat((x1, x2), 1)


if __name__ == "__main__":
    key = jax.random.PRNGKey(0)
    k_x, k_p = jax.random.split(key)
    x = jax.random.normal(k_x, (BATCH, C, H, W), jnp.float32)
    params = init_params(k_p)
    kparams = prep_kernel_params(params)

    out = simple_layers_model(x, kparams)
    out = jax.block_until_ready(out)

    ref = reference_forward(x, params)
    assert out.shape == (BATCH, D_OUT), out.shape
    # bf16 weights with f32 accumulation vs. pure-f32 reference
    assert np.allclose(np.asarray(out), np.asarray(ref), rtol=2e-2, atol=2e-2), (
        np.max(np.abs(np.asarray(out) - np.asarray(ref))))

    print("KERNEL_OK")
</pallas_src>

<mosaic_0001>
module attributes {stable_mosaic.version = 11 : i64} {
  func.func @simple_layers_kernel(%arg0: i32, %arg1: memref<8x1024xf32, #tpu.memory_space<vmem>>, %arg2: memref<1024x1024xbf16, #tpu.memory_space<vmem>>, %arg3: memref<1x1024xf32, #tpu.memory_space<vmem>>, %arg4: memref<1024x128xbf16, #tpu.memory_space<vmem>>, %arg5: memref<1x128xf32, #tpu.memory_space<vmem>>, %arg6: memref<8x128xf32, #tpu.memory_space<vmem>>) attributes {dimension_semantics = [#tpu.dimension_semantics<parallel>], iteration_bounds = array<i64: 1>, scalar_prefetch = 0 : i64, scratch_operands = 0 : i64, tpu.core_type = #tpu.core_type<tc>, window_params = [{transform_indices = @transform_0, window_bounds = array<i64: 8, 1024>}, {pipeline_mode = #tpu.pipeline_mode<synchronous>, transform_indices = @transform_1, window_bounds = array<i64: 1024, 1024>}, {pipeline_mode = #tpu.pipeline_mode<synchronous>, transform_indices = @transform_2, window_bounds = array<i64: 1, 1024>}, {pipeline_mode = #tpu.pipeline_mode<synchronous>, transform_indices = @transform_3, window_bounds = array<i64: 1024, 128>}, {pipeline_mode = #tpu.pipeline_mode<synchronous>, transform_indices = @transform_4, window_bounds = array<i64: 1, 128>}, {transform_indices = @transform_5, window_bounds = array<i64: 8, 128>}]} {
    %c0 = arith.constant 0 : index
    %c0_0 = arith.constant 0 : index
    %0 = vector.load %arg1[%c0, %c0_0] : memref<8x1024xf32, #tpu.memory_space<vmem>>, vector<8x1024xf32>
    %1 = arith.truncf %0 : vector<8x1024xf32> to vector<8x1024xbf16>
    %c0_1 = arith.constant 0 : index
    %c0_2 = arith.constant 0 : index
    %2 = vector.load %arg2[%c0_1, %c0_2] : memref<1024x1024xbf16, #tpu.memory_space<vmem>>, vector<1024x1024xbf16>
    %cst = arith.constant dense<0.000000e+00> : vector<8x1024xf32>
    %3 = tpu.matmul %1, %2, %cst {dimension_numbers = #tpu.dot_dimension_numbers<[1], [0], [0], [1], [0, 0, 1, 1], [], []>} : vector<8x1024xbf16>, vector<1024x1024xbf16>, vector<8x1024xf32> -> vector<8x1024xf32>
    %c0_3 = arith.constant 0 : index
    %c0_4 = arith.constant 0 : index
    %4 = vector.load %arg3[%c0_3, %c0_4] : memref<1x1024xf32, #tpu.memory_space<vmem>>, vector<1x1024xf32>
    %5 = vector.broadcast %4 : vector<1x1024xf32> to vector<8x1024xf32>
    %6 = arith.addf %3, %5 : vector<8x1024xf32>
    %cst_5 = arith.constant 0.000000e+00 : f32
    %7 = vector.broadcast %cst_5 : f32 to vector<8x1024xf32>
    %8 = arith.maximumf %6, %7 : vector<8x1024xf32>
    %9 = arith.truncf %8 : vector<8x1024xf32> to vector<8x1024xbf16>
    %c0_6 = arith.constant 0 : index
    %c0_7 = arith.constant 0 : index
    %10 = vector.load %arg4[%c0_6, %c0_7] : memref<1024x128xbf16, #tpu.memory_space<vmem>>, vector<1024x128xbf16>
    %cst_8 = arith.constant dense<0.000000e+00> : vector<8x128xf32>
    %11 = tpu.matmul %9, %10, %cst_8 {dimension_numbers = #tpu.dot_dimension_numbers<[1], [0], [0], [1], [0, 0, 1, 1], [], []>} : vector<8x1024xbf16>, vector<1024x128xbf16>, vector<8x128xf32> -> vector<8x128xf32>
    %c0_9 = arith.constant 0 : index
    %c0_10 = arith.constant 0 : index
    %12 = vector.load %arg5[%c0_9, %c0_10] : memref<1x128xf32, #tpu.memory_space<vmem>>, vector<1x128xf32>
    %13 = vector.broadcast %12 : vector<1x128xf32> to vector<8x128xf32>
    %14 = arith.addf %11, %13 : vector<8x128xf32>
    %c0_11 = arith.constant 0 : index
    %c0_12 = arith.constant 0 : index
    %15 = vector.load %arg6[%c0_11, %c0_12] : memref<8x128xf32, #tpu.memory_space<vmem>>, vector<8x128xf32>
    tpu.vector_store %arg6[%c0_11, %c0_12], %14 {strides = array<i32>} : memref<8x128xf32, #tpu.memory_space<vmem>>, vector<8x128xf32>,
    return
  }
  func.func @transform_0(%arg0: i32) -> (i32, i32) {
    %c0_i32 = arith.constant 0 : i32
    %c0_i32_0 = arith.constant 0 : i32
    return %arg0, %c0_i32 : i32, i32
  }
  func.func @transform_1(%arg0: i32) -> (i32, i32) {
    %c0_i32 = arith.constant 0 : i32
    %c0_i32_0 = arith.constant 0 : i32
    %c0_i32_1 = arith.constant 0 : i32
    return %c0_i32, %c0_i32_0 : i32, i32
  }
  func.func @transform_2(%arg0: i32) -> (i32, i32) {
    %c0_i32 = arith.constant 0 : i32
    %c0_i32_0 = arith.constant 0 : i32
    %c0_i32_1 = arith.constant 0 : i32
    return %c0_i32, %c0_i32_0 : i32, i32
  }
  func.func @transform_3(%arg0: i32) -> (i32, i32) {
    %c0_i32 = arith.constant 0 : i32
    %c0_i32_0 = arith.constant 0 : i32
    %c0_i32_1 = arith.constant 0 : i32
    return %c0_i32, %c0_i32_0 : i32, i32
  }
  func.func @transform_4(%arg0: i32) -> (i32, i32) {
    %c0_i32 = arith.constant 0 : i32
    %c0_i32_0 = arith.constant 0 : i32
    %c0_i32_1 = arith.constant 0 : i32
    return %c0_i32, %c0_i32_0 : i32, i32
  }
  func.func @transform_5(%arg0: i32) -> (i32, i32) {
    %c0_i32 = arith.constant 0 : i32
    %c0_i32_0 = arith.constant 0 : i32
    return %arg0, %c0_i32 : i32, i32
  }
}

</mosaic_0001>

<llo_original>
// kernel: tpu_custom_call.1
$region0: #{tpu_custom_call.1}
  #allocation0 [shape = 'u32[]', space=smem, size = 0x4, offset = 0x4, fixed_abs, tag = 'smem constant byte address 0x4 - core index']
  #allocation1 [shape = 'u32[72,128]{1,0:T(1,128)}', space=vmem, size = 0x9000, scoped, tag = 'internal scratch']
  %s0 = inlined_call_operand.hbm [shape: f32[8,1024], index: 0, kind: input, shape index: {}]
  %s1 = inlined_call_operand.hbm [shape: bf16[1024,1024], index: 1, kind: input, shape index: {}]
  %s2 = inlined_call_operand.hbm [shape: f32[1,1024], index: 2, kind: input, shape index: {}]
  %s3 = inlined_call_operand.hbm [shape: bf16[1024,128], index: 3, kind: input, shape index: {}]
  %s4 = inlined_call_operand.hbm [shape: f32[1,128], index: 4, kind: input, shape index: {}]
  %s5 = inlined_call_operand.hbm [shape: f32[8,128], index: 5, kind: output, shape index: {}]
  %s6 = sld [smem:[#allocation0]]
  $region50: #{tpu_custom_call.1} parent=0
    _
  %s8 = ssub.s32 1, %s6
  %s9 = scalar_select 0, %s8, %s6
  $region1: #{tpu_custom_call.1} parent=0
    #allocation2 [shape = 'u8[32768]{0}', space=vmem, size = 0x8000, scoped, tag = 'input window, operand 0, single buffered']
    #allocation3 [shape = 's32[1]{0}', space=sflag, size = 0x4, scoped, tag = 'scoped memory for tpu_custom_call.1']
    #allocation4 [shape = 's32[1]{0}', space=sflag, size = 0x4, scoped, tag = 'scoped memory for tpu_custom_call.1']
    #allocation5 [shape = 'u8[2097152]{0}', space=vmem, size = 0x200000, scoped, tag = 'input window, operand 1, single buffered']
    #allocation6 [shape = 's32[1]{0}', space=sflag, size = 0x4, scoped, tag = 'scoped memory for tpu_custom_call.1']
    #allocation7 [shape = 'u8[4096]{0}', space=vmem, size = 0x1000, scoped, tag = 'input window, operand 2, single buffered']
    #allocation8 [shape = 'u8[262144]{0}', space=vmem, size = 0x40000, scoped, tag = 'input window, operand 3, single buffered']
    #allocation9 [shape = 's32[1]{0}', space=sflag, size = 0x4, scoped, tag = 'scoped memory for tpu_custom_call.1']
    #allocation10 [shape = 'u8[512]{0}', space=vmem, size = 0x400, scoped, tag = 'input window, operand 4, single buffered']
    #allocation11 [shape = 'u8[4096]{0}', space=vmem, size = 0x1000, scoped, tag = 'output window, operand 0, single buffered']
    %10 = vsyncpa [#allocation3], 0
    %11 = vsyncpa [#allocation6], 0
    %12 = vsyncpa [#allocation9], 0
    %13 = vsyncpa [#allocation4], 0
    // Predicated region
    $region2: #{tpu_custom_call.1} parent=1 // pred_check
      _
    $region3: #{tpu_custom_call.1} parent=1 // pred_check_branch
      %15 = sbr.rel (0) target = $region5
    $region4: #{tpu_custom_call.1} parent=1 // pred_region
      %17 = vsyncadd [#allocation3], 0
      %s19 = sshll.u32 %s0, 4
      %s20 = int_to_ptr.hbm [resolvable:$true] %s19
      %s21 = sshll.u32 [#allocation2], 4
      %s22 = int_to_ptr.vmem [resolvable:$true] %s21
      %24 = dma.hbm_to_vmem [thread:$0]  %s20, 1024, %s22, [#allocation3]
    $region5: #{tpu_custom_call.1} parent=1 // pred_fallthru
      _
    // Predicated region
    $region6: #{tpu_custom_call.1} parent=1 // pred_check
      _
    $region7: #{tpu_custom_call.1} parent=1 // pred_check_branch
      %26 = sbr.rel (0) target = $region9
    $region8: #{tpu_custom_call.1} parent=1 // pred_region
      %28 = vsyncadd [#allocation6], 0
      %s29 = sshll.u32 %s1, 4
      %s30 = int_to_ptr.hbm [resolvable:$true] %s29
      %s31 = sshll.u32 [#allocation5], 4
      %s32 = int_to_ptr.vmem [resolvable:$true] %s31
      %37 = dma.hbm_to_vmem [thread:$0]  %s30, 65536, %s32, [#allocation6], 512, 512, 32
    $region9: #{tpu_custom_call.1} parent=1 // pred_fallthru
      _
    // Predicated region
    $region10: #{tpu_custom_call.1} parent=1 // pred_check
      _
    $region11: #{tpu_custom_call.1} parent=1 // pred_check_branch
      %39 = sbr.rel (0) target = $region13
    $region12: #{tpu_custom_call.1} parent=1 // pred_region
      %41 = vsyncadd [#allocation6], 0
      %s43 = sshll.u32 %s2, 4
      %s44 = int_to_ptr.hbm [resolvable:$true] %s43
      %s45 = sshll.u32 [#allocation7], 4
      %s46 = int_to_ptr.vmem [resolvable:$true] %s45
      %48 = dma.hbm_to_vmem [thread:$0]  %s44, 128, %s46, [#allocation6]
    $region13: #{tpu_custom_call.1} parent=1 // pred_fallthru
      _
    // Predicated region
    $region14: #{tpu_custom_call.1} parent=1 // pred_check
      _
    $region15: #{tpu_custom_call.1} parent=1 // pred_check_branch
      %50 = sbr.rel (0) target = $region17
    $region16: #{tpu_custom_call.1} parent=1 // pred_region
      %52 = vsyncadd [#allocation9], 0
      %s53 = sshll.u32 %s3, 4
      %s54 = int_to_ptr.hbm [resolvable:$true] %s53
      %s55 = sshll.u32 [#allocation8], 4
      %s56 = int_to_ptr.vmem [resolvable:$true] %s55
      %61 = dma.hbm_to_vmem [thread:$0]  %s54, 8192, %s56, [#allocation9], 64, 64, 4
    $region17: #{tpu_custom_call.1} parent=1 // pred_fallthru
      _
    // Predicated region
    $region18: #{tpu_custom_call.1} parent=1 // pred_check
      _
    $region19: #{tpu_custom_call.1} parent=1 // pred_check_branch
      %63 = sbr.rel (0) target = $region21
    $region20: #{tpu_custom_call.1} parent=1 // pred_region
      %65 = vsyncadd [#allocation9], 0
      %s67 = sshll.u32 %s4, 4
      %s68 = int_to_ptr.hbm [resolvable:$true] %s67
      %s69 = sshll.u32 [#allocation10], 4
      %s70 = int_to_ptr.vmem [resolvable:$true] %s69
      %72 = dma.hbm_to_vmem [thread:$0]  %s68, 16, %s70, [#allocation9]
    $region21: #{tpu_custom_call.1} parent=1 // pred_fallthru
      _
    // Predicated region
    $region22: #{tpu_custom_call.1} parent=1 // pred_check
      _
    $region23: #{tpu_custom_call.1} parent=1 // pred_check_branch
      %74 = sbr.rel (0) target = $region25
    $region24: #{tpu_custom_call.1} parent=1 // pred_region
      %76 = dma.done [#allocation3], 1024
    $region25: #{tpu_custom_call.1} parent=1 // pred_fallthru
      _
    // Predicated region
    $region26: #{tpu_custom_call.1} parent=1 // pred_check
      _
    $region27: #{tpu_custom_call.1} parent=1 // pred_check_branch
      %78 = sbr.rel (0) target = $region29
    $region28: #{tpu_custom_call.1} parent=1 // pred_region
      %80 = dma.done [#allocation6], 65536
    $region29: #{tpu_custom_call.1} parent=1 // pred_fallthru
      _
    // Predicated region
    $region30: #{tpu_custom_call.1} parent=1 // pred_check
      _
    $region31: #{tpu_custom_call.1} parent=1 // pred_check_branch
      %82 = sbr.rel (0) target = $region33
    $region32: #{tpu_custom_call.1} parent=1 // pred_region
      %84 = dma.done [#allocation6], 128
    $region33: #{tpu_custom_call.1} parent=1 // pred_fallthru
      _
    // Predicated region
    $region34: #{tpu_custom_call.1} parent=1 // pred_check
      _
    $region35: #{tpu_custom_call.1} parent=1 // pred_check_branch
      %86 = sbr.rel (0) target = $region37
    $region36: #{tpu_custom_call.1} parent=1 // pred_region
      %88 = dma.done [#allocation9], 8192
    $region37: #{tpu_custom_call.1} parent=1 // pred_fallthru
      _
    // Predicated region
    $region38: #{tpu_custom_call.1} parent=1 // pred_check
      _
    $region39: #{tpu_custom_call.1} parent=1 // pred_check_branch
      %90 = sbr.rel (0) target = $region41
    $region40: #{tpu_custom_call.1} parent=1 // pred_region
      %92 = dma.done [#allocation9], 16
    $region41: #{tpu_custom_call.1} parent=1 // pred_fallthru
      _
    %v93 = vld [vmem:[#allocation2] sm:$0xff]
    %v94 = vld [vmem:[#allocation2 + $0x8] sm:$0xff]
    %v95 = vld [vmem:[#allocation2 + $0x10] sm:$0xff]
    %v96 = vld [vmem:[#allocation2 + $0x18] sm:$0xff]
    %v97 = vld [vmem:[#allocation2 + $0x20] sm:$0xff]
    %v98 = vld [vmem:[#allocation2 + $0x28] sm:$0xff]
    %v99 = vld [vmem:[#allocation2 + $0x30] sm:$0xff]
    %v100 = vld [vmem:[#allocation2 + $0x38] sm:$0xff]
    %v101 = vpack.c.bf16 %v93, %v93
    %v102 = vpack.c.bf16 %v94, %v94
    %v103 = vpack.c.bf16 %v95, %v95
    %v104 = vpack.c.bf16 %v96, %v96
    %v105 = vpack.c.bf16 %v97, %v97
    %v106 = vpack.c.bf16 %v98, %v98
    %v107 = vpack.c.bf16 %v99, %v99
    %v108 = vpack.c.bf16 %v100, %v100
    %v109 = vld [vmem:[#allocation5] sm:$0xff]
    %v110 = vld [vmem:[#allocation5 + $0x8] sm:$0xff]
    %v111 = vld [vmem:[#allocation5 + $0x10] sm:$0xff]
    %v112 = vld [vmem:[#allocation5 + $0x18] sm:$0xff]
    %v113 = vld [vmem:[#allocation5 + $0x20] sm:$0xff]
    %v114 = vld [vmem:[#allocation5 + $0x28] sm:$0xff]
    %v115 = vld [vmem:[#allocation5 + $0x30] sm:$0xff]
    %v116 = vld [vmem:[#allocation5 + $0x38] sm:$0xff]
    %v117 = vld [vmem:[#allocation5 + $0x40] sm:$0xff]
    %v118 = vld [vmem:[#allocation5 + $0x48] sm:$0xff]
    %v119 = vld [vmem:[#allocation5 + $0x50] sm:$0xff]
    %v120 = vld [vmem:[#allocation5 + $0x58] sm:$0xff]
    %v121 = vld [vmem:[#allocation5 + $0x60] sm:$0xff]
    %v122 = vld [vmem:[#allocation5 + $0x68] sm:$0xff]
    %v123 = vld [vmem:[#allocation5 + $0x70] sm:$0xff]
    %v124 = vld [vmem:[#allocation5 + $0x78] sm:$0xff]
    %v125 = vld [vmem:[#allocation5 + $0x80] sm:$0xff]
    %v126 = vld [vmem:[#allocation5 + $0x88] sm:$0xff]
    %v127 = vld [vmem:[#allocation5 + $0x90] sm:$0xff]
    %v128 = vld [vmem:[#allocation5 + $0x98] sm:$0xff]
    %v129 = vld [vmem:[#allocation5 + $0xa0] sm:$0xff]
    %v130 = vld [vmem:[#allocation5 + $0xa8] sm:$0xff]
    %v131 = vld [vmem:[#allocation5 + $0xb0] sm:$0xff]
    %v132 = vld [vmem:[#allocation5 + $0xb8] sm:$0xff]
    %v133 = vld [vmem:[#allocation5 + $0xc0] sm:$0xff]
    %v134 = vld [vmem:[#allocation5 + $0xc8] sm:$0xff]
    %v135 = vld [vmem:[#allocation5 + $0xd0] sm:$0xff]
    %v136 = vld [vmem:[#allocation5 + $0xd8] sm:$0xff]
    %v137 = vld [vmem:[#allocation5 + $0xe0] sm:$0xff]
    %v138 = vld [vmem:[#allocation5 + $0xe8] sm:$0xff]
    %v139 = vld [vmem:[#allocation5 + $0xf0] sm:$0xff]
    %v140 = vld [vmem:[#allocation5 + $0xf8] sm:$0xff]
    %v141 = vld [vmem:[#allocation5 + $0x100] sm:$0xff]
    %v142 = vld [vmem:[#allocation5 + $0x108] sm:$0xff]
    %v143 = vld [vmem:[#allocation5 + $0x110] sm:$0xff]
    %v144 = vld [vmem:[#allocation5 + $0x118] sm:$0xff]
    %v145 = vld [vmem:[#allocation5 + $0x120] sm:$0xff]
    %v146 = vld [vmem:[#allocation5 + $0x128] sm:$0xff]
    %v147 = vld [vmem:[#allocation5 + $0x130] sm:$0xff]
    %v148 = vld [vmem:[#allocation5 + $0x138] sm:$0xff]
    %v149 = vld [vmem:[#allocation5 + $0x140] sm:$0xff]
    %v150 = vld [vmem:[#allocation5 + $0x148] sm:$0xff]
    %v151 = vld [vmem:[#allocation5 + $0x150] sm:$0xff]
    %v152 = vld [vmem:[#allocation5 + $0x158] sm:$0xff]
    %v153 = vld [vmem:[#allocation5 + $0x160] sm:$0xff]
    %v154 = vld [vmem:[#allocation5 + $0x168] sm:$0xff]
    %v155 = vld [vmem:[#allocation5 + $0x170] sm:$0xff]
    %v156 = vld [vmem:[#allocation5 + $0x178] sm:$0xff]
    %v157 = vld [vmem:[#allocation5 + $0x180] sm:$0xff]
    %v158 = vld [vmem:[#allocation5 + $0x188] sm:$0xff]
    %v159 = vld [vmem:[#allocation5 + $0x190] sm:$0xff]
    %v160 = vld [vmem:[#allocation5 + $0x198] sm:$0xff]
    %v161 = vld [vmem:[#allocation5 + $0x1a0] sm:$0xff]
    %v162 = vld [vmem:[#allocation5 + $0x1a8] sm:$0xff]
    %v163 = vld [vmem:[#allocation5 + $0x1b0] sm:$0xff]
    %v164 = vld [vmem:[#allocation5 + $0x1b8] sm:$0xff]
    %v165 = vld [vmem:[#allocation5 + $0x1c0] sm:$0xff]
    %v166 = vld [vmem:[#allocation5 + $0x1c8] sm:$0xff]
    %v167 = vld [vmem:[#allocation5 + $0x1d0] sm:$0xff]
    %v168 = vld [vmem:[#allocation5 + $0x1d8] sm:$0xff]
    %v169 = vld [vmem:[#allocation5 + $0x1e0] sm:$0xff]
    %v170 = vld [vmem:[#allocation5 + $0x1e8] sm:$0xff]
    %v171 = vld [vmem:[#allocation5 + $0x1f0] sm:$0xff]
    %v172 = vld [vmem:[#allocation5 + $0x1f8] sm:$0xff]
    %v173 = vld [vmem:[#allocation5 + $0x200] sm:$0xff]
    %v174 = vld [vmem:[#allocation5 + $0x208] sm:$0xff]
    %v175 = vld [vmem:[#allocation5 + $0x210] sm:$0xff]
    %v176 = vld [vmem:[#allocation5 + $0x218] sm:$0xff]
    %v177 = vld [vmem:[#allocation5 + $0x220] sm:$0xff]
    %v178 = vld [vmem:[#allocation5 + $0x228] sm:$0xff]
    %v179 = vld [vmem:[#allocation5 + $0x230] sm:$0xff]
    %v180 = vld [vmem:[#allocation5 + $0x238] sm:$0xff]
    %v181 = vld [vmem:[#allocation5 + $0x240] sm:$0xff]
    %v182 = vld [vmem:[#allocation5 + $0x248] sm:$0xff]
    %v183 = vld [vmem:[#allocation5 + $0x250] sm:$0xff]
    %v184 = vld [vmem:[#allocation5 + $0x258] sm:$0xff]
    %v185 = vld [vmem:[#allocation5 + $0x260] sm:$0xff]
    %v186 = vld [vmem:[#allocation5 + $0x268] sm:$0xff]
    %v187 = vld [vmem:[#allocation5 + $0x270] sm:$0xff]
    %v188 = vld [vmem:[#allocation5 + $0x278] sm:$0xff]
    %v189 = vld [vmem:[#allocation5 + $0x280] sm:$0xff]
    %v190 = vld [vmem:[#allocation5 + $0x288] sm:$0xff]
    %v191 = vld [vmem:[#allocation5 + $0x290] sm:$0xff]
    %v192 = vld [vmem:[#allocation5 + $0x298] sm:$0xff]
    %v193 = vld [vmem:[#allocation5 + $0x2a0] sm:$0xff]
    %v194 = vld [vmem:[#allocation5 + $0x2a8] sm:$0xff]
    %v195 = vld [vmem:[#allocation5 + $0x2b0] sm:$0xff]
    %v196 = vld [vmem:[#allocation5 + $0x2b8] sm:$0xff]
    %v197 = vld [vmem:[#allocation5 + $0x2c0] sm:$0xff]
    %v198 = vld [vmem:[#allocation5 + $0x2c8] sm:$0xff]
    %v199 = vld [vmem:[#allocation5 + $0x2d0] sm:$0xff]
    %v200 = vld [vmem:[#allocation5 + $0x2d8] sm:$0xff]
    %v201 = vld [vmem:[#allocation5 + $0x2e0] sm:$0xff]
    %v202 = vld [vmem:[#allocation5 + $0x2e8] sm:$0xff]
    %v203 = vld [vmem:[#allocation5 + $0x2f0] sm:$0xff]
    %v204 = vld [vmem:[#allocation5 + $0x2f8] sm:$0xff]
    %v205 = vld [vmem:[#allocation5 + $0x300] sm:$0xff]
    %v206 = vld [vmem:[#allocation5 + $0x308] sm:$0xff]
    %v207 = vld [vmem:[#allocation5 + $0x310] sm:$0xff]
    %v208 = vld [vmem:[#allocation5 + $0x318] sm:$0xff]
    %v209 = vld [vmem:[#allocation5 + $0x320] sm:$0xff]
    %v210 = vld [vmem:[#allocation5 + $0x328] sm:$0xff]
    %v211 = vld [vmem:[#allocation5 + $0x330] sm:$0xff]
    %v212 = vld [vmem:[#allocation5 + $0x338] sm:$0xff]
    %v213 = vld [vmem:[#allocation5 + $0x340] sm:$0xff]
    %v214 = vld [vmem:[#allocation5 + $0x348] sm:$0xff]
    %v215 = vld [vmem:[#allocation5 + $0x350] sm:$0xff]
    %v216 = vld [vmem:[#allocation5 + $0x358] sm:$0xff]
    %v217 = vld [vmem:[#allocation5 + $0x360] sm:$0xff]
    %v218 = vld [vmem:[#allocation5 + $0x368] sm:$0xff]
    %v219 = vld [vmem:[#allocation5 + $0x370] sm:$0xff]
    %v220 = vld [vmem:[#allocation5 + $0x378] sm:$0xff]
    %v221 = vld [vmem:[#allocation5 + $0x380] sm:$0xff]
    %v222 = vld [vmem:[#allocation5 + $0x388] sm:$0xff]
    %v223 = vld [vmem:[#allocation5 + $0x390] sm:$0xff]
    %v224 = vld [vmem:[#allocation5 + $0x398] sm:$0xff]
    %v225 = vld [vmem:[#allocation5 + $0x3a0] sm:$0xff]
    %v226 = vld [vmem:[#allocation5 + $0x3a8] sm:$0xff]
    %v227 = vld [vmem:[#allocation5 + $0x3b0] sm:$0xff]
    %v228 = vld [vmem:[#allocation5 + $0x3b8] sm:$0xff]
    %v229 = vld [vmem:[#allocation5 + $0x3c0] sm:$0xff]
    %v230 = vld [vmem:[#allocation5 + $0x3c8] sm:$0xff]
    %v231 = vld [vmem:[#allocation5 + $0x3d0] sm:$0xff]
    %v232 = vld [vmem:[#allocation5 + $0x3d8] sm:$0xff]
    %v233 = vld [vmem:[#allocation5 + $0x3e0] sm:$0xff]
    %v234 = vld [vmem:[#allocation5 + $0x3e8] sm:$0xff]
    %v235 = vld [vmem:[#allocation5 + $0x3f0] sm:$0xff]
    %v236 = vld [vmem:[#allocation5 + $0x3f8] sm:$0xff]
    %v237 = vld [vmem:[#allocation5 + $0x400] sm:$0xff]
    %v238 = vld [vmem:[#allocation5 + $0x408] sm:$0xff]
    %v239 = vld [vmem:[#allocation5 + $0x410] sm:$0xff]
    %v240 = vld [vmem:[#allocation5 + $0x418] sm:$0xff]
    %v241 = vld [vmem:[#allocation5 + $0x420] sm:$0xff]
    %v242 = vld [vmem:[#allocation5 + $0x428] sm:$0xff]
    %v243 = vld [vmem:[#allocation5 + $0x430] sm:$0xff]
    %v244 = vld [vmem:[#allocation5 + $0x438] sm:$0xff]
    %v245 = vld [vmem:[#allocation5 + $0x440] sm:$0xff]
    %v246 = vld [vmem:[#allocation5 + $0x448] sm:$0xff]
    %v247 = vld [vmem:[#allocation5 + $0x450] sm:$0xff]
    %v248 = vld [vmem:[#allocation5 + $0x458] sm:$0xff]
    %v249 = vld [vmem:[#allocation5 + $0x460] sm:$0xff]
    %v250 = vld [vmem:[#allocation5 + $0x468] sm:$0xff]
    %v251 = vld [vmem:[#allocation5 + $0x470] sm:$0xff]
    %v252 = vld [vmem:[#allocation5 + $0x478] sm:$0xff]
    %v253 = vld [vmem:[#allocation5 + $0x480] sm:$0xff]
    %v254 = vld [vmem:[#allocation5 + $0x488] sm:$0xff]
    %v255 = vld [vmem:[#allocation5 + $0x490] sm:$0xff]
    %v256 = vld [vmem:[#allocation5 + $0x498] sm:$0xff]
    %v257 = vld [vmem:[#allocation5 + $0x4a0] sm:$0xff]
    %v258 = vld [vmem:[#allocation5 + $0x4a8] sm:$0xff]
    %v259 = vld [vmem:[#allocation5 + $0x4b0] sm:$0xff]
    %v260 = vld [vmem:[#allocation5 + $0x4b8] sm:$0xff]
    %v261 = vld [vmem:[#allocation5 + $0x4c0] sm:$0xff]
    %v262 = vld [vmem:[#allocation5 + $0x4c8] sm:$0xff]
    %v263 = vld [vmem:[#allocation5 + $0x4d0] sm:$0xff]
    %v264 = vld [vmem:[#allocation5 + $0x4d8] sm:$0xff]
    %v265 = vld [vmem:[#allocation5 + $0x4e0] sm:$0xff]
    %v266 = vld [vmem:[#allocation5 + $0x4e8] sm:$0xff]
    %v267 = vld [vmem:[#allocation5 + $0x4f0] sm:$0xff]
    %v268 = vld [vmem:[#allocation5 + $0x4f8] sm:$0xff]
    %v269 = vld [vmem:[#allocation5 + $0x500] sm:$0xff]
    %v270 = vld [vmem:[#allocation5 + $0x508] sm:$0xff]
    %v271 = vld [vmem:[#allocation5 + $0x510] sm:$0xff]
    %v272 = vld [vmem:[#allocation5 + $0x518] sm:$0xff]
    %v273 = vld [vmem:[#allocation5 + $0x520] sm:$0xff]
    %v274 = vld [vmem:[#allocation5 + $0x528] sm:$0xff]
    %v275 = vld [vmem:[#allocation5 + $0x530] sm:$0xff]
    %v276 = vld [vmem:[#allocation5 + $0x538] sm:$0xff]
    %v277 = vld [vmem:[#allocation5 + $0x540] sm:$0xff]
    %v278 = vld [vmem:[#allocation5 + $0x548] sm:$0xff]
    %v279 = vld [vmem:[#allocation5 + $0x550] sm:$0xff]
    %v280 = vld [vmem:[#allocation5 + $0x558] sm:$0xff]
    %v281 = vld [vmem:[#allocation5 + $0x560] sm:$0xff]
    %v282 = vld [vmem:[#allocation5 + $0x568] sm:$0xff]
    %v283 = vld [vmem:[#allocation5 + $0x570] sm:$0xff]
    %v284 = vld [vmem:[#allocation5 + $0x578] sm:$0xff]
    %v285 = vld [vmem:[#allocation5 + $0x580] sm:$0xff]
    %v286 = vld [vmem:[#allocation5 + $0x588] sm:$0xff]
    %v287 = vld [vmem:[#allocation5 + $0x590] sm:$0xff]
    %v288 = vld [vmem:[#allocation5 + $0x598] sm:$0xff]
    %v289 = vld [vmem:[#allocation5 + $0x5a0] sm:$0xff]
    %v290 = vld [vmem:[#allocation5 + $0x5a8] sm:$0xff]
    %v291 = vld [vmem:[#allocation5 + $0x5b0] sm:$0xff]
    %v292 = vld [vmem:[#allocation5 + $0x5b8] sm:$0xff]
    %v293 = vld [vmem:[#allocation5 + $0x5c0] sm:$0xff]
    %v294 = vld [vmem:[#allocation5 + $0x5c8] sm:$0xff]
    %v295 = vld [vmem:[#allocation5 + $0x5d0] sm:$0xff]
    %v296 = vld [vmem:[#allocation5 + $0x5d8] sm:$0xff]
    %v297 = vld [vmem:[#allocation5 + $0x5e0] sm:$0xff]
    %v298 = vld [vmem:[#allocation5 + $0x5e8] sm:$0xff]
    %v299 = vld [vmem:[#allocation5 + $0x5f0] sm:$0xff]
    %v300 = vld [vmem:[#allocation5 + $0x5f8] sm:$0xff]
    %v301 = vld [vmem:[#allocation5 + $0x600] sm:$0xff]
    %v302 = vld [vmem:[#allocation5 + $0x608] sm:$0xff]
    %v303 = vld [vmem:[#allocation5 + $0x610] sm:$0xff]
    %v304 = vld [vmem:[#allocation5 + $0x618] sm:$0xff]
    %v305 = vld [vmem:[#allocation5 + $0x620] sm:$0xff]
    %v306 = vld [vmem:[#allocation5 + $0x628] sm:$0xff]
    %v307 = vld [vmem:[#allocation5 + $0x630] sm:$0xff]
    %v308 = vld [vmem:[#allocation5 + $0x638] sm:$0xff]
    %v309 = vld [vmem:[#allocation5 + $0x640] sm:$0xff]
    %v310 = vld [vmem:[#allocation5 + $0x648] sm:$0xff]
    %v311 = vld [vmem:[#allocation5 + $0x650] sm:$0xff]
    %v312 = vld [vmem:[#allocation5 + $0x658] sm:$0xff]
    %v313 = vld [vmem:[#allocation5 + $0x660] sm:$0xff]
    %v314 = vld [vmem:[#allocation5 + $0x668] sm:$0xff]
    %v315 = vld [vmem:[#allocation5 + $0x670] sm:$0xff]
    %v316 = vld [vmem:[#allocation5 + $0x678] sm:$0xff]
    %v317 = vld [vmem:[#allocation5 + $0x680] sm:$0xff]
    %v318 = vld [vmem:[#allocation5 + $0x688] sm:$0xff]
    %v319 = vld [vmem:[#allocation5 + $0x690] sm:$0xff]
    %v320 = vld [vmem:[#allocation5 + $0x698] sm:$0xff]
    %v321 = vld [vmem:[#allocation5 + $0x6a0] sm:$0xff]
    %v322 = vld [vmem:[#allocation5 + $0x6a8] sm:$0xff]
    %v323 = vld [vmem:[#allocation5 + $0x6b0] sm:$0xff]
    %v324 = vld [vmem:[#allocation5 + $0x6b8] sm:$0xff]
    %v325 = vld [vmem:[#allocation5 + $0x6c0] sm:$0xff]
    %v326 = vld [vmem:[#allocation5 + $0x6c8] sm:$0xff]
    %v327 = vld [vmem:[#allocation5 + $0x6d0] sm:$0xff]
    %v328 = vld [vmem:[#allocation5 + $0x6d8] sm:$0xff]
    %v329 = vld [vmem:[#allocation5 + $0x6e0] sm:$0xff]
    %v330 = vld [vmem:[#allocation5 + $0x6e8] sm:$0xff]
    %v331 = vld [vmem:[#allocation5 + $0x6f0] sm:$0xff]
    %v332 = vld [vmem:[#allocation5 + $0x6f8] sm:$0xff]
    %v333 = vld [vmem:[#allocation5 + $0x700] sm:$0xff]
    %v334 = vld [vmem:[#allocation5 + $0x708] sm:$0xff]
    %v335 = vld [vmem:[#allocation5 + $0x710] sm:$0xff]
    %v336 = vld [vmem:[#allocation5 + $0x718] sm:$0xff]
    %v337 = vld [vmem:[#allocation5 + $0x720] sm:$0xff]
    %v338 = vld [vmem:[#allocation5 + $0x728] sm:$0xff]
    %v339 = vld [vmem:[#allocation5 + $0x730] sm:$0xff]
    %v340 = vld [vmem:[#allocation5 + $0x738] sm:$0xff]
    %v341 = vld [vmem:[#allocation5 + $0x740] sm:$0xff]
    %v342 = vld [vmem:[#allocation5 + $0x748] sm:$0xff]
    %v343 = vld [vmem:[#allocation5 + $0x750] sm:$0xff]
    %v344 = vld [vmem:[#allocation5 + $0x758] sm:$0xff]
    %v345 = vld [vmem:[#allocation5 + $0x760] sm:$0xff]
    %v346 = vld [vmem:[#allocation5 + $0x768] sm:$0xff]
    %v347 = vld [vmem:[#allocation5 + $0x770] sm:$0xff]
    %v348 = vld [vmem:[#allocation5 + $0x778] sm:$0xff]
    %v349 = vld [vmem:[#allocation5 + $0x780] sm:$0xff]
    %v350 = vld [vmem:[#allocation5 + $0x788] sm:$0xff]
    %v351 = vld [vmem:[#allocation5 + $0x790] sm:$0xff]
    %v352 = vld [vmem:[#allocation5 + $0x798] sm:$0xff]
    %v353 = vld [vmem:[#allocation5 + $0x7a0] sm:$0xff]
    %v354 = vld [vmem:[#allocation5 + $0x7a8] sm:$0xff]
    %v355 = vld [vmem:[#allocation5 + $0x7b0] sm:$0xff]
    %v356 = vld [vmem:[#allocation5 + $0x7b8] sm:$0xff]
    %v357 = vld [vmem:[#allocation5 + $0x7c0] sm:$0xff]
    %v358 = vld [vmem:[#allocation5 + $0x7c8] sm:$0xff]
    %v359 = vld [vmem:[#allocation5 + $0x7d0] sm:$0xff]
    %v360 = vld [vmem:[#allocation5 + $0x7d8] sm:$0xff]
    %v361 = vld [vmem:[#allocation5 + $0x7e0] sm:$0xff]
    %v362 = vld [vmem:[#allocation5 + $0x7e8] sm:$0xff]
    %v363 = vld [vmem:[#allocation5 + $0x7f0] sm:$0xff]
    %v364 = vld [vmem:[#allocation5 + $0x7f8] sm:$0xff]
    %v365 = vld [vmem:[#allocation5 + $0x800] sm:$0xff]
    %v366 = vld [vmem:[#allocation5 + $0x808] sm:$0xff]
    %v367 = vld [vmem:[#allocation5 + $0x810] sm:$0xff]
    %v368 = vld [vmem:[#allocation5 + $0x818] sm:$0xff]
    %v369 = vld [vmem:[#allocation5 + $0x820] sm:$0xff]
    %v370 = vld [vmem:[#allocation5 + $0x828] sm:$0xff]
    %v371 = vld [vmem:[#allocation5 + $0x830] sm:$0xff]
    %v372 = vld [vmem:[#allocation5 + $0x838] sm:$0xff]
    %v373 = vld [vmem:[#allocation5 + $0x840] sm:$0xff]
    %v374 = vld [vmem:[#allocation5 + $0x848] sm:$0xff]
    %v375 = vld [vmem:[#allocation5 + $0x850] sm:$0xff]
    %v376 = vld [vmem:[#allocation5 + $0x858] sm:$0xff]
    %v377 = vld [vmem:[#allocation5 + $0x860] sm:$0xff]
    %v378 = vld [vmem:[#allocation5 + $0x868] sm:$0xff]
    %v379 = vld [vmem:[#allocation5 + $0x870] sm:$0xff]
    %v380 = vld [vmem:[#allocation5 + $0x878] sm:$0xff]
    %v381 = vld [vmem:[#allocation5 + $0x880] sm:$0xff]
    %v382 = vld [vmem:[#allocation5 + $0x888] sm:$0xff]
    %v383 = vld [vmem:[#allocation5 + $0x890] sm:$0xff]
    %v384 = vld [vmem:[#allocation5 + $0x898] sm:$0xff]
    %v385 = vld [vmem:[#allocation5 + $0x8a0] sm:$0xff]
    %v386 = vld [vmem:[#allocation5 + $0x8a8] sm:$0xff]
    %v387 = vld [vmem:[#allocation5 + $0x8b0] sm:$0xff]
    %v388 = vld [vmem:[#allocation5 + $0x8b8] sm:$0xff]
    %v389 = vld [vmem:[#allocation5 + $0x8c0] sm:$0xff]
    %v390 = vld [vmem:[#allocation5 + $0x8c8] sm:$0xff]
    %v391 = vld [vmem:[#allocation5 + $0x8d0] sm:$0xff]
    %v392 = vld [vmem:[#allocation5 + $0x8d8] sm:$0xff]
    %v393 = vld [vmem:[#allocation5 + $0x8e0] sm:$0xff]
    %v394 = vld [vmem:[#allocation5 + $0x8e8] sm:$0xff]
    %v395 = vld [vmem:[#allocation5 + $0x8f0] sm:$0xff]
    %v396 = vld [vmem:[#allocation5 + $0x8f8] sm:$0xff]
    %v397 = vld [vmem:[#allocation5 + $0x900] sm:$0xff]
    %v398 = vld [vmem:[#allocation5 + $0x908] sm:$0xff]
    %v399 = vld [vmem:[#allocation5 + $0x910] sm:$0xff]
    %v400 = vld [vmem:[#allocation5 + $0x918] sm:$0xff]
    %v401 = vld [vmem:[#allocation5 + $0x920] sm:$0xff]
    %v402 = vld [vmem:[#allocation5 + $0x928] sm:$0xff]
    %v403 = vld [vmem:[#allocation5 + $0x930] sm:$0xff]
    %v404 = vld [vmem:[#allocation5 + $0x938] sm:$0xff]
    %v405 = vld [vmem:[#allocation5 + $0x940] sm:$0xff]
    %v406 = vld [vmem:[#allocation5 + $0x948] sm:$0xff]
    %v407 = vld [vmem:[#allocation5 + $0x950] sm:$0xff]
    %v408 = vld [vmem:[#allocation5 + $0x958] sm:$0xff]
    %v409 = vld [vmem:[#allocation5 + $0x960] sm:$0xff]
    %v410 = vld [vmem:[#allocation5 + $0x968] sm:$0xff]
    %v411 = vld [vmem:[#allocation5 + $0x970] sm:$0xff]
    %v412 = vld [vmem:[#allocation5 + $0x978] sm:$0xff]
    %v413 = vld [vmem:[#allocation5 + $0x980] sm:$0xff]
    %v414 = vld [vmem:[#allocation5 + $0x988] sm:$0xff]
    %v415 = vld [vmem:[#allocation5 + $0x990] sm:$0xff]
    %v416 = vld [vmem:[#allocation5 + $0x998] sm:$0xff]
    %v417 = vld [vmem:[#allocation5 + $0x9a0] sm:$0xff]
    %v418 = vld [vmem:[#allocation5 + $0x9a8] sm:$0xff]
    %v419 = vld [vmem:[#allocation5 + $0x9b0] sm:$0xff]
    %v420 = vld [vmem:[#allocation5 + $0x9b8] sm:$0xff]
    %v421 = vld [vmem:[#allocation5 + $0x9c0] sm:$0xff]
    %v422 = vld [vmem:[#allocation5 + $0x9c8] sm:$0xff]
    %v423 = vld [vmem:[#allocation5 + $0x9d0] sm:$0xff]
    %v424 = vld [vmem:[#allocation5 + $0x9d8] sm:$0xff]
    %v425 = vld [vmem:[#allocation5 + $0x9e0] sm:$0xff]
    %v426 = vld [vmem:[#allocation5 + $0x9e8] sm:$0xff]
    %v427 = vld [vmem:[#allocation5 + $0x9f0] sm:$0xff]
    %v428 = vld [vmem:[#allocation5 + $0x9f8] sm:$0xff]
    %v429 = vld [vmem:[#allocation5 + $0xa00] sm:$0xff]
    %v430 = vld [vmem:[#allocation5 + $0xa08] sm:$0xff]
    %v431 = vld [vmem:[#allocation5 + $0xa10] sm:$0xff]
    %v432 = vld [vmem:[#allocation5 + $0xa18] sm:$0xff]
    %v433 = vld [vmem:[#allocation5 + $0xa20] sm:$0xff]
    %v434 = vld [vmem:[#allocation5 + $0xa28] sm:$0xff]
    %v435 = vld [vmem:[#allocation5 + $0xa30] sm:$0xff]
    %v436 = vld [vmem:[#allocation5 + $0xa38] sm:$0xff]
    %v437 = vld [vmem:[#allocation5 + $0xa40] sm:$0xff]
    %v438 = vld [vmem:[#allocation5 + $0xa48] sm:$0xff]
    %v439 = vld [vmem:[#allocation5 + $0xa50] sm:$0xff]
    %v440 = vld [vmem:[#allocation5 + $0xa58] sm:$0xff]
    %v441 = vld [vmem:[#allocation5 + $0xa60] sm:$0xff]
    %v442 = vld [vmem:[#allocation5 + $0xa68] sm:$0xff]
    %v443 = vld [vmem:[#allocation5 + $0xa70] sm:$0xff]
    %v444 = vld [vmem:[#allocation5 + $0xa78] sm:$0xff]
    %v445 = vld [vmem:[#allocation5 + $0xa80] sm:$0xff]
    %v446 = vld [vmem:[#allocation5 + $0xa88] sm:$0xff]
    %v447 = vld [vmem:[#allocation5 + $0xa90] sm:$0xff]
    %v448 = vld [vmem:[#allocation5 + $0xa98] sm:$0xff]
    %v449 = vld [vmem:[#allocation5 + $0xaa0] sm:$0xff]
    %v450 = vld [vmem:[#allocation5 + $0xaa8] sm:$0xff]
    %v451 = vld [vmem:[#allocation5 + $0xab0] sm:$0xff]
    %v452 = vld [vmem:[#allocation5 + $0xab8] sm:$0xff]
    %v453 = vld [vmem:[#allocation5 + $0xac0] sm:$0xff]
    %v454 = vld [vmem:[#allocation5 + $0xac8] sm:$0xff]
    %v455 = vld [vmem:[#allocation5 + $0xad0] sm:$0xff]
    %v456 = vld [vmem:[#allocation5 + $0xad8] sm:$0xff]
    %v457 = vld [vmem:[#allocation5 + $0xae0] sm:$0xff]
    %v458 = vld [vmem:[#allocation5 + $0xae8] sm:$0xff]
    %v459 = vld [vmem:[#allocation5 + $0xaf0] sm:$0xff]
    %v460 = vld [vmem:[#allocation5 + $0xaf8] sm:$0xff]
    %v461 = vld [vmem:[#allocation5 + $0xb00] sm:$0xff]
    %v462 = vld [vmem:[#allocation5 + $0xb08] sm:$0xff]
    %v463 = vld [vmem:[#allocation5 + $0xb10] sm:$0xff]
    %v464 = vld [vmem:[#allocation5 + $0xb18] sm:$0xff]
    %v465 = vld [vmem:[#allocation5 + $0xb20] sm:$0xff]
    %v466 = vld [vmem:[#allocation5 + $0xb28] sm:$0xff]
    %v467 = vld [vmem:[#allocation5 + $0xb30] sm:$0xff]
    %v468 = vld [vmem:[#allocation5 + $0xb38] sm:$0xff]
    %v469 = vld [vmem:[#allocation5 + $0xb40] sm:$0xff]
    %v470 = vld [vmem:[#allocation5 + $0xb48] sm:$0xff]
    %v471 = vld [vmem:[#allocation5 + $0xb50] sm:$0xff]
    %v472 = vld [vmem:[#allocation5 + $0xb58] sm:$0xff]
    %v473 = vld [vmem:[#allocation5 + $0xb60] sm:$0xff]
    %v474 = vld [vmem:[#allocation5 + $0xb68] sm:$0xff]
    %v475 = vld [vmem:[#allocation5 + $0xb70] sm:$0xff]
    %v476 = vld [vmem:[#allocation5 + $0xb78] sm:$0xff]
    %v477 = vld [vmem:[#allocation5 + $0xb80] sm:$0xff]
    %v478 = vld [vmem:[#allocation5 + $0xb88] sm:$0xff]
    %v479 = vld [vmem:[#allocation5 + $0xb90] sm:$0xff]
    %v480 = vld [vmem:[#allocation5 + $0xb98] sm:$0xff]
    %v481 = vld [vmem:[#allocation5 + $0xba0] sm:$0xff]
    %v482 = vld [vmem:[#allocation5 + $0xba8] sm:$0xff]
    %v483 = vld [vmem:[#allocation5 + $0xbb0] sm:$0xff]
    %v484 = vld [vmem:[#allocation5 + $0xbb8] sm:$0xff]
    %v485 = vld [vmem:[#allocation5 + $0xbc0] sm:$0xff]
    %v486 = vld [vmem:[#allocation5 + $0xbc8] sm:$0xff]
    %v487 = vld [vmem:[#allocation5 + $0xbd0] sm:$0xff]
    %v488 = vld [vmem:[#allocation5 + $0xbd8] sm:$0xff]
    %v489 = vld [vmem:[#allocation5 + $0xbe0] sm:$0xff]
    %v490 = vld [vmem:[#allocation5 + $0xbe8] sm:$0xff]
    %v491 = vld [vmem:[#allocation5 + $0xbf0] sm:$0xff]
    %v492 = vld [vmem:[#allocation5 + $0xbf8] sm:$0xff]
    %v493 = vld [vmem:[#allocation5 + $0xc00] sm:$0xff]
    %v494 = vld [vmem:[#allocation5 + $0xc08] sm:$0xff]
    %v495 = vld [vmem:[#allocation5 + $0xc10] sm:$0xff]
    %v496 = vld [vmem:[#allocation5 + $0xc18] sm:$0xff]
    %v497 = vld [vmem:[#allocation5 + $0xc20] sm:$0xff]
    %v498 = vld [vmem:[#allocation5 + $0xc28] sm:$0xff]
    %v499 = vld [vmem:[#allocation5 + $0xc30] sm:$0xff]
    %v500 = vld [vmem:[#allocation5 + $0xc38] sm:$0xff]
    %v501 = vld [vmem:[#allocation5 + $0xc40] sm:$0xff]
    %v502 = vld [vmem:[#allocation5 + $0xc48] sm:$0xff]
    %v503 = vld [vmem:[#allocation5 + $0xc50] sm:$0xff]
    %v504 = vld [vmem:[#allocation5 + $0xc58] sm:$0xff]
    %v505 = vld [vmem:[#allocation5 + $0xc60] sm:$0xff]
    %v506 = vld [vmem:[#allocation5 + $0xc68] sm:$0xff]
    %v507 = vld [vmem:[#allocation5 + $0xc70] sm:$0xff]
    %v508 = vld [vmem:[#allocation5 + $0xc78] sm:$0xff]
    %v509 = vld [vmem:[#allocation5 + $0xc80] sm:$0xff]
    %v510 = vld [vmem:[#allocation5 + $0xc88] sm:$0xff]
    %v511 = vld [vmem:[#allocation5 + $0xc90] sm:$0xff]
    %v512 = vld [vmem:[#allocation5 + $0xc98] sm:$0xff]
    %v513 = vld [vmem:[#allocation5 + $0xca0] sm:$0xff]
    %v514 = vld [vmem:[#allocation5 + $0xca8] sm:$0xff]
    %v515 = vld [vmem:[#allocation5 + $0xcb0] sm:$0xff]
    %v516 = vld [vmem:[#allocation5 + $0xcb8] sm:$0xff]
    %v517 = vld [vmem:[#allocation5 + $0xcc0] sm:$0xff]
    %v518 = vld [vmem:[#allocation5 + $0xcc8] sm:$0xff]
    %v519 = vld [vmem:[#allocation5 + $0xcd0] sm:$0xff]
    %v520 = vld [vmem:[#allocation5 + $0xcd8] sm:$0xff]
    %v521 = vld [vmem:[#allocation5 + $0xce0] sm:$0xff]
    %v522 = vld [vmem:[#allocation5 + $0xce8] sm:$0xff]
    %v523 = vld [vmem:[#allocation5 + $0xcf0] sm:$0xff]
    %v524 = vld [vmem:[#allocation5 + $0xcf8] sm:$0xff]
    %v525 = vld [vmem:[#allocation5 + $0xd00] sm:$0xff]
    %v526 = vld [vmem:[#allocation5 + $0xd08] sm:$0xff]
    %v527 = vld [vmem:[#allocation5 + $0xd10] sm:$0xff]
    %v528 = vld [vmem:[#allocation5 + $0xd18] sm:$0xff]
    %v529 = vld [vmem:[#allocation5 + $0xd20] sm:$0xff]
    %v530 = vld [vmem:[#allocation5 + $0xd28] sm:$0xff]
    %v531 = vld [vmem:[#allocation5 + $0xd30] sm:$0xff]
    %v532 = vld [vmem:[#allocation5 + $0xd38] sm:$0xff]
    %v533 = vld [vmem:[#allocation5 + $0xd40] sm:$0xff]
    %v534 = vld [vmem:[#allocation5 + $0xd48] sm:$0xff]
    %v535 = vld [vmem:[#allocation5 + $0xd50] sm:$0xff]
    %v536 = vld [vmem:[#allocation5 + $0xd58] sm:$0xff]
    %v537 = vld [vmem:[#allocation5 + $0xd60] sm:$0xff]
    %v538 = vld [vmem:[#allocation5 + $0xd68] sm:$0xff]
    %v539 = vld [vmem:[#allocation5 + $0xd70] sm:$0xff]
    %v540 = vld [vmem:[#allocation5 + $0xd78] sm:$0xff]
    %v541 = vld [vmem:[#allocation5 + $0xd80] sm:$0xff]
    %v542 = vld [vmem:[#allocation5 + $0xd88] sm:$0xff]
    %v543 = vld [vmem:[#allocation5 + $0xd90] sm:$0xff]
    %v544 = vld [vmem:[#allocation5 + $0xd98] sm:$0xff]
    %v545 = vld [vmem:[#allocation5 + $0xda0] sm:$0xff]
    %v546 = vld [vmem:[#allocation5 + $0xda8] sm:$0xff]
    %v547 = vld [vmem:[#allocation5 + $0xdb0] sm:$0xff]
    %v548 = vld [vmem:[#allocation5 + $0xdb8] sm:$0xff]
    %v549 = vld [vmem:[#allocation5 + $0xdc0] sm:$0xff]
    %v550 = vld [vmem:[#allocation5 + $0xdc8] sm:$0xff]
    %v551 = vld [vmem:[#allocation5 + $0xdd0] sm:$0xff]
    %v552 = vld [vmem:[#allocation5 + $0xdd8] sm:$0xff]
    %v553 = vld [vmem:[#allocation5 + $0xde0] sm:$0xff]
    %v554 = vld [vmem:[#allocation5 + $0xde8] sm:$0xff]
    %v555 = vld [vmem:[#allocation5 + $0xdf0] sm:$0xff]
    %v556 = vld [vmem:[#allocation5 + $0xdf8] sm:$0xff]
    %v557 = vld [vmem:[#allocation5 + $0xe00] sm:$0xff]
    %v558 = vld [vmem:[#allocation5 + $0xe08] sm:$0xff]
    %v559 = vld [vmem:[#allocation5 + $0xe10] sm:$0xff]
    %v560 = vld [vmem:[#allocation5 + $0xe18] sm:$0xff]
    %v561 = vld [vmem:[#allocation5 + $0xe20] sm:$0xff]
    %v562 = vld [vmem:[#allocation5 + $0xe28] sm:$0xff]
    %v563 = vld [vmem:[#allocation5 + $0xe30] sm:$0xff]
    %v564 = vld [vmem:[#allocation5 + $0xe38] sm:$0xff]
    %v565 = vld [vmem:[#allocation5 + $0xe40] sm:$0xff]
    %v566 = vld [vmem:[#allocation5 + $0xe48] sm:$0xff]
    %v567 = vld [vmem:[#allocation5 + $0xe50] sm:$0xff]
    %v568 = vld [vmem:[#allocation5 + $0xe58] sm:$0xff]
    %v569 = vld [vmem:[#allocation5 + $0xe60] sm:$0xff]
    %v570 = vld [vmem:[#allocation5 + $0xe68] sm:$0xff]
    %v571 = vld [vmem:[#allocation5 + $0xe70] sm:$0xff]
    %v572 = vld [vmem:[#allocation5 + $0xe78] sm:$0xff]
    %v573 = vld [vmem:[#allocation5 + $0xe80] sm:$0xff]
    %v574 = vld [vmem:[#allocation5 + $0xe88] sm:$0xff]
    %v575 = vld [vmem:[#allocation5 + $0xe90] sm:$0xff]
    %v576 = vld [vmem:[#allocation5 + $0xe98] sm:$0xff]
    %v577 = vld [vmem:[#allocation5 + $0xea0] sm:$0xff]
    %v578 = vld [vmem:[#allocation5 + $0xea8] sm:$0xff]
    %v579 = vld [vmem:[#allocation5 + $0xeb0] sm:$0xff]
    %v580 = vld [vmem:[#allocation5 + $0xeb8] sm:$0xff]
    %v581 = vld [vmem:[#allocation5 + $0xec0] sm:$0xff]
    %v582 = vld [vmem:[#allocation5 + $0xec8] sm:$0xff]
    %v583 = vld [vmem:[#allocation5 + $0xed0] sm:$0xff]
    %v584 = vld [vmem:[#allocation5 + $0xed8] sm:$0xff]
    %v585 = vld [vmem:[#allocation5 + $0xee0] sm:$0xff]
    %v586 = vld [vmem:[#allocation5 + $0xee8] sm:$0xff]
    %v587 = vld [vmem:[#allocation5 + $0xef0] sm:$0xff]
    %v588 = vld [vmem:[#allocation5 + $0xef8] sm:$0xff]
    %v589 = vld [vmem:[#allocation5 + $0xf00] sm:$0xff]
    %v590 = vld [vmem:[#allocation5 + $0xf08] sm:$0xff]
    %v591 = vld [vmem:[#allocation5 + $0xf10] sm:$0xff]
    %v592 = vld [vmem:[#allocation5 + $0xf18] sm:$0xff]
    %v593 = vld [vmem:[#allocation5 + $0xf20] sm:$0xff]
    %v594 = vld [vmem:[#allocation5 + $0xf28] sm:$0xff]
    %v595 = vld [vmem:[#allocation5 + $0xf30] sm:$0xff]
    %v596 = vld [vmem:[#allocation5 + $0xf38] sm:$0xff]
    %v597 = vld [vmem:[#allocation5 + $0xf40] sm:$0xff]
    %v598 = vld [vmem:[#allocation5 + $0xf48] sm:$0xff]
    %v599 = vld [vmem:[#allocation5 + $0xf50] sm:$0xff]
    %v600 = vld [vmem:[#allocation5 + $0xf58] sm:$0xff]
    %v601 = vld [vmem:[#allocation5 + $0xf60] sm:$0xff]
    %v602 = vld [vmem:[#allocation5 + $0xf68] sm:$0xff]
    %v603 = vld [vmem:[#allocation5 + $0xf70] sm:$0xff]
    %v604 = vld [vmem:[#allocation5 + $0xf78] sm:$0xff]
    %v605 = vld [vmem:[#allocation5 + $0xf80] sm:$0xff]
    %v606 = vld [vmem:[#allocation5 + $0xf88] sm:$0xff]
    %v607 = vld [vmem:[#allocation5 + $0xf90] sm:$0xff]
    %v608 = vld [vmem:[#allocation5 + $0xf98] sm:$0xff]
    %v609 = vld [vmem:[#allocation5 + $0xfa0] sm:$0xff]
    %v610 = vld [vmem:[#allocation5 + $0xfa8] sm:$0xff]
    %v611 = vld [vmem:[#allocation5 + $0xfb0] sm:$0xff]
    %v612 = vld [vmem:[#allocation5 + $0xfb8] sm:$0xff]
    %v613 = vld [vmem:[#allocation5 + $0xfc0] sm:$0xff]
    %v614 = vld [vmem:[#allocation5 + $0xfc8] sm:$0xff]
    %v615 = vld [vmem:[#allocation5 + $0xfd0] sm:$0xff]
    %v616 = vld [vmem:[#allocation5 + $0xfd8] sm:$0xff]
    %v617 = vld [vmem:[#allocation5 + $0xfe0] sm:$0xff]
    %v618 = vld [vmem:[#allocation5 + $0xfe8] sm:$0xff]
    %v619 = vld [vmem:[#allocation5 + $0xff0] sm:$0xff]
    %v620 = vld [vmem:[#allocation5 + $0xff8] sm:$0xff]
    %v621 = vld [vmem:[#allocation7] sm:$0xff]
    %v623 = vperm.slane %v621, 0
    %v624 = vperm.slane %v621, 1
    %v625 = vperm.slane %v621, 2
    %v626 = vperm.slane %v621, 3
    %v627 = vperm.slane %v621, 4
    %v628 = vperm.slane %v621, 5
    %v629 = vperm.slane %v621, 6
    %v630 = vperm.slane %v621, 7
    %v1151 = vunpack.c.l.b16 %v109
    %v1152 = vunpack.c.h.b16 %v109
    %v1153 = vunpack.c.l.b16 %v110
    %v1154 = vunpack.c.h.b16 %v110
    %v1155 = vunpack.c.l.b16 %v111
    %v1156 = vunpack.c.h.b16 %v111
    %v1157 = vunpack.c.l.b16 %v112
    %v1158 = vunpack.c.h.b16 %v112
    %v1159 = vunpack.c.l.b16 %v113
    %v1160 = vunpack.c.h.b16 %v113
    %v1161 = vunpack.c.l.b16 %v114
    %v1162 = vunpack.c.h.b16 %v114
    %v1163 = vunpack.c.l.b16 %v115
    %v1164 = vunpack.c.h.b16 %v115
    %v1165 = vunpack.c.l.b16 %v116
    %v1166 = vunpack.c.h.b16 %v116
    %v1167 = vunpack.c.l.b16 %v117
    %v1168 = vunpack.c.h.b16 %v117
    %v1169 = vunpack.c.l.b16 %v118
    %v1170 = vunpack.c.h.b16 %v118
    %v1171 = vunpack.c.l.b16 %v119
    %v1172 = vunpack.c.h.b16 %v119
    %v1173 = vunpack.c.l.b16 %v120
    %v1174 = vunpack.c.h.b16 %v120
    %v1175 = vunpack.c.l.b16 %v121
    %v1176 = vunpack.c.h.b16 %v121
    %v1177 = vunpack.c.l.b16 %v122
    %v1178 = vunpack.c.h.b16 %v122
    %v1179 = vunpack.c.l.b16 %v123
    %v1180 = vunpack.c.h.b16 %v123
    %v1181 = vunpack.c.l.b16 %v124
    %v1182 = vunpack.c.h.b16 %v124
    %v1183 = vunpack.c.l.b16 %v125
    %v1184 = vunpack.c.h.b16 %v125
    %v1185 = vunpack.c.l.b16 %v126
    %v1186 = vunpack.c.h.b16 %v126
    %v1187 = vunpack.c.l.b16 %v127
    %v1188 = vunpack.c.h.b16 %v127
    %v1189 = vunpack.c.l.b16 %v128
    %v1190 = vunpack.c.h.b16 %v128
    %v1191 = vunpack.c.l.b16 %v129
    %v1192 = vunpack.c.h.b16 %v129
    %v1193 = vunpack.c.l.b16 %v130
    %v1194 = vunpack.c.h.b16 %v130
    %v1195 = vunpack.c.l.b16 %v131
    %v1196 = vunpack.c.h.b16 %v131
    %v1197 = vunpack.c.l.b16 %v132
    %v1198 = vunpack.c.h.b16 %v132
    %v1199 = vunpack.c.l.b16 %v133
    %v1200 = vunpack.c.h.b16 %v133
    %v1201 = vunpack.c.l.b16 %v134
    %v1202 = vunpack.c.h.b16 %v134
    %v1203 = vunpack.c.l.b16 %v135
    %v1204 = vunpack.c.h.b16 %v135
    %v1205 = vunpack.c.l.b16 %v136
    %v1206 = vunpack.c.h.b16 %v136
    %v1207 = vunpack.c.l.b16 %v137
    %v1208 = vunpack.c.h.b16 %v137
    %v1209 = vunpack.c.l.b16 %v138
    %v1210 = vunpack.c.h.b16 %v138
    %v1211 = vunpack.c.l.b16 %v139
    %v1212 = vunpack.c.h.b16 %v139
    %v1213 = vunpack.c.l.b16 %v140
    %v1214 = vunpack.c.h.b16 %v140
    %v1215 = vunpack.c.l.b16 %v141
    %v1216 = vunpack.c.h.b16 %v141
    %v1217 = vunpack.c.l.b16 %v142
    %v1218 = vunpack.c.h.b16 %v142
    %v1219 = vunpack.c.l.b16 %v143
    %v1220 = vunpack.c.h.b16 %v143
    %v1221 = vunpack.c.l.b16 %v144
    %v1222 = vunpack.c.h.b16 %v144
    %v1223 = vunpack.c.l.b16 %v145
    %v1224 = vunpack.c.h.b16 %v145
    %v1225 = vunpack.c.l.b16 %v146
    %v1226 = vunpack.c.h.b16 %v146
    %v1227 = vunpack.c.l.b16 %v147
    %v1228 = vunpack.c.h.b16 %v147
    %v1229 = vunpack.c.l.b16 %v148
    %v1230 = vunpack.c.h.b16 %v148
    %v1231 = vunpack.c.l.b16 %v149
    %v1232 = vunpack.c.h.b16 %v149
    %v1233 = vunpack.c.l.b16 %v150
    %v1234 = vunpack.c.h.b16 %v150
    %v1235 = vunpack.c.l.b16 %v151
    %v1236 = vunpack.c.h.b16 %v151
    %v1237 = vunpack.c.l.b16 %v152
    %v1238 = vunpack.c.h.b16 %v152
    %v1239 = vunpack.c.l.b16 %v153
    %v1240 = vunpack.c.h.b16 %v153
    %v1241 = vunpack.c.l.b16 %v154
    %v1242 = vunpack.c.h.b16 %v154
    %v1243 = vunpack.c.l.b16 %v155
    %v1244 = vunpack.c.h.b16 %v155
    %v1245 = vunpack.c.l.b16 %v156
    %v1246 = vunpack.c.h.b16 %v156
    %v1247 = vunpack.c.l.b16 %v157
    %v1248 = vunpack.c.h.b16 %v157
    %v1249 = vunpack.c.l.b16 %v158
    %v1250 = vunpack.c.h.b16 %v158
    %v1251 = vunpack.c.l.b16 %v159
    %v1252 = vunpack.c.h.b16 %v159
    %v1253 = vunpack.c.l.b16 %v160
    %v1254 = vunpack.c.h.b16 %v160
    %v1255 = vunpack.c.l.b16 %v161
    %v1256 = vunpack.c.h.b16 %v161
    %v1257 = vunpack.c.l.b16 %v162
    %v1258 = vunpack.c.h.b16 %v162
    %v1259 = vunpack.c.l.b16 %v163
    %v1260 = vunpack.c.h.b16 %v163
    %v1261 = vunpack.c.l.b16 %v164
    %v1262 = vunpack.c.h.b16 %v164
    %v1263 = vunpack.c.l.b16 %v165
    %v1264 = vunpack.c.h.b16 %v165
    %v1265 = vunpack.c.l.b16 %v166
    %v1266 = vunpack.c.h.b16 %v166
    %v1267 = vunpack.c.l.b16 %v167
    %v1268 = vunpack.c.h.b16 %v167
    %v1269 = vunpack.c.l.b16 %v168
    %v1270 = vunpack.c.h.b16 %v168
    %v1271 = vunpack.c.l.b16 %v169
    %v1272 = vunpack.c.h.b16 %v169
    %v1273 = vunpack.c.l.b16 %v170
    %v1274 = vunpack.c.h.b16 %v170
    %v1275 = vunpack.c.l.b16 %v171
    %v1276 = vunpack.c.h.b16 %v171
    %v1277 = vunpack.c.l.b16 %v172
    %v1278 = vunpack.c.h.b16 %v172
    %v1279 = vunpack.c.l.b16 %v173
    %v1280 = vunpack.c.h.b16 %v173
    %v1281 = vunpack.c.l.b16 %v174
    %v1282 = vunpack.c.h.b16 %v174
    %v1283 = vunpack.c.l.b16 %v175
    %v1284 = vunpack.c.h.b16 %v175
    %v1285 = vunpack.c.l.b16 %v176
    %v1286 = vunpack.c.h.b16 %v176
    %v1287 = vunpack.c.l.b16 %v177
    %v1288 = vunpack.c.h.b16 %v177
    %v1289 = vunpack.c.l.b16 %v178
    %v1290 = vunpack.c.h.b16 %v178
    %v1291 = vunpack.c.l.b16 %v179
    %v1292 = vunpack.c.h.b16 %v179
    %v1293 = vunpack.c.l.b16 %v180
    %v1294 = vunpack.c.h.b16 %v180
    %v1295 = vunpack.c.l.b16 %v181
    %v1296 = vunpack.c.h.b16 %v181
    %v1297 = vunpack.c.l.b16 %v182
    %v1298 = vunpack.c.h.b16 %v182
    %v1299 = vunpack.c.l.b16 %v183
    %v1300 = vunpack.c.h.b16 %v183
    %v1301 = vunpack.c.l.b16 %v184
    %v1302 = vunpack.c.h.b16 %v184
    %v1303 = vunpack.c.l.b16 %v185
    %v1304 = vunpack.c.h.b16 %v185
    %v1305 = vunpack.c.l.b16 %v186
    %v1306 = vunpack.c.h.b16 %v186
    %v1307 = vunpack.c.l.b16 %v187
    %v1308 = vunpack.c.h.b16 %v187
    %v1309 = vunpack.c.l.b16 %v188
    %v1310 = vunpack.c.h.b16 %v188
    %v1311 = vunpack.c.l.b16 %v189
    %v1312 = vunpack.c.h.b16 %v189
    %v1313 = vunpack.c.l.b16 %v190
    %v1314 = vunpack.c.h.b16 %v190
    %v1315 = vunpack.c.l.b16 %v191
    %v1316 = vunpack.c.h.b16 %v191
    %v1317 = vunpack.c.l.b16 %v192
    %v1318 = vunpack.c.h.b16 %v192
    %v1319 = vunpack.c.l.b16 %v193
    %v1320 = vunpack.c.h.b16 %v193
    %v1321 = vunpack.c.l.b16 %v194
    %v1322 = vunpack.c.h.b16 %v194
    %v1323 = vunpack.c.l.b16 %v195
    %v1324 = vunpack.c.h.b16 %v195
    %v1325 = vunpack.c.l.b16 %v196
    %v1326 = vunpack.c.h.b16 %v196
    %v1327 = vunpack.c.l.b16 %v197
    %v1328 = vunpack.c.h.b16 %v197
    %v1329 = vunpack.c.l.b16 %v198
    %v1330 = vunpack.c.h.b16 %v198
    %v1331 = vunpack.c.l.b16 %v199
    %v1332 = vunpack.c.h.b16 %v199
    %v1333 = vunpack.c.l.b16 %v200
    %v1334 = vunpack.c.h.b16 %v200
    %v1335 = vunpack.c.l.b16 %v201
    %v1336 = vunpack.c.h.b16 %v201
    %v1337 = vunpack.c.l.b16 %v202
    %v1338 = vunpack.c.h.b16 %v202
    %v1339 = vunpack.c.l.b16 %v203
    %v1340 = vunpack.c.h.b16 %v203
    %v1341 = vunpack.c.l.b16 %v204
    %v1342 = vunpack.c.h.b16 %v204
    %v1343 = vunpack.c.l.b16 %v205
    %v1344 = vunpack.c.h.b16 %v205
    %v1345 = vunpack.c.l.b16 %v206
    %v1346 = vunpack.c.h.b16 %v206
    %v1347 = vunpack.c.l.b16 %v207
    %v1348 = vunpack.c.h.b16 %v207
    %v1349 = vunpack.c.l.b16 %v208
    %v1350 = vunpack.c.h.b16 %v208
    %v1351 = vunpack.c.l.b16 %v209
    %v1352 = vunpack.c.h.b16 %v209
    %v1353 = vunpack.c.l.b16 %v210
    %v1354 = vunpack.c.h.b16 %v210
    %v1355 = vunpack.c.l.b16 %v211
    %v1356 = vunpack.c.h.b16 %v211
    %v1357 = vunpack.c.l.b16 %v212
    %v1358 = vunpack.c.h.b16 %v212
    %v1359 = vunpack.c.l.b16 %v213
    %v1360 = vunpack.c.h.b16 %v213
    %v1361 = vunpack.c.l.b16 %v214
    %v1362 = vunpack.c.h.b16 %v214
    %v1363 = vunpack.c.l.b16 %v215
    %v1364 = vunpack.c.h.b16 %v215
    %v1365 = vunpack.c.l.b16 %v216
    %v1366 = vunpack.c.h.b16 %v216
    %v1367 = vunpack.c.l.b16 %v217
    %v1368 = vunpack.c.h.b16 %v217
    %v1369 = vunpack.c.l.b16 %v218
    %v1370 = vunpack.c.h.b16 %v218
    %v1371 = vunpack.c.l.b16 %v219
    %v1372 = vunpack.c.h.b16 %v219
    %v1373 = vunpack.c.l.b16 %v220
    %v1374 = vunpack.c.h.b16 %v220
    %v1375 = vunpack.c.l.b16 %v221
    %v1376 = vunpack.c.h.b16 %v221
    %v1377 = vunpack.c.l.b16 %v222
    %v1378 = vunpack.c.h.b16 %v222
    %v1379 = vunpack.c.l.b16 %v223
    %v1380 = vunpack.c.h.b16 %v223
    %v1381 = vunpack.c.l.b16 %v224
    %v1382 = vunpack.c.h.b16 %v224
    %v1383 = vunpack.c.l.b16 %v225
    %v1384 = vunpack.c.h.b16 %v225
    %v1385 = vunpack.c.l.b16 %v226
    %v1386 = vunpack.c.h.b16 %v226
    %v1387 = vunpack.c.l.b16 %v227
    %v1388 = vunpack.c.h.b16 %v227
    %v1389 = vunpack.c.l.b16 %v228
    %v1390 = vunpack.c.h.b16 %v228
    %v1391 = vunpack.c.l.b16 %v229
    %v1392 = vunpack.c.h.b16 %v229
    %v1393 = vunpack.c.l.b16 %v230
    %v1394 = vunpack.c.h.b16 %v230
    %v1395 = vunpack.c.l.b16 %v231
    %v1396 = vunpack.c.h.b16 %v231
    %v1397 = vunpack.c.l.b16 %v232
    %v1398 = vunpack.c.h.b16 %v232
    %v1399 = vunpack.c.l.b16 %v233
    %v1400 = vunpack.c.h.b16 %v233
    %v1401 = vunpack.c.l.b16 %v234
    %v1402 = vunpack.c.h.b16 %v234
    %v1403 = vunpack.c.l.b16 %v235
    %v1404 = vunpack.c.h.b16 %v235
    %v1405 = vunpack.c.l.b16 %v236
    %v1406 = vunpack.c.h.b16 %v236
    %v1407 = vunpack.c.l.b16 %v237
    %v1408 = vunpack.c.h.b16 %v237
    %v1409 = vunpack.c.l.b16 %v238
    %v1410 = vunpack.c.h.b16 %v238
    %v1411 = vunpack.c.l.b16 %v239
    %v1412 = vunpack.c.h.b16 %v239
    %v1413 = vunpack.c.l.b16 %v240
    %v1414 = vunpack.c.h.b16 %v240
    %v1415 = vunpack.c.l.b16 %v241
    %v1416 = vunpack.c.h.b16 %v241
    %v1417 = vunpack.c.l.b16 %v242
    %v1418 = vunpack.c.h.b16 %v242
    %v1419 = vunpack.c.l.b16 %v243
    %v1420 = vunpack.c.h.b16 %v243
    %v1421 = vunpack.c.l.b16 %v244
    %v1422 = vunpack.c.h.b16 %v244
    %v1423 = vunpack.c.l.b16 %v245
    %v1424 = vunpack.c.h.b16 %v245
    %v1425 = vunpack.c.l.b16 %v246
    %v1426 = vunpack.c.h.b16 %v246
    %v1427 = vunpack.c.l.b16 %v247
    %v1428 = vunpack.c.h.b16 %v247
    %v1429 = vunpack.c.l.b16 %v248
    %v1430 = vunpack.c.h.b16 %v248
    %v1431 = vunpack.c.l.b16 %v249
    %v1432 = vunpack.c.h.b16 %v249
    %v1433 = vunpack.c.l.b16 %v250
    %v1434 = vunpack.c.h.b16 %v250
    %v1435 = vunpack.c.l.b16 %v251
    %v1436 = vunpack.c.h.b16 %v251
    %v1437 = vunpack.c.l.b16 %v252
    %v1438 = vunpack.c.h.b16 %v252
    %v1439 = vunpack.c.l.b16 %v253
    %v1440 = vunpack.c.h.b16 %v253
    %v1441 = vunpack.c.l.b16 %v254
    %v1442 = vunpack.c.h.b16 %v254
    %v1443 = vunpack.c.l.b16 %v255
    %v1444 = vunpack.c.h.b16 %v255
    %v1445 = vunpack.c.l.b16 %v256
    %v1446 = vunpack.c.h.b16 %v256
    %v1447 = vunpack.c.l.b16 %v257
    %v1448 = vunpack.c.h.b16 %v257
    %v1449 = vunpack.c.l.b16 %v258
    %v1450 = vunpack.c.h.b16 %v258
    %v1451 = vunpack.c.l.b16 %v259
    %v1452 = vunpack.c.h.b16 %v259
    %v1453 = vunpack.c.l.b16 %v260
    %v1454 = vunpack.c.h.b16 %v260
    %v1455 = vunpack.c.l.b16 %v261
    %v1456 = vunpack.c.h.b16 %v261
    %v1457 = vunpack.c.l.b16 %v262
    %v1458 = vunpack.c.h.b16 %v262
    %v1459 = vunpack.c.l.b16 %v263
    %v1460 = vunpack.c.h.b16 %v263
    %v1461 = vunpack.c.l.b16 %v264
    %v1462 = vunpack.c.h.b16 %v264
    %v1463 = vunpack.c.l.b16 %v265
    %v1464 = vunpack.c.h.b16 %v265
    %v1465 = vunpack.c.l.b16 %v266
    %v1466 = vunpack.c.h.b16 %v266
    %v1467 = vunpack.c.l.b16 %v267
    %v1468 = vunpack.c.h.b16 %v267
    %v1469 = vunpack.c.l.b16 %v268
    %v1470 = vunpack.c.h.b16 %v268
    %v1471 = vunpack.c.l.b16 %v269
    %v1472 = vunpack.c.h.b16 %v269
    %v1473 = vunpack.c.l.b16 %v270
    %v1474 = vunpack.c.h.b16 %v270
    %v1475 = vunpack.c.l.b16 %v271
    %v1476 = vunpack.c.h.b16 %v271
    %v1477 = vunpack.c.l.b16 %v272
    %v1478 = vunpack.c.h.b16 %v272
    %v1479 = vunpack.c.l.b16 %v273
    %v1480 = vunpack.c.h.b16 %v273
    %v1481 = vunpack.c.l.b16 %v274
    %v1482 = vunpack.c.h.b16 %v274
    %v1483 = vunpack.c.l.b16 %v275
    %v1484 = vunpack.c.h.b16 %v275
    %v1485 = vunpack.c.l.b16 %v276
    %v1486 = vunpack.c.h.b16 %v276
    %v1487 = vunpack.c.l.b16 %v277
    %v1488 = vunpack.c.h.b16 %v277
    %v1489 = vunpack.c.l.b16 %v278
    %v1490 = vunpack.c.h.b16 %v278
    %v1491 = vunpack.c.l.b16 %v279
    %v1492 = vunpack.c.h.b16 %v279
    %v1493 = vunpack.c.l.b16 %v280
    %v1494 = vunpack.c.h.b16 %v280
    %v1495 = vunpack.c.l.b16 %v281
    %v1496 = vunpack.c.h.b16 %v281
    %v1497 = vunpack.c.l.b16 %v282
    %v1498 = vunpack.c.h.b16 %v282
    %v1499 = vunpack.c.l.b16 %v283
    %v1500 = vunpack.c.h.b16 %v283
    %v1501 = vunpack.c.l.b16 %v284
    %v1502 = vunpack.c.h.b16 %v284
    %v1503 = vunpack.c.l.b16 %v285
    %v1504 = vunpack.c.h.b16 %v285
    %v1505 = vunpack.c.l.b16 %v286
    %v1506 = vunpack.c.h.b16 %v286
    %v1507 = vunpack.c.l.b16 %v287
    %v1508 = vunpack.c.h.b16 %v287
    %v1509 = vunpack.c.l.b16 %v288
    %v1510 = vunpack.c.h.b16 %v288
    %v1511 = vunpack.c.l.b16 %v289
    %v1512 = vunpack.c.h.b16 %v289
    %v1513 = vunpack.c.l.b16 %v290
    %v1514 = vunpack.c.h.b16 %v290
    %v1515 = vunpack.c.l.b16 %v291
    %v1516 = vunpack.c.h.b16 %v291
    %v1517 = vunpack.c.l.b16 %v292
    %v1518 = vunpack.c.h.b16 %v292
    %v1519 = vunpack.c.l.b16 %v293
    %v1520 = vunpack.c.h.b16 %v293
    %v1521 = vunpack.c.l.b16 %v294
    %v1522 = vunpack.c.h.b16 %v294
    %v1523 = vunpack.c.l.b16 %v295
    %v1524 = vunpack.c.h.b16 %v295
    %v1525 = vunpack.c.l.b16 %v296
    %v1526 = vunpack.c.h.b16 %v296
    %v1527 = vunpack.c.l.b16 %v297
    %v1528 = vunpack.c.h.b16 %v297
    %v1529 = vunpack.c.l.b16 %v298
    %v1530 = vunpack.c.h.b16 %v298
    %v1531 = vunpack.c.l.b16 %v299
    %v1532 = vunpack.c.h.b16 %v299
    %v1533 = vunpack.c.l.b16 %v300
    %v1534 = vunpack.c.h.b16 %v300
    %v1535 = vunpack.c.l.b16 %v301
    %v1536 = vunpack.c.h.b16 %v301
    %v1537 = vunpack.c.l.b16 %v302
    %v1538 = vunpack.c.h.b16 %v302
    %v1539 = vunpack.c.l.b16 %v303
    %v1540 = vunpack.c.h.b16 %v303
    %v1541 = vunpack.c.l.b16 %v304
    %v1542 = vunpack.c.h.b16 %v304
    %v1543 = vunpack.c.l.b16 %v305
    %v1544 = vunpack.c.h.b16 %v305
    %v1545 = vunpack.c.l.b16 %v306
    %v1546 = vunpack.c.h.b16 %v306
    %v1547 = vunpack.c.l.b16 %v307
    %v1548 = vunpack.c.h.b16 %v307
    %v1549 = vunpack.c.l.b16 %v308
    %v1550 = vunpack.c.h.b16 %v308
    %v1551 = vunpack.c.l.b16 %v309
    %v1552 = vunpack.c.h.b16 %v309
    %v1553 = vunpack.c.l.b16 %v310
    %v1554 = vunpack.c.h.b16 %v310
    %v1555 = vunpack.c.l.b16 %v311
    %v1556 = vunpack.c.h.b16 %v311
    %v1557 = vunpack.c.l.b16 %v312
    %v1558 = vunpack.c.h.b16 %v312
    %v1559 = vunpack.c.l.b16 %v313
    %v1560 = vunpack.c.h.b16 %v313
    %v1561 = vunpack.c.l.b16 %v314
    %v1562 = vunpack.c.h.b16 %v314
    %v1563 = vunpack.c.l.b16 %v315
    %v1564 = vunpack.c.h.b16 %v315
    %v1565 = vunpack.c.l.b16 %v316
    %v1566 = vunpack.c.h.b16 %v316
    %v1567 = vunpack.c.l.b16 %v317
    %v1568 = vunpack.c.h.b16 %v317
    %v1569 = vunpack.c.l.b16 %v318
    %v1570 = vunpack.c.h.b16 %v318
    %v1571 = vunpack.c.l.b16 %v319
    %v1572 = vunpack.c.h.b16 %v319
    %v1573 = vunpack.c.l.b16 %v320
    %v1574 = vunpack.c.h.b16 %v320
    %v1575 = vunpack.c.l.b16 %v321
    %v1576 = vunpack.c.h.b16 %v321
    %v1577 = vunpack.c.l.b16 %v322
    %v1578 = vunpack.c.h.b16 %v322
    %v1579 = vunpack.c.l.b16 %v323
    %v1580 = vunpack.c.h.b16 %v323
    %v1581 = vunpack.c.l.b16 %v324
    %v1582 = vunpack.c.h.b16 %v324
    %v1583 = vunpack.c.l.b16 %v325
    %v1584 = vunpack.c.h.b16 %v325
    %v1585 = vunpack.c.l.b16 %v326
    %v1586 = vunpack.c.h.b16 %v326
    %v1587 = vunpack.c.l.b16 %v327
    %v1588 = vunpack.c.h.b16 %v327
    %v1589 = vunpack.c.l.b16 %v328
    %v1590 = vunpack.c.h.b16 %v328
    %v1591 = vunpack.c.l.b16 %v329
    %v1592 = vunpack.c.h.b16 %v329
    %v1593 = vunpack.c.l.b16 %v330
    %v1594 = vunpack.c.h.b16 %v330
    %v1595 = vunpack.c.l.b16 %v331
    %v1596 = vunpack.c.h.b16 %v331
    %v1597 = vunpack.c.l.b16 %v332
    %v1598 = vunpack.c.h.b16 %v332
    %v1599 = vunpack.c.l.b16 %v333
    %v1600 = vunpack.c.h.b16 %v333
    %v1601 = vunpack.c.l.b16 %v334
    %v1602 = vunpack.c.h.b16 %v334
    %v1603 = vunpack.c.l.b16 %v335
    %v1604 = vunpack.c.h.b16 %v335
    %v1605 = vunpack.c.l.b16 %v336
    %v1606 = vunpack.c.h.b16 %v336
    %v1607 = vunpack.c.l.b16 %v337
    %v1608 = vunpack.c.h.b16 %v337
    %v1609 = vunpack.c.l.b16 %v338
    %v1610 = vunpack.c.h.b16 %v338
    %v1611 = vunpack.c.l.b16 %v339
    %v1612 = vunpack.c.h.b16 %v339
    %v1613 = vunpack.c.l.b16 %v340
    %v1614 = vunpack.c.h.b16 %v340
    %v1615 = vunpack.c.l.b16 %v341
    %v1616 = vunpack.c.h.b16 %v341
    %v1617 = vunpack.c.l.b16 %v342
    %v1618 = vunpack.c.h.b16 %v342
    %v1619 = vunpack.c.l.b16 %v343
    %v1620 = vunpack.c.h.b16 %v343
    %v1621 = vunpack.c.l.b16 %v344
    %v1622 = vunpack.c.h.b16 %v344
    %v1623 = vunpack.c.l.b16 %v345
    %v1624 = vunpack.c.h.b16 %v345
    %v1625 = vunpack.c.l.b16 %v346
    %v1626 = vunpack.c.h.b16 %v346
    %v1627 = vunpack.c.l.b16 %v347
    %v1628 = vunpack.c.h.b16 %v347
    %v1629 = vunpack.c.l.b16 %v348
    %v1630 = vunpack.c.h.b16 %v348
    %v1631 = vunpack.c.l.b16 %v349
    %v1632 = vunpack.c.h.b16 %v349
    %v1633 = vunpack.c.l.b16 %v350
    %v1634 = vunpack.c.h.b16 %v350
    %v1635 = vunpack.c.l.b16 %v351
    %v1636 = vunpack.c.h.b16 %v351
    %v1637 = vunpack.c.l.b16 %v352
    %v1638 = vunpack.c.h.b16 %v352
    %v1639 = vunpack.c.l.b16 %v353
    %v1640 = vunpack.c.h.b16 %v353
    %v1641 = vunpack.c.l.b16 %v354
    %v1642 = vunpack.c.h.b16 %v354
    %v1643 = vunpack.c.l.b16 %v355
    %v1644 = vunpack.c.h.b16 %v355
    %v1645 = vunpack.c.l.b16 %v356
    %v1646 = vunpack.c.h.b16 %v356
    %v1647 = vunpack.c.l.b16 %v357
    %v1648 = vunpack.c.h.b16 %v357
    %v1649 = vunpack.c.l.b16 %v358
    %v1650 = vunpack.c.h.b16 %v358
    %v1651 = vunpack.c.l.b16 %v359
    %v1652 = vunpack.c.h.b16 %v359
    %v1653 = vunpack.c.l.b16 %v360
    %v1654 = vunpack.c.h.b16 %v360
    %v1655 = vunpack.c.l.b16 %v361
    %v1656 = vunpack.c.h.b16 %v361
    %v1657 = vunpack.c.l.b16 %v362
    %v1658 = vunpack.c.h.b16 %v362
    %v1659 = vunpack.c.l.b16 %v363
    %v1660 = vunpack.c.h.b16 %v363
    %v1661 = vunpack.c.l.b16 %v364
    %v1662 = vunpack.c.h.b16 %v364
    %v1663 = vunpack.c.l.b16 %v365
    %v1664 = vunpack.c.h.b16 %v365
    %v1665 = vunpack.c.l.b16 %v366
    %v1666 = vunpack.c.h.b16 %v366
    %v1667 = vunpack.c.l.b16 %v367
    %v1668 = vunpack.c.h.b16 %v367
    %v1669 = vunpack.c.l.b16 %v368
    %v1670 = vunpack.c.h.b16 %v368
    %v1671 = vunpack.c.l.b16 %v369
    %v1672 = vunpack.c.h.b16 %v369
    %v1673 = vunpack.c.l.b16 %v370
    %v1674 = vunpack.c.h.b16 %v370
    %v1675 = vunpack.c.l.b16 %v371
    %v1676 = vunpack.c.h.b16 %v371
    %v1677 = vunpack.c.l.b16 %v372
    %v1678 = vunpack.c.h.b16 %v372
    %v1679 = vunpack.c.l.b16 %v373
    %v1680 = vunpack.c.h.b16 %v373
    %v1681 = vunpack.c.l.b16 %v374
    %v1682 = vunpack.c.h.b16 %v374
    %v1683 = vunpack.c.l.b16 %v375
    %v1684 = vunpack.c.h.b16 %v375
    %v1685 = vunpack.c.l.b16 %v376
    %v1686 = vunpack.c.h.b16 %v376
    %v1687 = vunpack.c.l.b16 %v377
    %v1688 = vunpack.c.h.b16 %v377
    %v1689 = vunpack.c.l.b16 %v378
    %v1690 = vunpack.c.h.b16 %v378
    %v1691 = vunpack.c.l.b16 %v379
    %v1692 = vunpack.c.h.b16 %v379
    %v1693 = vunpack.c.l.b16 %v380
    %v1694 = vunpack.c.h.b16 %v380
    %v1695 = vunpack.c.l.b16 %v381
    %v1696 = vunpack.c.h.b16 %v381
    %v1697 = vunpack.c.l.b16 %v382
    %v1698 = vunpack.c.h.b16 %v382
    %v1699 = vunpack.c.l.b16 %v383
    %v1700 = vunpack.c.h.b16 %v383
    %v1701 = vunpack.c.l.b16 %v384
    %v1702 = vunpack.c.h.b16 %v384
    %v1703 = vunpack.c.l.b16 %v385
    %v1704 = vunpack.c.h.b16 %v385
    %v1705 = vunpack.c.l.b16 %v386
    %v1706 = vunpack.c.h.b16 %v386
    %v1707 = vunpack.c.l.b16 %v387
    %v1708 = vunpack.c.h.b16 %v387
    %v1709 = vunpack.c.l.b16 %v388
    %v1710 = vunpack.c.h.b16 %v388
    %v1711 = vunpack.c.l.b16 %v389
    %v1712 = vunpack.c.h.b16 %v389
    %v1713 = vunpack.c.l.b16 %v390
    %v1714 = vunpack.c.h.b16 %v390
    %v1715 = vunpack.c.l.b16 %v391
    %v1716 = vunpack.c.h.b16 %v391
    %v1717 = vunpack.c.l.b16 %v392
    %v1718 = vunpack.c.h.b16 %v392
    %v1719 = vunpack.c.l.b16 %v393
    %v1720 = vunpack.c.h.b16 %v393
    %v1721 = vunpack.c.l.b16 %v394
    %v1722 = vunpack.c.h.b16 %v394
    %v1723 = vunpack.c.l.b16 %v395
    %v1724 = vunpack.c.h.b16 %v395
    %v1725 = vunpack.c.l.b16 %v396
    %v1726 = vunpack.c.h.b16 %v396
    %v1727 = vunpack.c.l.b16 %v397
    %v1728 = vunpack.c.h.b16 %v397
    %v1729 = vunpack.c.l.b16 %v398
    %v1730 = vunpack.c.h.b16 %v398
    %v1731 = vunpack.c.l.b16 %v399
    %v1732 = vunpack.c.h.b16 %v399
    %v1733 = vunpack.c.l.b16 %v400
    %v1734 = vunpack.c.h.b16 %v400
    %v1735 = vunpack.c.l.b16 %v401
    %v1736 = vunpack.c.h.b16 %v401
    %v1737 = vunpack.c.l.b16 %v402
    %v1738 = vunpack.c.h.b16 %v402
    %v1739 = vunpack.c.l.b16 %v403
    %v1740 = vunpack.c.h.b16 %v403
    %v1741 = vunpack.c.l.b16 %v404
    %v1742 = vunpack.c.h.b16 %v404
    %v1743 = vunpack.c.l.b16 %v405
    %v1744 = vunpack.c.h.b16 %v405
    %v1745 = vunpack.c.l.b16 %v406
    %v1746 = vunpack.c.h.b16 %v406
    %v1747 = vunpack.c.l.b16 %v407
    %v1748 = vunpack.c.h.b16 %v407
    %v1749 = vunpack.c.l.b16 %v408
    %v1750 = vunpack.c.h.b16 %v408
    %v1751 = vunpack.c.l.b16 %v409
    %v1752 = vunpack.c.h.b16 %v409
    %v1753 = vunpack.c.l.b16 %v410
    %v1754 = vunpack.c.h.b16 %v410
    %v1755 = vunpack.c.l.b16 %v411
    %v1756 = vunpack.c.h.b16 %v411
    %v1757 = vunpack.c.l.b16 %v412
    %v1758 = vunpack.c.h.b16 %v412
    %v1759 = vunpack.c.l.b16 %v413
    %v1760 = vunpack.c.h.b16 %v413
    %v1761 = vunpack.c.l.b16 %v414
    %v1762 = vunpack.c.h.b16 %v414
    %v1763 = vunpack.c.l.b16 %v415
    %v1764 = vunpack.c.h.b16 %v415
    %v1765 = vunpack.c.l.b16 %v416
    %v1766 = vunpack.c.h.b16 %v416
    %v1767 = vunpack.c.l.b16 %v417
    %v1768 = vunpack.c.h.b16 %v417
    %v1769 = vunpack.c.l.b16 %v418
    %v1770 = vunpack.c.h.b16 %v418
    %v1771 = vunpack.c.l.b16 %v419
    %v1772 = vunpack.c.h.b16 %v419
    %v1773 = vunpack.c.l.b16 %v420
    %v1774 = vunpack.c.h.b16 %v420
    %v1775 = vunpack.c.l.b16 %v421
    %v1776 = vunpack.c.h.b16 %v421
    %v1777 = vunpack.c.l.b16 %v422
    %v1778 = vunpack.c.h.b16 %v422
    %v1779 = vunpack.c.l.b16 %v423
    %v1780 = vunpack.c.h.b16 %v423
    %v1781 = vunpack.c.l.b16 %v424
    %v1782 = vunpack.c.h.b16 %v424
    %v1783 = vunpack.c.l.b16 %v425
    %v1784 = vunpack.c.h.b16 %v425
    %v1785 = vunpack.c.l.b16 %v426
    %v1786 = vunpack.c.h.b16 %v426
    %v1787 = vunpack.c.l.b16 %v427
    %v1788 = vunpack.c.h.b16 %v427
    %v1789 = vunpack.c.l.b16 %v428
    %v1790 = vunpack.c.h.b16 %v428
    %v1791 = vunpack.c.l.b16 %v429
    %v1792 = vunpack.c.h.b16 %v429
    %v1793 = vunpack.c.l.b16 %v430
    %v1794 = vunpack.c.h.b16 %v430
    %v1795 = vunpack.c.l.b16 %v431
    %v1796 = vunpack.c.h.b16 %v431
    %v1797 = vunpack.c.l.b16 %v432
    %v1798 = vunpack.c.h.b16 %v432
    %v1799 = vunpack.c.l.b16 %v433
    %v1800 = vunpack.c.h.b16 %v433
    %v1801 = vunpack.c.l.b16 %v434
    %v1802 = vunpack.c.h.b16 %v434
    %v1803 = vunpack.c.l.b16 %v435
    %v1804 = vunpack.c.h.b16 %v435
    %v1805 = vunpack.c.l.b16 %v436
    %v1806 = vunpack.c.h.b16 %v436
    %v1807 = vunpack.c.l.b16 %v437
    %v1808 = vunpack.c.h.b16 %v437
    %v1809 = vunpack.c.l.b16 %v438
    %v1810 = vunpack.c.h.b16 %v438
    %v1811 = vunpack.c.l.b16 %v439
    %v1812 = vunpack.c.h.b16 %v439
    %v1813 = vunpack.c.l.b16 %v440
    %v1814 = vunpack.c.h.b16 %v440
    %v1815 = vunpack.c.l.b16 %v441
    %v1816 = vunpack.c.h.b16 %v441
    %v1817 = vunpack.c.l.b16 %v442
    %v1818 = vunpack.c.h.b16 %v442
    %v1819 = vunpack.c.l.b16 %v443
    %v1820 = vunpack.c.h.b16 %v443
    %v1821 = vunpack.c.l.b16 %v444
    %v1822 = vunpack.c.h.b16 %v444
    %v1823 = vunpack.c.l.b16 %v445
    %v1824 = vunpack.c.h.b16 %v445
    %v1825 = vunpack.c.l.b16 %v446
    %v1826 = vunpack.c.h.b16 %v446
    %v1827 = vunpack.c.l.b16 %v447
    %v1828 = vunpack.c.h.b16 %v447
    %v1829 = vunpack.c.l.b16 %v448
    %v1830 = vunpack.c.h.b16 %v448
    %v1831 = vunpack.c.l.b16 %v449
    %v1832 = vunpack.c.h.b16 %v449
    %v1833 = vunpack.c.l.b16 %v450
    %v1834 = vunpack.c.h.b16 %v450
    %v1835 = vunpack.c.l.b16 %v451
    %v1836 = vunpack.c.h.b16 %v451
    %v1837 = vunpack.c.l.b16 %v452
    %v1838 = vunpack.c.h.b16 %v452
    %v1839 = vunpack.c.l.b16 %v453
    %v1840 = vunpack.c.h.b16 %v453
    %v1841 = vunpack.c.l.b16 %v454
    %v1842 = vunpack.c.h.b16 %v454
    %v1843 = vunpack.c.l.b16 %v455
    %v1844 = vunpack.c.h.b16 %v455
    %v1845 = vunpack.c.l.b16 %v456
    %v1846 = vunpack.c.h.b16 %v456
    %v1847 = vunpack.c.l.b16 %v457
    %v1848 = vunpack.c.h.b16 %v457
    %v1849 = vunpack.c.l.b16 %v458
    %v1850 = vunpack.c.h.b16 %v458
    %v1851 = vunpack.c.l.b16 %v459
    %v1852 = vunpack.c.h.b16 %v459
    %v1853 = vunpack.c.l.b16 %v460
    %v1854 = vunpack.c.h.b16 %v460
    %v1855 = vunpack.c.l.b16 %v461
    %v1856 = vunpack.c.h.b16 %v461
    %v1857 = vunpack.c.l.b16 %v462
    %v1858 = vunpack.c.h.b16 %v462
    %v1859 = vunpack.c.l.b16 %v463
    %v1860 = vunpack.c.h.b16 %v463
    %v1861 = vunpack.c.l.b16 %v464
    %v1862 = vunpack.c.h.b16 %v464
    %v1863 = vunpack.c.l.b16 %v465
    %v1864 = vunpack.c.h.b16 %v465
    %v1865 = vunpack.c.l.b16 %v466
    %v1866 = vunpack.c.h.b16 %v466
    %v1867 = vunpack.c.l.b16 %v467
    %v1868 = vunpack.c.h.b16 %v467
    %v1869 = vunpack.c.l.b16 %v468
    %v1870 = vunpack.c.h.b16 %v468
    %v1871 = vunpack.c.l.b16 %v469
    %v1872 = vunpack.c.h.b16 %v469
    %v1873 = vunpack.c.l.b16 %v470
    %v1874 = vunpack.c.h.b16 %v470
    %v1875 = vunpack.c.l.b16 %v471
    %v1876 = vunpack.c.h.b16 %v471
    %v1877 = vunpack.c.l.b16 %v472
    %v1878 = vunpack.c.h.b16 %v472
    %v1879 = vunpack.c.l.b16 %v473
    %v1880 = vunpack.c.h.b16 %v473
    %v1881 = vunpack.c.l.b16 %v474
    %v1882 = vunpack.c.h.b16 %v474
    %v1883 = vunpack.c.l.b16 %v475
    %v1884 = vunpack.c.h.b16 %v475
    %v1885 = vunpack.c.l.b16 %v476
    %v1886 = vunpack.c.h.b16 %v476
    %v1887 = vunpack.c.l.b16 %v477
    %v1888 = vunpack.c.h.b16 %v477
    %v1889 = vunpack.c.l.b16 %v478
    %v1890 = vunpack.c.h.b16 %v478
    %v1891 = vunpack.c.l.b16 %v479
    %v1892 = vunpack.c.h.b16 %v479
    %v1893 = vunpack.c.l.b16 %v480
    %v1894 = vunpack.c.h.b16 %v480
    %v1895 = vunpack.c.l.b16 %v481
    %v1896 = vunpack.c.h.b16 %v481
    %v1897 = vunpack.c.l.b16 %v482
    %v1898 = vunpack.c.h.b16 %v482
    %v1899 = vunpack.c.l.b16 %v483
    %v1900 = vunpack.c.h.b16 %v483
    %v1901 = vunpack.c.l.b16 %v484
    %v1902 = vunpack.c.h.b16 %v484
    %v1903 = vunpack.c.l.b16 %v485
    %v1904 = vunpack.c.h.b16 %v485
    %v1905 = vunpack.c.l.b16 %v486
    %v1906 = vunpack.c.h.b16 %v486
    %v1907 = vunpack.c.l.b16 %v487
    %v1908 = vunpack.c.h.b16 %v487
    %v1909 = vunpack.c.l.b16 %v488
    %v1910 = vunpack.c.h.b16 %v488
    %v1911 = vunpack.c.l.b16 %v489
    %v1912 = vunpack.c.h.b16 %v489
    %v1913 = vunpack.c.l.b16 %v490
    %v1914 = vunpack.c.h.b16 %v490
    %v1915 = vunpack.c.l.b16 %v491
    %v1916 = vunpack.c.h.b16 %v491
    %v1917 = vunpack.c.l.b16 %v492
    %v1918 = vunpack.c.h.b16 %v492
    %v1919 = vunpack.c.l.b16 %v493
    %v1920 = vunpack.c.h.b16 %v493
    %v1921 = vunpack.c.l.b16 %v494
    %v1922 = vunpack.c.h.b16 %v494
    %v1923 = vunpack.c.l.b16 %v495
    %v1924 = vunpack.c.h.b16 %v495
    %v1925 = vunpack.c.l.b16 %v496
    %v1926 = vunpack.c.h.b16 %v496
    %v1927 = vunpack.c.l.b16 %v497
    %v1928 = vunpack.c.h.b16 %v497
    %v1929 = vunpack.c.l.b16 %v498
    %v1930 = vunpack.c.h.b16 %v498
    %v1931 = vunpack.c.l.b16 %v499
    %v1932 = vunpack.c.h.b16 %v499
    %v1933 = vunpack.c.l.b16 %v500
    %v1934 = vunpack.c.h.b16 %v500
    %v1935 = vunpack.c.l.b16 %v501
    %v1936 = vunpack.c.h.b16 %v501
    %v1937 = vunpack.c.l.b16 %v502
    %v1938 = vunpack.c.h.b16 %v502
    %v1939 = vunpack.c.l.b16 %v503
    %v1940 = vunpack.c.h.b16 %v503
    %v1941 = vunpack.c.l.b16 %v504
    %v1942 = vunpack.c.h.b16 %v504
    %v1943 = vunpack.c.l.b16 %v505
    %v1944 = vunpack.c.h.b16 %v505
    %v1945 = vunpack.c.l.b16 %v506
    %v1946 = vunpack.c.h.b16 %v506
    %v1947 = vunpack.c.l.b16 %v507
    %v1948 = vunpack.c.h.b16 %v507
    %v1949 = vunpack.c.l.b16 %v508
    %v1950 = vunpack.c.h.b16 %v508
    %v1951 = vunpack.c.l.b16 %v509
    %v1952 = vunpack.c.h.b16 %v509
    %v1953 = vunpack.c.l.b16 %v510
    %v1954 = vunpack.c.h.b16 %v510
    %v1955 = vunpack.c.l.b16 %v511
    %v1956 = vunpack.c.h.b16 %v511
    %v1957 = vunpack.c.l.b16 %v512
    %v1958 = vunpack.c.h.b16 %v512
    %v1959 = vunpack.c.l.b16 %v513
    %v1960 = vunpack.c.h.b16 %v513
    %v1961 = vunpack.c.l.b16 %v514
    %v1962 = vunpack.c.h.b16 %v514
    %v1963 = vunpack.c.l.b16 %v515
    %v1964 = vunpack.c.h.b16 %v515
    %v1965 = vunpack.c.l.b16 %v516
    %v1966 = vunpack.c.h.b16 %v516
    %v1967 = vunpack.c.l.b16 %v517
    %v1968 = vunpack.c.h.b16 %v517
    %v1969 = vunpack.c.l.b16 %v518
    %v1970 = vunpack.c.h.b16 %v518
    %v1971 = vunpack.c.l.b16 %v519
    %v1972 = vunpack.c.h.b16 %v519
    %v1973 = vunpack.c.l.b16 %v520
    %v1974 = vunpack.c.h.b16 %v520
    %v1975 = vunpack.c.l.b16 %v521
    %v1976 = vunpack.c.h.b16 %v521
    %v1977 = vunpack.c.l.b16 %v522
    %v1978 = vunpack.c.h.b16 %v522
    %v1979 = vunpack.c.l.b16 %v523
    %v1980 = vunpack.c.h.b16 %v523
    %v1981 = vunpack.c.l.b16 %v524
    %v1982 = vunpack.c.h.b16 %v524
    %v1983 = vunpack.c.l.b16 %v525
    %v1984 = vunpack.c.h.b16 %v525
    %v1985 = vunpack.c.l.b16 %v526
    %v1986 = vunpack.c.h.b16 %v526
    %v1987 = vunpack.c.l.b16 %v527
    %v1988 = vunpack.c.h.b16 %v527
    %v1989 = vunpack.c.l.b16 %v528
    %v1990 = vunpack.c.h.b16 %v528
    %v1991 = vunpack.c.l.b16 %v529
    %v1992 = vunpack.c.h.b16 %v529
    %v1993 = vunpack.c.l.b16 %v530
    %v1994 = vunpack.c.h.b16 %v530
    %v1995 = vunpack.c.l.b16 %v531
    %v1996 = vunpack.c.h.b16 %v531
    %v1997 = vunpack.c.l.b16 %v532
    %v1998 = vunpack.c.h.b16 %v532
    %v1999 = vunpack.c.l.b16 %v533
    %v2000 = vunpack.c.h.b16 %v533
    %v2001 = vunpack.c.l.b16 %v534
    %v2002 = vunpack.c.h.b16 %v534
    %v2003 = vunpack.c.l.b16 %v535
    %v2004 = vunpack.c.h.b16 %v535
    %v2005 = vunpack.c.l.b16 %v536
    %v2006 = vunpack.c.h.b16 %v536
    %v2007 = vunpack.c.l.b16 %v537
    %v2008 = vunpack.c.h.b16 %v537
    %v2009 = vunpack.c.l.b16 %v538
    %v2010 = vunpack.c.h.b16 %v538
    %v2011 = vunpack.c.l.b16 %v539
    %v2012 = vunpack.c.h.b16 %v539
    %v2013 = vunpack.c.l.b16 %v540
    %v2014 = vunpack.c.h.b16 %v540
    %v2015 = vunpack.c.l.b16 %v541
    %v2016 = vunpack.c.h.b16 %v541
    %v2017 = vunpack.c.l.b16 %v542
    %v2018 = vunpack.c.h.b16 %v542
    %v2019 = vunpack.c.l.b16 %v543
    %v2020 = vunpack.c.h.b16 %v543
    %v2021 = vunpack.c.l.b16 %v544
    %v2022 = vunpack.c.h.b16 %v544
    %v2023 = vunpack.c.l.b16 %v545
    %v2024 = vunpack.c.h.b16 %v545
    %v2025 = vunpack.c.l.b16 %v546
    %v2026 = vunpack.c.h.b16 %v546
    %v2027 = vunpack.c.l.b16 %v547
    %v2028 = vunpack.c.h.b16 %v547
    %v2029 = vunpack.c.l.b16 %v548
    %v2030 = vunpack.c.h.b16 %v548
    %v2031 = vunpack.c.l.b16 %v549
    %v2032 = vunpack.c.h.b16 %v549
    %v2033 = vunpack.c.l.b16 %v550
    %v2034 = vunpack.c.h.b16 %v550
    %v2035 = vunpack.c.l.b16 %v551
    %v2036 = vunpack.c.h.b16 %v551
    %v2037 = vunpack.c.l.b16 %v552
    %v2038 = vunpack.c.h.b16 %v552
    %v2039 = vunpack.c.l.b16 %v553
    %v2040 = vunpack.c.h.b16 %v553
    %v2041 = vunpack.c.l.b16 %v554
    %v2042 = vunpack.c.h.b16 %v554
    %v2043 = vunpack.c.l.b16 %v555
    %v2044 = vunpack.c.h.b16 %v555
    %v2045 = vunpack.c.l.b16 %v556
    %v2046 = vunpack.c.h.b16 %v556
    %v2047 = vunpack.c.l.b16 %v557
    %v2048 = vunpack.c.h.b16 %v557
    %v2049 = vunpack.c.l.b16 %v558
    %v2050 = vunpack.c.h.b16 %v558
    %v2051 = vunpack.c.l.b16 %v559
    %v2052 = vunpack.c.h.b16 %v559
    %v2053 = vunpack.c.l.b16 %v560
    %v2054 = vunpack.c.h.b16 %v560
    %v2055 = vunpack.c.l.b16 %v561
    %v2056 = vunpack.c.h.b16 %v561
    %v2057 = vunpack.c.l.b16 %v562
    %v2058 = vunpack.c.h.b16 %v562
    %v2059 = vunpack.c.l.b16 %v563
    %v2060 = vunpack.c.h.b16 %v563
    %v2061 = vunpack.c.l.b16 %v564
    %v2062 = vunpack.c.h.b16 %v564
    %v2063 = vunpack.c.l.b16 %v565
    %v2064 = vunpack.c.h.b16 %v565
    %v2065 = vunpack.c.l.b16 %v566
    %v2066 = vunpack.c.h.b16 %v566
    %v2067 = vunpack.c.l.b16 %v567
    %v2068 = vunpack.c.h.b16 %v567
    %v2069 = vunpack.c.l.b16 %v568
    %v2070 = vunpack.c.h.b16 %v568
    %v2071 = vunpack.c.l.b16 %v569
    %v2072 = vunpack.c.h.b16 %v569
    %v2073 = vunpack.c.l.b16 %v570
    %v2074 = vunpack.c.h.b16 %v570
    %v2075 = vunpack.c.l.b16 %v571
    %v2076 = vunpack.c.h.b16 %v571
    %v2077 = vunpack.c.l.b16 %v572
    %v2078 = vunpack.c.h.b16 %v572
    %v2079 = vunpack.c.l.b16 %v573
    %v2080 = vunpack.c.h.b16 %v573
    %v2081 = vunpack.c.l.b16 %v574
    %v2082 = vunpack.c.h.b16 %v574
    %v2083 = vunpack.c.l.b16 %v575
    %v2084 = vunpack.c.h.b16 %v575
    %v2085 = vunpack.c.l.b16 %v576
    %v2086 = vunpack.c.h.b16 %v576
    %v2087 = vunpack.c.l.b16 %v577
    %v2088 = vunpack.c.h.b16 %v577
    %v2089 = vunpack.c.l.b16 %v578
    %v2090 = vunpack.c.h.b16 %v578
    %v2091 = vunpack.c.l.b16 %v579
    %v2092 = vunpack.c.h.b16 %v579
    %v2093 = vunpack.c.l.b16 %v580
    %v2094 = vunpack.c.h.b16 %v580
    %v2095 = vunpack.c.l.b16 %v581
    %v2096 = vunpack.c.h.b16 %v581
    %v2097 = vunpack.c.l.b16 %v582
    %v2098 = vunpack.c.h.b16 %v582
    %v2099 = vunpack.c.l.b16 %v583
    %v2100 = vunpack.c.h.b16 %v583
    %v2101 = vunpack.c.l.b16 %v584
    %v2102 = vunpack.c.h.b16 %v584
    %v2103 = vunpack.c.l.b16 %v585
    %v2104 = vunpack.c.h.b16 %v585
    %v2105 = vunpack.c.l.b16 %v586
    %v2106 = vunpack.c.h.b16 %v586
    %v2107 = vunpack.c.l.b16 %v587
    %v2108 = vunpack.c.h.b16 %v587
    %v2109 = vunpack.c.l.b16 %v588
    %v2110 = vunpack.c.h.b16 %v588
    %v2111 = vunpack.c.l.b16 %v589
    %v2112 = vunpack.c.h.b16 %v589
    %v2113 = vunpack.c.l.b16 %v590
    %v2114 = vunpack.c.h.b16 %v590
    %v2115 = vunpack.c.l.b16 %v591
    %v2116 = vunpack.c.h.b16 %v591
    %v2117 = vunpack.c.l.b16 %v592
    %v2118 = vunpack.c.h.b16 %v592
    %v2119 = vunpack.c.l.b16 %v593
    %v2120 = vunpack.c.h.b16 %v593
    %v2121 = vunpack.c.l.b16 %v594
    %v2122 = vunpack.c.h.b16 %v594
    %v2123 = vunpack.c.l.b16 %v595
    %v2124 = vunpack.c.h.b16 %v595
    %v2125 = vunpack.c.l.b16 %v596
    %v2126 = vunpack.c.h.b16 %v596
    %v2127 = vunpack.c.l.b16 %v597
    %v2128 = vunpack.c.h.b16 %v597
    %v2129 = vunpack.c.l.b16 %v598
    %v2130 = vunpack.c.h.b16 %v598
    %v2131 = vunpack.c.l.b16 %v599
    %v2132 = vunpack.c.h.b16 %v599
    %v2133 = vunpack.c.l.b16 %v600
    %v2134 = vunpack.c.h.b16 %v600
    %v2135 = vunpack.c.l.b16 %v601
    %v2136 = vunpack.c.h.b16 %v601
    %v2137 = vunpack.c.l.b16 %v602
    %v2138 = vunpack.c.h.b16 %v602
    %v2139 = vunpack.c.l.b16 %v603
    %v2140 = vunpack.c.h.b16 %v603
    %v2141 = vunpack.c.l.b16 %v604
    %v2142 = vunpack.c.h.b16 %v604
    %v2143 = vunpack.c.l.b16 %v605
    %v2144 = vunpack.c.h.b16 %v605
    %v2145 = vunpack.c.l.b16 %v606
    %v2146 = vunpack.c.h.b16 %v606
    %v2147 = vunpack.c.l.b16 %v607
    %v2148 = vunpack.c.h.b16 %v607
    %v2149 = vunpack.c.l.b16 %v608
    %v2150 = vunpack.c.h.b16 %v608
    %v2151 = vunpack.c.l.b16 %v609
    %v2152 = vunpack.c.h.b16 %v609
    %v2153 = vunpack.c.l.b16 %v610
    %v2154 = vunpack.c.h.b16 %v610
    %v2155 = vunpack.c.l.b16 %v611
    %v2156 = vunpack.c.h.b16 %v611
    %v2157 = vunpack.c.l.b16 %v612
    %v2158 = vunpack.c.h.b16 %v612
    %v2159 = vunpack.c.l.b16 %v613
    %v2160 = vunpack.c.h.b16 %v613
    %v2161 = vunpack.c.l.b16 %v614
    %v2162 = vunpack.c.h.b16 %v614
    %v2163 = vunpack.c.l.b16 %v615
    %v2164 = vunpack.c.h.b16 %v615
    %v2165 = vunpack.c.l.b16 %v616
    %v2166 = vunpack.c.h.b16 %v616
    %v2167 = vunpack.c.l.b16 %v617
    %v2168 = vunpack.c.h.b16 %v617
    %v2169 = vunpack.c.l.b16 %v618
    %v2170 = vunpack.c.h.b16 %v618
    %v2171 = vunpack.c.l.b16 %v619
    %v2172 = vunpack.c.h.b16 %v619
    %v2173 = vunpack.c.l.b16 %v620
    %v2174 = vunpack.c.h.b16 %v620
    %v2175 = vpack.c.b16 %v1159, %v1151
    %v2176 = vpack.c.b16 %v1160, %v1152
    %v2177 = vpack.c.b16 %v1161, %v1153
    %v2178 = vpack.c.b16 %v1162, %v1154
    %v2179 = vpack.c.b16 %v1163, %v1155
    %v2180 = vpack.c.b16 %v1164, %v1156
    %v2181 = vpack.c.b16 %v1165, %v1157
    %v2182 = vpack.c.b16 %v1166, %v1158
    %v2183 = vpack.c.b16 %v1175, %v1167
    %v2184 = vpack.c.b16 %v1176, %v1168
    %v2185 = vpack.c.b16 %v1177, %v1169
    %v2186 = vpack.c.b16 %v1178, %v1170
    %v2187 = vpack.c.b16 %v1179, %v1171
    %v2188 = vpack.c.b16 %v1180, %v1172
    %v2189 = vpack.c.b16 %v1181, %v1173
    %v2190 = vpack.c.b16 %v1182, %v1174
    %v2191 = vpack.c.b16 %v1191, %v1183
    %v2192 = vpack.c.b16 %v1192, %v1184
    %v2193 = vpack.c.b16 %v1193, %v1185
    %v2194 = vpack.c.b16 %v1194, %v1186
    %v2195 = vpack.c.b16 %v1195, %v1187
    %v2196 = vpack.c.b16 %v1196, %v1188
    %v2197 = vpack.c.b16 %v1197, %v1189
    %v2198 = vpack.c.b16 %v1198, %v1190
    %v2199 = vpack.c.b16 %v1207, %v1199
    %v2200 = vpack.c.b16 %v1208, %v1200
    %v2201 = vpack.c.b16 %v1209, %v1201
    %v2202 = vpack.c.b16 %v1210, %v1202
    %v2203 = vpack.c.b16 %v1211, %v1203
    %v2204 = vpack.c.b16 %v1212, %v1204
    %v2205 = vpack.c.b16 %v1213, %v1205
    %v2206 = vpack.c.b16 %v1214, %v1206
    %v2207 = vpack.c.b16 %v1223, %v1215
    %v2208 = vpack.c.b16 %v1224, %v1216
    %v2209 = vpack.c.b16 %v1225, %v1217
    %v2210 = vpack.c.b16 %v1226, %v1218
    %v2211 = vpack.c.b16 %v1227, %v1219
    %v2212 = vpack.c.b16 %v1228, %v1220
    %v2213 = vpack.c.b16 %v1229, %v1221
    %v2214 = vpack.c.b16 %v1230, %v1222
    %v2215 = vpack.c.b16 %v1239, %v1231
    %v2216 = vpack.c.b16 %v1240, %v1232
    %v2217 = vpack.c.b16 %v1241, %v1233
    %v2218 = vpack.c.b16 %v1242, %v1234
    %v2219 = vpack.c.b16 %v1243, %v1235
    %v2220 = vpack.c.b16 %v1244, %v1236
    %v2221 = vpack.c.b16 %v1245, %v1237
    %v2222 = vpack.c.b16 %v1246, %v1238
    %v2223 = vpack.c.b16 %v1255, %v1247
    %v2224 = vpack.c.b16 %v1256, %v1248
    %v2225 = vpack.c.b16 %v1257, %v1249
    %v2226 = vpack.c.b16 %v1258, %v1250
    %v2227 = vpack.c.b16 %v1259, %v1251
    %v2228 = vpack.c.b16 %v1260, %v1252
    %v2229 = vpack.c.b16 %v1261, %v1253
    %v2230 = vpack.c.b16 %v1262, %v1254
    %v2231 = vpack.c.b16 %v1271, %v1263
    %v2232 = vpack.c.b16 %v1272, %v1264
    %v2233 = vpack.c.b16 %v1273, %v1265
    %v2234 = vpack.c.b16 %v1274, %v1266
    %v2235 = vpack.c.b16 %v1275, %v1267
    %v2236 = vpack.c.b16 %v1276, %v1268
    %v2237 = vpack.c.b16 %v1277, %v1269
    %v2238 = vpack.c.b16 %v1278, %v1270
    %v2239 = vpack.c.b16 %v1287, %v1279
    %v2240 = vpack.c.b16 %v1288, %v1280
    %v2241 = vpack.c.b16 %v1289, %v1281
    %v2242 = vpack.c.b16 %v1290, %v1282
    %v2243 = vpack.c.b16 %v1291, %v1283
    %v2244 = vpack.c.b16 %v1292, %v1284
    %v2245 = vpack.c.b16 %v1293, %v1285
    %v2246 = vpack.c.b16 %v1294, %v1286
    %v2247 = vpack.c.b16 %v1303, %v1295
    %v2248 = vpack.c.b16 %v1304, %v1296
    %v2249 = vpack.c.b16 %v1305, %v1297
    %v2250 = vpack.c.b16 %v1306, %v1298
    %v2251 = vpack.c.b16 %v1307, %v1299
    %v2252 = vpack.c.b16 %v1308, %v1300
    %v2253 = vpack.c.b16 %v1309, %v1301
    %v2254 = vpack.c.b16 %v1310, %v1302
    %v2255 = vpack.c.b16 %v1319, %v1311
    %v2256 = vpack.c.b16 %v1320, %v1312
    %v2257 = vpack.c.b16 %v1321, %v1313
    %v2258 = vpack.c.b16 %v1322, %v1314
    %v2259 = vpack.c.b16 %v1323, %v1315
    %v2260 = vpack.c.b16 %v1324, %v1316
    %v2261 = vpack.c.b16 %v1325, %v1317
    %v2262 = vpack.c.b16 %v1326, %v1318
    %v2263 = vpack.c.b16 %v1335, %v1327
    %v2264 = vpack.c.b16 %v1336, %v1328
    %v2265 = vpack.c.b16 %v1337, %v1329
    %v2266 = vpack.c.b16 %v1338, %v1330
    %v2267 = vpack.c.b16 %v1339, %v1331
    %v2268 = vpack.c.b16 %v1340, %v1332
    %v2269 = vpack.c.b16 %v1341, %v1333
    %v2270 = vpack.c.b16 %v1342, %v1334
    %v2271 = vpack.c.b16 %v1351, %v1343
    %v2272 = vpack.c.b16 %v1352, %v1344
    %v2273 = vpack.c.b16 %v1353, %v1345
    %v2274 = vpack.c.b16 %v1354, %v1346
    %v2275 = vpack.c.b16 %v1355, %v1347
    %v2276 = vpack.c.b16 %v1356, %v1348
    %v2277 = vpack.c.b16 %v1357, %v1349
    %v2278 = vpack.c.b16 %v1358, %v1350
    %v2279 = vpack.c.b16 %v1367, %v1359
    %v2280 = vpack.c.b16 %v1368, %v1360
    %v2281 = vpack.c.b16 %v1369, %v1361
    %v2282 = vpack.c.b16 %v1370, %v1362
    %v2283 = vpack.c.b16 %v1371, %v1363
    %v2284 = vpack.c.b16 %v1372, %v1364
    %v2285 = vpack.c.b16 %v1373, %v1365
    %v2286 = vpack.c.b16 %v1374, %v1366
    %v2287 = vpack.c.b16 %v1383, %v1375
    %v2288 = vpack.c.b16 %v1384, %v1376
    %v2289 = vpack.c.b16 %v1385, %v1377
    %v2290 = vpack.c.b16 %v1386, %v1378
    %v2291 = vpack.c.b16 %v1387, %v1379
    %v2292 = vpack.c.b16 %v1388, %v1380
    %v2293 = vpack.c.b16 %v1389, %v1381
    %v2294 = vpack.c.b16 %v1390, %v1382
    %v2295 = vpack.c.b16 %v1399, %v1391
    %v2296 = vpack.c.b16 %v1400, %v1392
    %v2297 = vpack.c.b16 %v1401, %v1393
    %v2298 = vpack.c.b16 %v1402, %v1394
    %v2299 = vpack.c.b16 %v1403, %v1395
    %v2300 = vpack.c.b16 %v1404, %v1396
    %v2301 = vpack.c.b16 %v1405, %v1397
    %v2302 = vpack.c.b16 %v1406, %v1398
    %v2303 = vpack.c.b16 %v1415, %v1407
    %v2304 = vpack.c.b16 %v1416, %v1408
    %v2305 = vpack.c.b16 %v1417, %v1409
    %v2306 = vpack.c.b16 %v1418, %v1410
    %v2307 = vpack.c.b16 %v1419, %v1411
    %v2308 = vpack.c.b16 %v1420, %v1412
    %v2309 = vpack.c.b16 %v1421, %v1413
    %v2310 = vpack.c.b16 %v1422, %v1414
    %v2311 = vpack.c.b16 %v1431, %v1423
    %v2312 = vpack.c.b16 %v1432, %v1424
    %v2313 = vpack.c.b16 %v1433, %v1425
    %v2314 = vpack.c.b16 %v1434, %v1426
    %v2315 = vpack.c.b16 %v1435, %v1427
    %v2316 = vpack.c.b16 %v1436, %v1428
    %v2317 = vpack.c.b16 %v1437, %v1429
    %v2318 = vpack.c.b16 %v1438, %v1430
    %v2319 = vpack.c.b16 %v1447, %v1439
    %v2320 = vpack.c.b16 %v1448, %v1440
    %v2321 = vpack.c.b16 %v1449, %v1441
    %v2322 = vpack.c.b16 %v1450, %v1442
    %v2323 = vpack.c.b16 %v1451, %v1443
    %v2324 = vpack.c.b16 %v1452, %v1444
    %v2325 = vpack.c.b16 %v1453, %v1445
    %v2326 = vpack.c.b16 %v1454, %v1446
    %v2327 = vpack.c.b16 %v1463, %v1455
    %v2328 = vpack.c.b16 %v1464, %v1456
    %v2329 = vpack.c.b16 %v1465, %v1457
    %v2330 = vpack.c.b16 %v1466, %v1458
    %v2331 = vpack.c.b16 %v1467, %v1459
    %v2332 = vpack.c.b16 %v1468, %v1460
    %v2333 = vpack.c.b16 %v1469, %v1461
    %v2334 = vpack.c.b16 %v1470, %v1462
    %v2335 = vpack.c.b16 %v1479, %v1471
    %v2336 = vpack.c.b16 %v1480, %v1472
    %v2337 = vpack.c.b16 %v1481, %v1473
    %v2338 = vpack.c.b16 %v1482, %v1474
    %v2339 = vpack.c.b16 %v1483, %v1475
    %v2340 = vpack.c.b16 %v1484, %v1476
    %v2341 = vpack.c.b16 %v1485, %v1477
    %v2342 = vpack.c.b16 %v1486, %v1478
    %v2343 = vpack.c.b16 %v1495, %v1487
    %v2344 = vpack.c.b16 %v1496, %v1488
    %v2345 = vpack.c.b16 %v1497, %v1489
    %v2346 = vpack.c.b16 %v1498, %v1490
    %v2347 = vpack.c.b16 %v1499, %v1491
    %v2348 = vpack.c.b16 %v1500, %v1492
    %v2349 = vpack.c.b16 %v1501, %v1493
    %v2350 = vpack.c.b16 %v1502, %v1494
    %v2351 = vpack.c.b16 %v1511, %v1503
    %v2352 = vpack.c.b16 %v1512, %v1504
    %v2353 = vpack.c.b16 %v1513, %v1505
    %v2354 = vpack.c.b16 %v1514, %v1506
    %v2355 = vpack.c.b16 %v1515, %v1507
    %v2356 = vpack.c.b16 %v1516, %v1508
    %v2357 = vpack.c.b16 %v1517, %v1509
    %v2358 = vpack.c.b16 %v1518, %v1510
    %v2359 = vpack.c.b16 %v1527, %v1519
    %v2360 = vpack.c.b16 %v1528, %v1520
    %v2361 = vpack.c.b16 %v1529, %v1521
    %v2362 = vpack.c.b16 %v1530, %v1522
    %v2363 = vpack.c.b16 %v1531, %v1523
    %v2364 = vpack.c.b16 %v1532, %v1524
    %v2365 = vpack.c.b16 %v1533, %v1525
    %v2366 = vpack.c.b16 %v1534, %v1526
    %v2367 = vpack.c.b16 %v1543, %v1535
    %v2368 = vpack.c.b16 %v1544, %v1536
    %v2369 = vpack.c.b16 %v1545, %v1537
    %v2370 = vpack.c.b16 %v1546, %v1538
    %v2371 = vpack.c.b16 %v1547, %v1539
    %v2372 = vpack.c.b16 %v1548, %v1540
    %v2373 = vpack.c.b16 %v1549, %v1541
    %v2374 = vpack.c.b16 %v1550, %v1542
    %v2375 = vpack.c.b16 %v1559, %v1551
    %v2376 = vpack.c.b16 %v1560, %v1552
    %v2377 = vpack.c.b16 %v1561, %v1553
    %v2378 = vpack.c.b16 %v1562, %v1554
    %v2379 = vpack.c.b16 %v1563, %v1555
    %v2380 = vpack.c.b16 %v1564, %v1556
    %v2381 = vpack.c.b16 %v1565, %v1557
    %v2382 = vpack.c.b16 %v1566, %v1558
    %v2383 = vpack.c.b16 %v1575, %v1567
    %v2384 = vpack.c.b16 %v1576, %v1568
    %v2385 = vpack.c.b16 %v1577, %v1569
    %v2386 = vpack.c.b16 %v1578, %v1570
    %v2387 = vpack.c.b16 %v1579, %v1571
    %v2388 = vpack.c.b16 %v1580, %v1572
    %v2389 = vpack.c.b16 %v1581, %v1573
    %v2390 = vpack.c.b16 %v1582, %v1574
    %v2391 = vpack.c.b16 %v1591, %v1583
    %v2392 = vpack.c.b16 %v1592, %v1584
    %v2393 = vpack.c.b16 %v1593, %v1585
    %v2394 = vpack.c.b16 %v1594, %v1586
    %v2395 = vpack.c.b16 %v1595, %v1587
    %v2396 = vpack.c.b16 %v1596, %v1588
    %v2397 = vpack.c.b16 %v1597, %v1589
    %v2398 = vpack.c.b16 %v1598, %v1590
    %v2399 = vpack.c.b16 %v1607, %v1599
    %v2400 = vpack.c.b16 %v1608, %v1600
    %v2401 = vpack.c.b16 %v1609, %v1601
    %v2402 = vpack.c.b16 %v1610, %v1602
    %v2403 = vpack.c.b16 %v1611, %v1603
    %v2404 = vpack.c.b16 %v1612, %v1604
    %v2405 = vpack.c.b16 %v1613, %v1605
    %v2406 = vpack.c.b16 %v1614, %v1606
    %v2407 = vpack.c.b16 %v1623, %v1615
    %v2408 = vpack.c.b16 %v1624, %v1616
    %v2409 = vpack.c.b16 %v1625, %v1617
    %v2410 = vpack.c.b16 %v1626, %v1618
    %v2411 = vpack.c.b16 %v1627, %v1619
    %v2412 = vpack.c.b16 %v1628, %v1620
    %v2413 = vpack.c.b16 %v1629, %v1621
    %v2414 = vpack.c.b16 %v1630, %v1622
    %v2415 = vpack.c.b16 %v1639, %v1631
    %v2416 = vpack.c.b16 %v1640, %v1632
    %v2417 = vpack.c.b16 %v1641, %v1633
    %v2418 = vpack.c.b16 %v1642, %v1634
    %v2419 = vpack.c.b16 %v1643, %v1635
    %v2420 = vpack.c.b16 %v1644, %v1636
    %v2421 = vpack.c.b16 %v1645, %v1637
    %v2422 = vpack.c.b16 %v1646, %v1638
    %v2423 = vpack.c.b16 %v1655, %v1647
    %v2424 = vpack.c.b16 %v1656, %v1648
    %v2425 = vpack.c.b16 %v1657, %v1649
    %v2426 = vpack.c.b16 %v1658, %v1650
    %v2427 = vpack.c.b16 %v1659, %v1651
    %v2428 = vpack.c.b16 %v1660, %v1652
    %v2429 = vpack.c.b16 %v1661, %v1653
    %v2430 = vpack.c.b16 %v1662, %v1654
    %v2431 = vpack.c.b16 %v1671, %v1663
    %v2432 = vpack.c.b16 %v1672, %v1664
    %v2433 = vpack.c.b16 %v1673, %v1665
    %v2434 = vpack.c.b16 %v1674, %v1666
    %v2435 = vpack.c.b16 %v1675, %v1667
    %v2436 = vpack.c.b16 %v1676, %v1668
    %v2437 = vpack.c.b16 %v1677, %v1669
    %v2438 = vpack.c.b16 %v1678, %v1670
    %v2439 = vpack.c.b16 %v1687, %v1679
    %v2440 = vpack.c.b16 %v1688, %v1680
    %v2441 = vpack.c.b16 %v1689, %v1681
    %v2442 = vpack.c.b16 %v1690, %v1682
    %v2443 = vpack.c.b16 %v1691, %v1683
    %v2444 = vpack.c.b16 %v1692, %v1684
    %v2445 = vpack.c.b16 %v1693, %v1685
    %v2446 = vpack.c.b16 %v1694, %v1686
    %v2447 = vpack.c.b16 %v1703, %v1695
    %v2448 = vpack.c.b16 %v1704, %v1696
    %v2449 = vpack.c.b16 %v1705, %v1697
    %v2450 = vpack.c.b16 %v1706, %v1698
    %v2451 = vpack.c.b16 %v1707, %v1699
    %v2452 = vpack.c.b16 %v1708, %v1700
    %v2453 = vpack.c.b16 %v1709, %v1701
    %v2454 = vpack.c.b16 %v1710, %v1702
    %v2455 = vpack.c.b16 %v1719, %v1711
    %v2456 = vpack.c.b16 %v1720, %v1712
    %v2457 = vpack.c.b16 %v1721, %v1713
    %v2458 = vpack.c.b16 %v1722, %v1714
    %v2459 = vpack.c.b16 %v1723, %v1715
    %v2460 = vpack.c.b16 %v1724, %v1716
    %v2461 = vpack.c.b16 %v1725, %v1717
    %v2462 = vpack.c.b16 %v1726, %v1718
    %v2463 = vpack.c.b16 %v1735, %v1727
    %v2464 = vpack.c.b16 %v1736, %v1728
    %v2465 = vpack.c.b16 %v1737, %v1729
    %v2466 = vpack.c.b16 %v1738, %v1730
    %v2467 = vpack.c.b16 %v1739, %v1731
    %v2468 = vpack.c.b16 %v1740, %v1732
    %v2469 = vpack.c.b16 %v1741, %v1733
    %v2470 = vpack.c.b16 %v1742, %v1734
    %v2471 = vpack.c.b16 %v1751, %v1743
    %v2472 = vpack.c.b16 %v1752, %v1744
    %v2473 = vpack.c.b16 %v1753, %v1745
    %v2474 = vpack.c.b16 %v1754, %v1746
    %v2475 = vpack.c.b16 %v1755, %v1747
    %v2476 = vpack.c.b16 %v1756, %v1748
    %v2477 = vpack.c.b16 %v1757, %v1749
    %v2478 = vpack.c.b16 %v1758, %v1750
    %v2479 = vpack.c.b16 %v1767, %v1759
    %v2480 = vpack.c.b16 %v1768, %v1760
    %v2481 = vpack.c.b16 %v1769, %v1761
    %v2482 = vpack.c.b16 %v1770, %v1762
    %v2483 = vpack.c.b16 %v1771, %v1763
    %v2484 = vpack.c.b16 %v1772, %v1764
    %v2485 = vpack.c.b16 %v1773, %v1765
    %v2486 = vpack.c.b16 %v1774, %v1766
    %v2487 = vpack.c.b16 %v1783, %v1775
    %v2488 = vpack.c.b16 %v1784, %v1776
    %v2489 = vpack.c.b16 %v1785, %v1777
    %v2490 = vpack.c.b16 %v1786, %v1778
    %v2491 = vpack.c.b16 %v1787, %v1779
    %v2492 = vpack.c.b16 %v1788, %v1780
    %v2493 = vpack.c.b16 %v1789, %v1781
    %v2494 = vpack.c.b16 %v1790, %v1782
    %v2495 = vpack.c.b16 %v1799, %v1791
    %v2496 = vpack.c.b16 %v1800, %v1792
    %v2497 = vpack.c.b16 %v1801, %v1793
    %v2498 = vpack.c.b16 %v1802, %v1794
    %v2499 = vpack.c.b16 %v1803, %v1795
    %v2500 = vpack.c.b16 %v1804, %v1796
    %v2501 = vpack.c.b16 %v1805, %v1797
    %v2502 = vpack.c.b16 %v1806, %v1798
    %v2503 = vpack.c.b16 %v1815, %v1807
    %v2504 = vpack.c.b16 %v1816, %v1808
    %v2505 = vpack.c.b16 %v1817, %v1809
    %v2506 = vpack.c.b16 %v1818, %v1810
    %v2507 = vpack.c.b16 %v1819, %v1811
    %v2508 = vpack.c.b16 %v1820, %v1812
    %v2509 = vpack.c.b16 %v1821, %v1813
    %v2510 = vpack.c.b16 %v1822, %v1814
    %v2511 = vpack.c.b16 %v1831, %v1823
    %v2512 = vpack.c.b16 %v1832, %v1824
    %v2513 = vpack.c.b16 %v1833, %v1825
    %v2514 = vpack.c.b16 %v1834, %v1826
    %v2515 = vpack.c.b16 %v1835, %v1827
    %v2516 = vpack.c.b16 %v1836, %v1828
    %v2517 = vpack.c.b16 %v1837, %v1829
    %v2518 = vpack.c.b16 %v1838, %v1830
    %v2519 = vpack.c.b16 %v1847, %v1839
    %v2520 = vpack.c.b16 %v1848, %v1840
    %v2521 = vpack.c.b16 %v1849, %v1841
    %v2522 = vpack.c.b16 %v1850, %v1842
    %v2523 = vpack.c.b16 %v1851, %v1843
    %v2524 = vpack.c.b16 %v1852, %v1844
    %v2525 = vpack.c.b16 %v1853, %v1845
    %v2526 = vpack.c.b16 %v1854, %v1846
    %v2527 = vpack.c.b16 %v1863, %v1855
    %v2528 = vpack.c.b16 %v1864, %v1856
    %v2529 = vpack.c.b16 %v1865, %v1857
    %v2530 = vpack.c.b16 %v1866, %v1858
    %v2531 = vpack.c.b16 %v1867, %v1859
    %v2532 = vpack.c.b16 %v1868, %v1860
    %v2533 = vpack.c.b16 %v1869, %v1861
    %v2534 = vpack.c.b16 %v1870, %v1862
    %v2535 = vpack.c.b16 %v1879, %v1871
    %v2536 = vpack.c.b16 %v1880, %v1872
    %v2537 = vpack.c.b16 %v1881, %v1873
    %v2538 = vpack.c.b16 %v1882, %v1874
    %v2539 = vpack.c.b16 %v1883, %v1875
    %v2540 = vpack.c.b16 %v1884, %v1876
    %v2541 = vpack.c.b16 %v1885, %v1877
    %v2542 = vpack.c.b16 %v1886, %v1878
    %v2543 = vpack.c.b16 %v1895, %v1887
    %v2544 = vpack.c.b16 %v1896, %v1888
    %v2545 = vpack.c.b16 %v1897, %v1889
    %v2546 = vpack.c.b16 %v1898, %v1890
    %v2547 = vpack.c.b16 %v1899, %v1891
    %v2548 = vpack.c.b16 %v1900, %v1892
    %v2549 = vpack.c.b16 %v1901, %v1893
    %v2550 = vpack.c.b16 %v1902, %v1894
    %v2551 = vpack.c.b16 %v1911, %v1903
    %v2552 = vpack.c.b16 %v1912, %v1904
    %v2553 = vpack.c.b16 %v1913, %v1905
    %v2554 = vpack.c.b16 %v1914, %v1906
    %v2555 = vpack.c.b16 %v1915, %v1907
    %v2556 = vpack.c.b16 %v1916, %v1908
    %v2557 = vpack.c.b16 %v1917, %v1909
    %v2558 = vpack.c.b16 %v1918, %v1910
    %v2559 = vpack.c.b16 %v1927, %v1919
    %v2560 = vpack.c.b16 %v1928, %v1920
    %v2561 = vpack.c.b16 %v1929, %v1921
    %v2562 = vpack.c.b16 %v1930, %v1922
    %v2563 = vpack.c.b16 %v1931, %v1923
    %v2564 = vpack.c.b16 %v1932, %v1924
    %v2565 = vpack.c.b16 %v1933, %v1925
    %v2566 = vpack.c.b16 %v1934, %v1926
    %v2567 = vpack.c.b16 %v1943, %v1935
    %v2568 = vpack.c.b16 %v1944, %v1936
    %v2569 = vpack.c.b16 %v1945, %v1937
    %v2570 = vpack.c.b16 %v1946, %v1938
    %v2571 = vpack.c.b16 %v1947, %v1939
    %v2572 = vpack.c.b16 %v1948, %v1940
    %v2573 = vpack.c.b16 %v1949, %v1941
    %v2574 = vpack.c.b16 %v1950, %v1942
    %v2575 = vpack.c.b16 %v1959, %v1951
    %v2576 = vpack.c.b16 %v1960, %v1952
    %v2577 = vpack.c.b16 %v1961, %v1953
    %v2578 = vpack.c.b16 %v1962, %v1954
    %v2579 = vpack.c.b16 %v1963, %v1955
    %v2580 = vpack.c.b16 %v1964, %v1956
    %v2581 = vpack.c.b16 %v1965, %v1957
    %v2582 = vpack.c.b16 %v1966, %v1958
    %v2583 = vpack.c.b16 %v1975, %v1967
    %v2584 = vpack.c.b16 %v1976, %v1968
    %v2585 = vpack.c.b16 %v1977, %v1969
    %v2586 = vpack.c.b16 %v1978, %v1970
    %v2587 = vpack.c.b16 %v1979, %v1971
    %v2588 = vpack.c.b16 %v1980, %v1972
    %v2589 = vpack.c.b16 %v1981, %v1973
    %v2590 = vpack.c.b16 %v1982, %v1974
    %v2591 = vpack.c.b16 %v1991, %v1983
    %v2592 = vpack.c.b16 %v1992, %v1984
    %v2593 = vpack.c.b16 %v1993, %v1985
    %v2594 = vpack.c.b16 %v1994, %v1986
    %v2595 = vpack.c.b16 %v1995, %v1987
    %v2596 = vpack.c.b16 %v1996, %v1988
    %v2597 = vpack.c.b16 %v1997, %v1989
    %v2598 = vpack.c.b16 %v1998, %v1990
    %v2599 = vpack.c.b16 %v2007, %v1999
    %v2600 = vpack.c.b16 %v2008, %v2000
    %v2601 = vpack.c.b16 %v2009, %v2001
    %v2602 = vpack.c.b16 %v2010, %v2002
    %v2603 = vpack.c.b16 %v2011, %v2003
    %v2604 = vpack.c.b16 %v2012, %v2004
    %v2605 = vpack.c.b16 %v2013, %v2005
    %v2606 = vpack.c.b16 %v2014, %v2006
    %v2607 = vpack.c.b16 %v2023, %v2015
    %v2608 = vpack.c.b16 %v2024, %v2016
    %v2609 = vpack.c.b16 %v2025, %v2017
    %v2610 = vpack.c.b16 %v2026, %v2018
    %v2611 = vpack.c.b16 %v2027, %v2019
    %v2612 = vpack.c.b16 %v2028, %v2020
    %v2613 = vpack.c.b16 %v2029, %v2021
    %v2614 = vpack.c.b16 %v2030, %v2022
    %v2615 = vpack.c.b16 %v2039, %v2031
    %v2616 = vpack.c.b16 %v2040, %v2032
    %v2617 = vpack.c.b16 %v2041, %v2033
    %v2618 = vpack.c.b16 %v2042, %v2034
    %v2619 = vpack.c.b16 %v2043, %v2035
    %v2620 = vpack.c.b16 %v2044, %v2036
    %v2621 = vpack.c.b16 %v2045, %v2037
    %v2622 = vpack.c.b16 %v2046, %v2038
    %v2623 = vpack.c.b16 %v2055, %v2047
    %v2624 = vpack.c.b16 %v2056, %v2048
    %v2625 = vpack.c.b16 %v2057, %v2049
    %v2626 = vpack.c.b16 %v2058, %v2050
    %v2627 = vpack.c.b16 %v2059, %v2051
    %v2628 = vpack.c.b16 %v2060, %v2052
    %v2629 = vpack.c.b16 %v2061, %v2053
    %v2630 = vpack.c.b16 %v2062, %v2054
    %v2631 = vpack.c.b16 %v2071, %v2063
    %v2632 = vpack.c.b16 %v2072, %v2064
    %v2633 = vpack.c.b16 %v2073, %v2065
    %v2634 = vpack.c.b16 %v2074, %v2066
    %v2635 = vpack.c.b16 %v2075, %v2067
    %v2636 = vpack.c.b16 %v2076, %v2068
    %v2637 = vpack.c.b16 %v2077, %v2069
    %v2638 = vpack.c.b16 %v2078, %v2070
    %v2639 = vpack.c.b16 %v2087, %v2079
    %v2640 = vpack.c.b16 %v2088, %v2080
    %v2641 = vpack.c.b16 %v2089, %v2081
    %v2642 = vpack.c.b16 %v2090, %v2082
    %v2643 = vpack.c.b16 %v2091, %v2083
    %v2644 = vpack.c.b16 %v2092, %v2084
    %v2645 = vpack.c.b16 %v2093, %v2085
    %v2646 = vpack.c.b16 %v2094, %v2086
    %v2647 = vpack.c.b16 %v2103, %v2095
    %v2648 = vpack.c.b16 %v2104, %v2096
    %v2649 = vpack.c.b16 %v2105, %v2097
    %v2650 = vpack.c.b16 %v2106, %v2098
    %v2651 = vpack.c.b16 %v2107, %v2099
    %v2652 = vpack.c.b16 %v2108, %v2100
    %v2653 = vpack.c.b16 %v2109, %v2101
    %v2654 = vpack.c.b16 %v2110, %v2102
    %v2655 = vpack.c.b16 %v2119, %v2111
    %v2656 = vpack.c.b16 %v2120, %v2112
    %v2657 = vpack.c.b16 %v2121, %v2113
    %v2658 = vpack.c.b16 %v2122, %v2114
    %v2659 = vpack.c.b16 %v2123, %v2115
    %v2660 = vpack.c.b16 %v2124, %v2116
    %v2661 = vpack.c.b16 %v2125, %v2117
    %v2662 = vpack.c.b16 %v2126, %v2118
    %v2663 = vpack.c.b16 %v2135, %v2127
    %v2664 = vpack.c.b16 %v2136, %v2128
    %v2665 = vpack.c.b16 %v2137, %v2129
    %v2666 = vpack.c.b16 %v2138, %v2130
    %v2667 = vpack.c.b16 %v2139, %v2131
    %v2668 = vpack.c.b16 %v2140, %v2132
    %v2669 = vpack.c.b16 %v2141, %v2133
    %v2670 = vpack.c.b16 %v2142, %v2134
    %v2671 = vpack.c.b16 %v2151, %v2143
    %v2672 = vpack.c.b16 %v2152, %v2144
    %v2673 = vpack.c.b16 %v2153, %v2145
    %v2674 = vpack.c.b16 %v2154, %v2146
    %v2675 = vpack.c.b16 %v2155, %v2147
    %v2676 = vpack.c.b16 %v2156, %v2148
    %v2677 = vpack.c.b16 %v2157, %v2149
    %v2678 = vpack.c.b16 %v2158, %v2150
    %v2679 = vpack.c.b16 %v2167, %v2159
    %v2680 = vpack.c.b16 %v2168, %v2160
    %v2681 = vpack.c.b16 %v2169, %v2161
    %v2682 = vpack.c.b16 %v2170, %v2162
    %v2683 = vpack.c.b16 %v2171, %v2163
    %v2684 = vpack.c.b16 %v2172, %v2164
    %v2685 = vpack.c.b16 %v2173, %v2165
    %v2686 = vpack.c.b16 %v2174, %v2166
    %3199 = vmatpush.bf16.msra.mxu0 %v2231
    %3200 = vmatpush.bf16.msra.mxu0 %v2223
    %3201 = vmatpush.bf16.msra.mxu0 %v2215
    %3202 = vmatpush.bf16.msra.mxu0 %v2207
    %3203 = vmatpush.bf16.msra.mxu0 %v2199
    %3204 = vmatpush.bf16.msra.mxu0 %v2191
    %3205 = vmatpush.bf16.msra.mxu0 %v2183
    %3206 = vmatpush.bf16.msra.mxu0 %v2175
    %3207 = vmatmul.bf16.gmra.mxu0 %v101
    %v3208 = vpop.f32.mrf.mxu0
    %v3209 = vadd.f32 %v623, %v3208
    %v3210 = vpop.f32.mrf.mxu0
    %3211 = vdwg.mxu0
    %3212 = vmatpush.bf16.msra.mxu0 %v2295
    %3213 = vmatpush.bf16.msra.mxu0 %v2287
    %3214 = vmatpush.bf16.msra.mxu0 %v2279
    %3215 = vmatpush.bf16.msra.mxu0 %v2271
    %3216 = vmatpush.bf16.msra.mxu0 %v2263
    %3217 = vmatpush.bf16.msra.mxu0 %v2255
    %3218 = vmatpush.bf16.msra.mxu0 %v2247
    %3219 = vmatpush.bf16.msra.mxu0 %v2239
    %3220 = vmatmul.bf16.gmra.mxu0 %v102
    %v3221 = vpop.f32.mrf.mxu0
    %v3222 = vadd.f32 %v3209, %v3221
    %v3223 = vpop.f32.mrf.mxu0
    %3224 = vdwg.mxu0
    %3225 = vmatpush.bf16.msra.mxu0 %v2359
    %3226 = vmatpush.bf16.msra.mxu0 %v2351
    %3227 = vmatpush.bf16.msra.mxu0 %v2343
    %3228 = vmatpush.bf16.msra.mxu0 %v2335
    %3229 = vmatpush.bf16.msra.mxu0 %v2327
    %3230 = vmatpush.bf16.msra.mxu0 %v2319
    %3231 = vmatpush.bf16.msra.mxu0 %v2311
    %3232 = vmatpush.bf16.msra.mxu0 %v2303
    %3233 = vmatmul.bf16.gmra.mxu0 %v103
    %v3234 = vpop.f32.mrf.mxu0
    %v3235 = vadd.f32 %v3222, %v3234
    %v3236 = vpop.f32.mrf.mxu0
    %3237 = vdwg.mxu0
    %3238 = vmatpush.bf16.msra.mxu0 %v2423
    %3239 = vmatpush.bf16.msra.mxu0 %v2415
    %3240 = vmatpush.bf16.msra.mxu0 %v2407
    %3241 = vmatpush.bf16.msra.mxu0 %v2399
    %3242 = vmatpush.bf16.msra.mxu0 %v2391
    %3243 = vmatpush.bf16.msra.mxu0 %v2383
    %3244 = vmatpush.bf16.msra.mxu0 %v2375
    %3245 = vmatpush.bf16.msra.mxu0 %v2367
    %3246 = vmatmul.bf16.gmra.mxu0 %v104
    %v3247 = vpop.f32.mrf.mxu0
    %v3248 = vadd.f32 %v3235, %v3247
    %v3249 = vpop.f32.mrf.mxu0
    %3250 = vdwg.mxu0
    %3251 = vmatpush.bf16.msra.mxu0 %v2487
    %3252 = vmatpush.bf16.msra.mxu0 %v2479
    %3253 = vmatpush.bf16.msra.mxu0 %v2471
    %3254 = vmatpush.bf16.msra.mxu0 %v2463
    %3255 = vmatpush.bf16.msra.mxu0 %v2455
    %3256 = vmatpush.bf16.msra.mxu0 %v2447
    %3257 = vmatpush.bf16.msra.mxu0 %v2439
    %3258 = vmatpush.bf16.msra.mxu0 %v2431
    %3259 = vmatmul.bf16.gmra.mxu0 %v105
    %v3260 = vpop.f32.mrf.mxu0
    %v3261 = vadd.f32 %v3248, %v3260
    %v3262 = vpop.f32.mrf.mxu0
    %3263 = vdwg.mxu0
    %3264 = vmatpush.bf16.msra.mxu0 %v2551
    %3265 = vmatpush.bf16.msra.mxu0 %v2543
    %3266 = vmatpush.bf16.msra.mxu0 %v2535
    %3267 = vmatpush.bf16.msra.mxu0 %v2527
    %3268 = vmatpush.bf16.msra.mxu0 %v2519
    %3269 = vmatpush.bf16.msra.mxu0 %v2511
    %3270 = vmatpush.bf16.msra.mxu0 %v2503
    %3271 = vmatpush.bf16.msra.mxu0 %v2495
    %3272 = vmatmul.bf16.gmra.mxu0 %v106
    %v3273 = vpop.f32.mrf.mxu0
    %v3274 = vadd.f32 %v3261, %v3273
    %v3275 = vpop.f32.mrf.mxu0
    %3276 = vdwg.mxu0
    %3277 = vmatpush.bf16.msra.mxu0 %v2615
    %3278 = vmatpush.bf16.msra.mxu0 %v2607
    %3279 = vmatpush.bf16.msra.mxu0 %v2599
    %3280 = vmatpush.bf16.msra.mxu0 %v2591
    %3281 = vmatpush.bf16.msra.mxu0 %v2583
    %3282 = vmatpush.bf16.msra.mxu0 %v2575
    %3283 = vmatpush.bf16.msra.mxu0 %v2567
    %3284 = vmatpush.bf16.msra.mxu0 %v2559
    %3285 = vmatmul.bf16.gmra.mxu0 %v107
    %v3286 = vpop.f32.mrf.mxu0
    %v3287 = vadd.f32 %v3274, %v3286
    %v3288 = vpop.f32.mrf.mxu0
    %3289 = vdwg.mxu0
    %3290 = vmatpush.bf16.msra.mxu0 %v2679
    %3291 = vmatpush.bf16.msra.mxu0 %v2671
    %3292 = vmatpush.bf16.msra.mxu0 %v2663
    %3293 = vmatpush.bf16.msra.mxu0 %v2655
    %3294 = vmatpush.bf16.msra.mxu0 %v2647
    %3295 = vmatpush.bf16.msra.mxu0 %v2639
    %3296 = vmatpush.bf16.msra.mxu0 %v2631
    %3297 = vmatpush.bf16.msra.mxu0 %v2623
    %3298 = vmatmul.bf16.gmra.mxu0 %v108
    %v3299 = vpop.f32.mrf.mxu0
    %v3300 = vadd.f32 %v3287, %v3299
    %v3301 = vpop.f32.mrf.mxu0
    %3302 = vdwg.mxu0
    %3303 = vmatpush.bf16.msra.mxu0 %v2232
    %3304 = vmatpush.bf16.msra.mxu0 %v2224
    %3305 = vmatpush.bf16.msra.mxu0 %v2216
    %3306 = vmatpush.bf16.msra.mxu0 %v2208
    %3307 = vmatpush.bf16.msra.mxu0 %v2200
    %3308 = vmatpush.bf16.msra.mxu0 %v2192
    %3309 = vmatpush.bf16.msra.mxu0 %v2184
    %3310 = vmatpush.bf16.msra.mxu0 %v2176
    %3311 = vmatmul.bf16.gmra.mxu0 %v101
    %v3312 = vpop.f32.mrf.mxu0
    %v3313 = vadd.f32 %v624, %v3312
    %v3314 = vpop.f32.mrf.mxu0
    %3315 = vdwg.mxu0
    %3316 = vmatpush.bf16.msra.mxu0 %v2296
    %3317 = vmatpush.bf16.msra.mxu0 %v2288
    %3318 = vmatpush.bf16.msra.mxu0 %v2280
    %3319 = vmatpush.bf16.msra.mxu0 %v2272
    %3320 = vmatpush.bf16.msra.mxu0 %v2264
    %3321 = vmatpush.bf16.msra.mxu0 %v2256
    %3322 = vmatpush.bf16.msra.mxu0 %v2248
    %3323 = vmatpush.bf16.msra.mxu0 %v2240
    %3324 = vmatmul.bf16.gmra.mxu0 %v102
    %v3325 = vpop.f32.mrf.mxu0
    %v3326 = vadd.f32 %v3313, %v3325
    %v3327 = vpop.f32.mrf.mxu0
    %3328 = vdwg.mxu0
    %3329 = vmatpush.bf16.msra.mxu0 %v2360
    %3330 = vmatpush.bf16.msra.mxu0 %v2352
    %3331 = vmatpush.bf16.msra.mxu0 %v2344
    %3332 = vmatpush.bf16.msra.mxu0 %v2336
    %3333 = vmatpush.bf16.msra.mxu0 %v2328
    %3334 = vmatpush.bf16.msra.mxu0 %v2320
    %3335 = vmatpush.bf16.msra.mxu0 %v2312
    %3336 = vmatpush.bf16.msra.mxu0 %v2304
    %3337 = vmatmul.bf16.gmra.mxu0 %v103
    %v3338 = vpop.f32.mrf.mxu0
    %v3339 = vadd.f32 %v3326, %v3338
    %v3340 = vpop.f32.mrf.mxu0
    %3341 = vdwg.mxu0
    %3342 = vmatpush.bf16.msra.mxu0 %v2424
    %3343 = vmatpush.bf16.msra.mxu0 %v2416
    %3344 = vmatpush.bf16.msra.mxu0 %v2408
    %3345 = vmatpush.bf16.msra.mxu0 %v2400
    %3346 = vmatpush.bf16.msra.mxu0 %v2392
    %3347 = vmatpush.bf16.msra.mxu0 %v2384
    %3348 = vmatpush.bf16.msra.mxu0 %v2376
    %3349 = vmatpush.bf16.msra.mxu0 %v2368
    %3350 = vmatmul.bf16.gmra.mxu0 %v104
    %v3351 = vpop.f32.mrf.mxu0
    %v3352 = vadd.f32 %v3339, %v3351
    %v3353 = vpop.f32.mrf.mxu0
    %3354 = vdwg.mxu0
    %3355 = vmatpush.bf16.msra.mxu0 %v2488
    %3356 = vmatpush.bf16.msra.mxu0 %v2480
    %3357 = vmatpush.bf16.msra.mxu0 %v2472
    %3358 = vmatpush.bf16.msra.mxu0 %v2464
    %3359 = vmatpush.bf16.msra.mxu0 %v2456
    %3360 = vmatpush.bf16.msra.mxu0 %v2448
    %3361 = vmatpush.bf16.msra.mxu0 %v2440
    %3362 = vmatpush.bf16.msra.mxu0 %v2432
    %3363 = vmatmul.bf16.gmra.mxu0 %v105
    %v3364 = vpop.f32.mrf.mxu0
    %v3365 = vadd.f32 %v3352, %v3364
    %v3366 = vpop.f32.mrf.mxu0
    %3367 = vdwg.mxu0
    %3368 = vmatpush.bf16.msra.mxu0 %v2552
    %3369 = vmatpush.bf16.msra.mxu0 %v2544
    %3370 = vmatpush.bf16.msra.mxu0 %v2536
    %3371 = vmatpush.bf16.msra.mxu0 %v2528
    %3372 = vmatpush.bf16.msra.mxu0 %v2520
    %3373 = vmatpush.bf16.msra.mxu0 %v2512
    %3374 = vmatpush.bf16.msra.mxu0 %v2504
    %3375 = vmatpush.bf16.msra.mxu0 %v2496
    %3376 = vmatmul.bf16.gmra.mxu0 %v106
    %v3377 = vpop.f32.mrf.mxu0
    %v3378 = vadd.f32 %v3365, %v3377
    %v3379 = vpop.f32.mrf.mxu0
    %3380 = vdwg.mxu0
    %3381 = vmatpush.bf16.msra.mxu0 %v2616
    %3382 = vmatpush.bf16.msra.mxu0 %v2608
    %3383 = vmatpush.bf16.msra.mxu0 %v2600
    %3384 = vmatpush.bf16.msra.mxu0 %v2592
    %3385 = vmatpush.bf16.msra.mxu0 %v2584
    %3386 = vmatpush.bf16.msra.mxu0 %v2576
    %3387 = vmatpush.bf16.msra.mxu0 %v2568
    %3388 = vmatpush.bf16.msra.mxu0 %v2560
    %3389 = vmatmul.bf16.gmra.mxu0 %v107
    %v3390 = vpop.f32.mrf.mxu0
    %v3391 = vadd.f32 %v3378, %v3390
    %v3392 = vpop.f32.mrf.mxu0
    %3393 = vdwg.mxu0
    %3394 = vmatpush.bf16.msra.mxu0 %v2680
    %3395 = vmatpush.bf16.msra.mxu0 %v2672
    %3396 = vmatpush.bf16.msra.mxu0 %v2664
    %3397 = vmatpush.bf16.msra.mxu0 %v2656
    %3398 = vmatpush.bf16.msra.mxu0 %v2648
    %3399 = vmatpush.bf16.msra.mxu0 %v2640
    %3400 = vmatpush.bf16.msra.mxu0 %v2632
    %3401 = vmatpush.bf16.msra.mxu0 %v2624
    %3402 = vmatmul.bf16.gmra.mxu0 %v108
    %v3403 = vpop.f32.mrf.mxu0
    %v3404 = vadd.f32 %v3391, %v3403
    %v3405 = vpop.f32.mrf.mxu0
    %3406 = vdwg.mxu0
    %3407 = vmatpush.bf16.msra.mxu0 %v2233
    %3408 = vmatpush.bf16.msra.mxu0 %v2225
    %3409 = vmatpush.bf16.msra.mxu0 %v2217
    %3410 = vmatpush.bf16.msra.mxu0 %v2209
    %3411 = vmatpush.bf16.msra.mxu0 %v2201
    %3412 = vmatpush.bf16.msra.mxu0 %v2193
    %3413 = vmatpush.bf16.msra.mxu0 %v2185
    %3414 = vmatpush.bf16.msra.mxu0 %v2177
    %3415 = vmatmul.bf16.gmra.mxu0 %v101
    %v3416 = vpop.f32.mrf.mxu0
    %v3417 = vadd.f32 %v625, %v3416
    %v3418 = vpop.f32.mrf.mxu0
    %3419 = vdwg.mxu0
    %3420 = vmatpush.bf16.msra.mxu0 %v2297
    %3421 = vmatpush.bf16.msra.mxu0 %v2289
    %3422 = vmatpush.bf16.msra.mxu0 %v2281
    %3423 = vmatpush.bf16.msra.mxu0 %v2273
    %3424 = vmatpush.bf16.msra.mxu0 %v2265
    %3425 = vmatpush.bf16.msra.mxu0 %v2257
    %3426 = vmatpush.bf16.msra.mxu0 %v2249
    %3427 = vmatpush.bf16.msra.mxu0 %v2241
    %3428 = vmatmul.bf16.gmra.mxu0 %v102
    %v3429 = vpop.f32.mrf.mxu0
    %v3430 = vadd.f32 %v3417, %v3429
    %v3431 = vpop.f32.mrf.mxu0
    %3432 = vdwg.mxu0
    %3433 = vmatpush.bf16.msra.mxu0 %v2361
    %3434 = vmatpush.bf16.msra.mxu0 %v2353
    %3435 = vmatpush.bf16.msra.mxu0 %v2345
    %3436 = vmatpush.bf16.msra.mxu0 %v2337
    %3437 = vmatpush.bf16.msra.mxu0 %v2329
    %3438 = vmatpush.bf16.msra.mxu0 %v2321
    %3439 = vmatpush.bf16.msra.mxu0 %v2313
    %3440 = vmatpush.bf16.msra.mxu0 %v2305
    %3441 = vmatmul.bf16.gmra.mxu0 %v103
    %v3442 = vpop.f32.mrf.mxu0
    %v3443 = vadd.f32 %v3430, %v3442
    %v3444 = vpop.f32.mrf.mxu0
    %3445 = vdwg.mxu0
    %3446 = vmatpush.bf16.msra.mxu0 %v2425
    %3447 = vmatpush.bf16.msra.mxu0 %v2417
    %3448 = vmatpush.bf16.msra.mxu0 %v2409
    %3449 = vmatpush.bf16.msra.mxu0 %v2401
    %3450 = vmatpush.bf16.msra.mxu0 %v2393
    %3451 = vmatpush.bf16.msra.mxu0 %v2385
    %3452 = vmatpush.bf16.msra.mxu0 %v2377
    %3453 = vmatpush.bf16.msra.mxu0 %v2369
    %3454 = vmatmul.bf16.gmra.mxu0 %v104
    %v3455 = vpop.f32.mrf.mxu0
    %v3456 = vadd.f32 %v3443, %v3455
    %v3457 = vpop.f32.mrf.mxu0
    %3458 = vdwg.mxu0
    %3459 = vmatpush.bf16.msra.mxu0 %v2489
    %3460 = vmatpush.bf16.msra.mxu0 %v2481
    %3461 = vmatpush.bf16.msra.mxu0 %v2473
    %3462 = vmatpush.bf16.msra.mxu0 %v2465
    %3463 = vmatpush.bf16.msra.mxu0 %v2457
    %3464 = vmatpush.bf16.msra.mxu0 %v2449
    %3465 = vmatpush.bf16.msra.mxu0 %v2441
    %3466 = vmatpush.bf16.msra.mxu0 %v2433
    %3467 = vmatmul.bf16.gmra.mxu0 %v105
    %v3468 = vpop.f32.mrf.mxu0
    %v3469 = vadd.f32 %v3456, %v3468
    %v3470 = vpop.f32.mrf.mxu0
    %3471 = vdwg.mxu0
    %3472 = vmatpush.bf16.msra.mxu0 %v2553
    %3473 = vmatpush.bf16.msra.mxu0 %v2545
    %3474 = vmatpush.bf16.msra.mxu0 %v2537
    %3475 = vmatpush.bf16.msra.mxu0 %v2529
    %3476 = vmatpush.bf16.msra.mxu0 %v2521
    %3477 = vmatpush.bf16.msra.mxu0 %v2513
    %3478 = vmatpush.bf16.msra.mxu0 %v2505
    %3479 = vmatpush.bf16.msra.mxu0 %v2497
    %3480 = vmatmul.bf16.gmra.mxu0 %v106
    %v3481 = vpop.f32.mrf.mxu0
    %v3482 = vadd.f32 %v3469, %v3481
    %v3483 = vpop.f32.mrf.mxu0
    %3484 = vdwg.mxu0
    %3485 = vmatpush.bf16.msra.mxu0 %v2617
    %3486 = vmatpush.bf16.msra.mxu0 %v2609
    %3487 = vmatpush.bf16.msra.mxu0 %v2601
    %3488 = vmatpush.bf16.msra.mxu0 %v2593
    %3489 = vmatpush.bf16.msra.mxu0 %v2585
    %3490 = vmatpush.bf16.msra.mxu0 %v2577
    %3491 = vmatpush.bf16.msra.mxu0 %v2569
    %3492 = vmatpush.bf16.msra.mxu0 %v2561
    %3493 = vmatmul.bf16.gmra.mxu0 %v107
    %v3494 = vpop.f32.mrf.mxu0
    %v3495 = vadd.f32 %v3482, %v3494
    %v3496 = vpop.f32.mrf.mxu0
    %3497 = vdwg.mxu0
    %3498 = vmatpush.bf16.msra.mxu0 %v2681
    %3499 = vmatpush.bf16.msra.mxu0 %v2673
    %3500 = vmatpush.bf16.msra.mxu0 %v2665
    %3501 = vmatpush.bf16.msra.mxu0 %v2657
    %3502 = vmatpush.bf16.msra.mxu0 %v2649
    %3503 = vmatpush.bf16.msra.mxu0 %v2641
    %3504 = vmatpush.bf16.msra.mxu0 %v2633
    %3505 = vmatpush.bf16.msra.mxu0 %v2625
    %3506 = vmatmul.bf16.gmra.mxu0 %v108
    %v3507 = vpop.f32.mrf.mxu0
    %v3508 = vadd.f32 %v3495, %v3507
    %v3509 = vpop.f32.mrf.mxu0
    %3510 = vdwg.mxu0
    %3511 = vmatpush.bf16.msra.mxu0 %v2234
    %3512 = vmatpush.bf16.msra.mxu0 %v2226
    %3513 = vmatpush.bf16.msra.mxu0 %v2218
    %3514 = vmatpush.bf16.msra.mxu0 %v2210
    %3515 = vmatpush.bf16.msra.mxu0 %v2202
    %3516 = vmatpush.bf16.msra.mxu0 %v2194
    %3517 = vmatpush.bf16.msra.mxu0 %v2186
    %3518 = vmatpush.bf16.msra.mxu0 %v2178
    %3519 = vmatmul.bf16.gmra.mxu0 %v101
    %v3520 = vpop.f32.mrf.mxu0
    %v3521 = vadd.f32 %v626, %v3520
    %v3522 = vpop.f32.mrf.mxu0
    %3523 = vdwg.mxu0
    %3524 = vmatpush.bf16.msra.mxu0 %v2298
    %3525 = vmatpush.bf16.msra.mxu0 %v2290
    %3526 = vmatpush.bf16.msra.mxu0 %v2282
    %3527 = vmatpush.bf16.msra.mxu0 %v2274
    %3528 = vmatpush.bf16.msra.mxu0 %v2266
    %3529 = vmatpush.bf16.msra.mxu0 %v2258
    %3530 = vmatpush.bf16.msra.mxu0 %v2250
    %3531 = vmatpush.bf16.msra.mxu0 %v2242
    %3532 = vmatmul.bf16.gmra.mxu0 %v102
    %v3533 = vpop.f32.mrf.mxu0
    %v3534 = vadd.f32 %v3521, %v3533
    %v3535 = vpop.f32.mrf.mxu0
    %3536 = vdwg.mxu0
    %3537 = vmatpush.bf16.msra.mxu0 %v2362
    %3538 = vmatpush.bf16.msra.mxu0 %v2354
    %3539 = vmatpush.bf16.msra.mxu0 %v2346
    %3540 = vmatpush.bf16.msra.mxu0 %v2338
    %3541 = vmatpush.bf16.msra.mxu0 %v2330
    %3542 = vmatpush.bf16.msra.mxu0 %v2322
    %3543 = vmatpush.bf16.msra.mxu0 %v2314
    %3544 = vmatpush.bf16.msra.mxu0 %v2306
    %3545 = vmatmul.bf16.gmra.mxu0 %v103
    %v3546 = vpop.f32.mrf.mxu0
    %v3547 = vadd.f32 %v3534, %v3546
    %v3548 = vpop.f32.mrf.mxu0
    %3549 = vdwg.mxu0
    %3550 = vmatpush.bf16.msra.mxu0 %v2426
    %3551 = vmatpush.bf16.msra.mxu0 %v2418
    %3552 = vmatpush.bf16.msra.mxu0 %v2410
    %3553 = vmatpush.bf16.msra.mxu0 %v2402
    %3554 = vmatpush.bf16.msra.mxu0 %v2394
    %3555 = vmatpush.bf16.msra.mxu0 %v2386
    %3556 = vmatpush.bf16.msra.mxu0 %v2378
    %3557 = vmatpush.bf16.msra.mxu0 %v2370
    %3558 = vmatmul.bf16.gmra.mxu0 %v104
    %v3559 = vpop.f32.mrf.mxu0
    %v3560 = vadd.f32 %v3547, %v3559
    %v3561 = vpop.f32.mrf.mxu0
    %3562 = vdwg.mxu0
    %3563 = vmatpush.bf16.msra.mxu0 %v2490
    %3564 = vmatpush.bf16.msra.mxu0 %v2482
    %3565 = vmatpush.bf16.msra.mxu0 %v2474
    %3566 = vmatpush.bf16.msra.mxu0 %v2466
    %3567 = vmatpush.bf16.msra.mxu0 %v2458
    %3568 = vmatpush.bf16.msra.mxu0 %v2450
    %3569 = vmatpush.bf16.msra.mxu0 %v2442
    %3570 = vmatpush.bf16.msra.mxu0 %v2434
    %3571 = vmatmul.bf16.gmra.mxu0 %v105
    %v3572 = vpop.f32.mrf.mxu0
    %v3573 = vadd.f32 %v3560, %v3572
    %v3574 = vpop.f32.mrf.mxu0
    %3575 = vdwg.mxu0
    %3576 = vmatpush.bf16.msra.mxu0 %v2554
    %3577 = vmatpush.bf16.msra.mxu0 %v2546
    %3578 = vmatpush.bf16.msra.mxu0 %v2538
    %3579 = vmatpush.bf16.msra.mxu0 %v2530
    %3580 = vmatpush.bf16.msra.mxu0 %v2522
    %3581 = vmatpush.bf16.msra.mxu0 %v2514
    %3582 = vmatpush.bf16.msra.mxu0 %v2506
    %3583 = vmatpush.bf16.msra.mxu0 %v2498
    %3584 = vmatmul.bf16.gmra.mxu0 %v106
    %v3585 = vpop.f32.mrf.mxu0
    %v3586 = vadd.f32 %v3573, %v3585
    %v3587 = vpop.f32.mrf.mxu0
    %3588 = vdwg.mxu0
    %3589 = vmatpush.bf16.msra.mxu0 %v2618
    %3590 = vmatpush.bf16.msra.mxu0 %v2610
    %3591 = vmatpush.bf16.msra.mxu0 %v2602
    %3592 = vmatpush.bf16.msra.mxu0 %v2594
    %3593 = vmatpush.bf16.msra.mxu0 %v2586
    %3594 = vmatpush.bf16.msra.mxu0 %v2578
    %3595 = vmatpush.bf16.msra.mxu0 %v2570
    %3596 = vmatpush.bf16.msra.mxu0 %v2562
    %3597 = vmatmul.bf16.gmra.mxu0 %v107
    %v3598 = vpop.f32.mrf.mxu0
    %v3599 = vadd.f32 %v3586, %v3598
    %v3600 = vpop.f32.mrf.mxu0
    %3601 = vdwg.mxu0
    %3602 = vmatpush.bf16.msra.mxu0 %v2682
    %3603 = vmatpush.bf16.msra.mxu0 %v2674
    %3604 = vmatpush.bf16.msra.mxu0 %v2666
    %3605 = vmatpush.bf16.msra.mxu0 %v2658
    %3606 = vmatpush.bf16.msra.mxu0 %v2650
    %3607 = vmatpush.bf16.msra.mxu0 %v2642
    %3608 = vmatpush.bf16.msra.mxu0 %v2634
    %3609 = vmatpush.bf16.msra.mxu0 %v2626
    %3610 = vmatmul.bf16.gmra.mxu0 %v108
    %v3611 = vpop.f32.mrf.mxu0
    %v3612 = vadd.f32 %v3599, %v3611
    %v3613 = vpop.f32.mrf.mxu0
    %3614 = vdwg.mxu0
    %3615 = vmatpush.bf16.msra.mxu0 %v2235
    %3616 = vmatpush.bf16.msra.mxu0 %v2227
    %3617 = vmatpush.bf16.msra.mxu0 %v2219
    %3618 = vmatpush.bf16.msra.mxu0 %v2211
    %3619 = vmatpush.bf16.msra.mxu0 %v2203
    %3620 = vmatpush.bf16.msra.mxu0 %v2195
    %3621 = vmatpush.bf16.msra.mxu0 %v2187
    %3622 = vmatpush.bf16.msra.mxu0 %v2179
    %3623 = vmatmul.bf16.gmra.mxu0 %v101
    %v3624 = vpop.f32.mrf.mxu0
    %v3625 = vadd.f32 %v627, %v3624
    %v3626 = vpop.f32.mrf.mxu0
    %3627 = vdwg.mxu0
    %3628 = vmatpush.bf16.msra.mxu0 %v2299
    %3629 = vmatpush.bf16.msra.mxu0 %v2291
    %3630 = vmatpush.bf16.msra.mxu0 %v2283
    %3631 = vmatpush.bf16.msra.mxu0 %v2275
    %3632 = vmatpush.bf16.msra.mxu0 %v2267
    %3633 = vmatpush.bf16.msra.mxu0 %v2259
    %3634 = vmatpush.bf16.msra.mxu0 %v2251
    %3635 = vmatpush.bf16.msra.mxu0 %v2243
    %3636 = vmatmul.bf16.gmra.mxu0 %v102
    %v3637 = vpop.f32.mrf.mxu0
    %v3638 = vadd.f32 %v3625, %v3637
    %v3639 = vpop.f32.mrf.mxu0
    %3640 = vdwg.mxu0
    %3641 = vmatpush.bf16.msra.mxu0 %v2363
    %3642 = vmatpush.bf16.msra.mxu0 %v2355
    %3643 = vmatpush.bf16.msra.mxu0 %v2347
    %3644 = vmatpush.bf16.msra.mxu0 %v2339
    %3645 = vmatpush.bf16.msra.mxu0 %v2331
    %3646 = vmatpush.bf16.msra.mxu0 %v2323
    %3647 = vmatpush.bf16.msra.mxu0 %v2315
    %3648 = vmatpush.bf16.msra.mxu0 %v2307
    %3649 = vmatmul.bf16.gmra.mxu0 %v103
    %v3650 = vpop.f32.mrf.mxu0
    %v3651 = vadd.f32 %v3638, %v3650
    %v3652 = vpop.f32.mrf.mxu0
    %3653 = vdwg.mxu0
    %3654 = vmatpush.bf16.msra.mxu0 %v2427
    %3655 = vmatpush.bf16.msra.mxu0 %v2419
    %3656 = vmatpush.bf16.msra.mxu0 %v2411
    %3657 = vmatpush.bf16.msra.mxu0 %v2403
    %3658 = vmatpush.bf16.msra.mxu0 %v2395
    %3659 = vmatpush.bf16.msra.mxu0 %v2387
    %3660 = vmatpush.bf16.msra.mxu0 %v2379
    %3661 = vmatpush.bf16.msra.mxu0 %v2371
    %3662 = vmatmul.bf16.gmra.mxu0 %v104
    %v3663 = vpop.f32.mrf.mxu0
    %v3664 = vadd.f32 %v3651, %v3663
    %v3665 = vpop.f32.mrf.mxu0
    %3666 = vdwg.mxu0
    %3667 = vmatpush.bf16.msra.mxu0 %v2491
    %3668 = vmatpush.bf16.msra.mxu0 %v2483
    %3669 = vmatpush.bf16.msra.mxu0 %v2475
    %3670 = vmatpush.bf16.msra.mxu0 %v2467
    %3671 = vmatpush.bf16.msra.mxu0 %v2459
    %3672 = vmatpush.bf16.msra.mxu0 %v2451
    %3673 = vmatpush.bf16.msra.mxu0 %v2443
    %3674 = vmatpush.bf16.msra.mxu0 %v2435
    %3675 = vmatmul.bf16.gmra.mxu0 %v105
    %v3676 = vpop.f32.mrf.mxu0
    %v3677 = vadd.f32 %v3664, %v3676
    %v3678 = vpop.f32.mrf.mxu0
    %3679 = vdwg.mxu0
    %3680 = vmatpush.bf16.msra.mxu0 %v2555
    %3681 = vmatpush.bf16.msra.mxu0 %v2547
    %3682 = vmatpush.bf16.msra.mxu0 %v2539
    %3683 = vmatpush.bf16.msra.mxu0 %v2531
    %3684 = vmatpush.bf16.msra.mxu0 %v2523
    %3685 = vmatpush.bf16.msra.mxu0 %v2515
    %3686 = vmatpush.bf16.msra.mxu0 %v2507
    %3687 = vmatpush.bf16.msra.mxu0 %v2499
    %3688 = vmatmul.bf16.gmra.mxu0 %v106
    %v3689 = vpop.f32.mrf.mxu0
    %v3690 = vadd.f32 %v3677, %v3689
    %v3691 = vpop.f32.mrf.mxu0
    %3692 = vdwg.mxu0
    %3693 = vmatpush.bf16.msra.mxu0 %v2619
    %3694 = vmatpush.bf16.msra.mxu0 %v2611
    %3695 = vmatpush.bf16.msra.mxu0 %v2603
    %3696 = vmatpush.bf16.msra.mxu0 %v2595
    %3697 = vmatpush.bf16.msra.mxu0 %v2587
    %3698 = vmatpush.bf16.msra.mxu0 %v2579
    %3699 = vmatpush.bf16.msra.mxu0 %v2571
    %3700 = vmatpush.bf16.msra.mxu0 %v2563
    %3701 = vmatmul.bf16.gmra.mxu0 %v107
    %v3702 = vpop.f32.mrf.mxu0
    %v3703 = vadd.f32 %v3690, %v3702
    %v3704 = vpop.f32.mrf.mxu0
    %3705 = vdwg.mxu0
    %3706 = vmatpush.bf16.msra.mxu0 %v2683
    %3707 = vmatpush.bf16.msra.mxu0 %v2675
    %3708 = vmatpush.bf16.msra.mxu0 %v2667
    %3709 = vmatpush.bf16.msra.mxu0 %v2659
    %3710 = vmatpush.bf16.msra.mxu0 %v2651
    %3711 = vmatpush.bf16.msra.mxu0 %v2643
    %3712 = vmatpush.bf16.msra.mxu0 %v2635
    %3713 = vmatpush.bf16.msra.mxu0 %v2627
    %3714 = vmatmul.bf16.gmra.mxu0 %v108
    %v3715 = vpop.f32.mrf.mxu0
    %v3716 = vadd.f32 %v3703, %v3715
    %v3717 = vpop.f32.mrf.mxu0
    %3718 = vdwg.mxu0
    %3719 = vmatpush.bf16.msra.mxu0 %v2236
    %3720 = vmatpush.bf16.msra.mxu0 %v2228
    %3721 = vmatpush.bf16.msra.mxu0 %v2220
    %3722 = vmatpush.bf16.msra.mxu0 %v2212
    %3723 = vmatpush.bf16.msra.mxu0 %v2204
    %3724 = vmatpush.bf16.msra.mxu0 %v2196
    %3725 = vmatpush.bf16.msra.mxu0 %v2188
    %3726 = vmatpush.bf16.msra.mxu0 %v2180
    %3727 = vmatmul.bf16.gmra.mxu0 %v101
    %v3728 = vpop.f32.mrf.mxu0
    %v3729 = vadd.f32 %v628, %v3728
    %v3730 = vpop.f32.mrf.mxu0
    %3731 = vdwg.mxu0
    %3732 = vmatpush.bf16.msra.mxu0 %v2300
    %3733 = vmatpush.bf16.msra.mxu0 %v2292
    %3734 = vmatpush.bf16.msra.mxu0 %v2284
    %3735 = vmatpush.bf16.msra.mxu0 %v2276
    %3736 = vmatpush.bf16.msra.mxu0 %v2268
    %3737 = vmatpush.bf16.msra.mxu0 %v2260
    %3738 = vmatpush.bf16.msra.mxu0 %v2252
    %3739 = vmatpush.bf16.msra.mxu0 %v2244
    %3740 = vmatmul.bf16.gmra.mxu0 %v102
    %v3741 = vpop.f32.mrf.mxu0
    %v3742 = vadd.f32 %v3729, %v3741
    %v3743 = vpop.f32.mrf.mxu0
    %3744 = vdwg.mxu0
    %3745 = vmatpush.bf16.msra.mxu0 %v2364
    %3746 = vmatpush.bf16.msra.mxu0 %v2356
    %3747 = vmatpush.bf16.msra.mxu0 %v2348
    %3748 = vmatpush.bf16.msra.mxu0 %v2340
    %3749 = vmatpush.bf16.msra.mxu0 %v2332
    %3750 = vmatpush.bf16.msra.mxu0 %v2324
    %3751 = vmatpush.bf16.msra.mxu0 %v2316
    %3752 = vmatpush.bf16.msra.mxu0 %v2308
    %3753 = vmatmul.bf16.gmra.mxu0 %v103
    %v3754 = vpop.f32.mrf.mxu0
    %v3755 = vadd.f32 %v3742, %v3754
    %v3756 = vpop.f32.mrf.mxu0
    %3757 = vdwg.mxu0
    %3758 = vmatpush.bf16.msra.mxu0 %v2428
    %3759 = vmatpush.bf16.msra.mxu0 %v2420
    %3760 = vmatpush.bf16.msra.mxu0 %v2412
    %3761 = vmatpush.bf16.msra.mxu0 %v2404
    %3762 = vmatpush.bf16.msra.mxu0 %v2396
    %3763 = vmatpush.bf16.msra.mxu0 %v2388
    %3764 = vmatpush.bf16.msra.mxu0 %v2380
    %3765 = vmatpush.bf16.msra.mxu0 %v2372
    %3766 = vmatmul.bf16.gmra.mxu0 %v104
    %v3767 = vpop.f32.mrf.mxu0
    %v3768 = vadd.f32 %v3755, %v3767
    %v3769 = vpop.f32.mrf.mxu0
    %3770 = vdwg.mxu0
    %3771 = vmatpush.bf16.msra.mxu0 %v2492
    %3772 = vmatpush.bf16.msra.mxu0 %v2484
    %3773 = vmatpush.bf16.msra.mxu0 %v2476
    %3774 = vmatpush.bf16.msra.mxu0 %v2468
    %3775 = vmatpush.bf16.msra.mxu0 %v2460
    %3776 = vmatpush.bf16.msra.mxu0 %v2452
    %3777 = vmatpush.bf16.msra.mxu0 %v2444
    %3778 = vmatpush.bf16.msra.mxu0 %v2436
    %3779 = vmatmul.bf16.gmra.mxu0 %v105
    %v3780 = vpop.f32.mrf.mxu0
    %v3781 = vadd.f32 %v3768, %v3780
    %v3782 = vpop.f32.mrf.mxu0
    %3783 = vdwg.mxu0
    %3784 = vmatpush.bf16.msra.mxu0 %v2556
    %3785 = vmatpush.bf16.msra.mxu0 %v2548
    %3786 = vmatpush.bf16.msra.mxu0 %v2540
    %3787 = vmatpush.bf16.msra.mxu0 %v2532
    %3788 = vmatpush.bf16.msra.mxu0 %v2524
    %3789 = vmatpush.bf16.msra.mxu0 %v2516
    %3790 = vmatpush.bf16.msra.mxu0 %v2508
    %3791 = vmatpush.bf16.msra.mxu0 %v2500
    %3792 = vmatmul.bf16.gmra.mxu0 %v106
    %v3793 = vpop.f32.mrf.mxu0
    %v3794 = vadd.f32 %v3781, %v3793
    %v3795 = vpop.f32.mrf.mxu0
    %3796 = vdwg.mxu0
    %3797 = vmatpush.bf16.msra.mxu0 %v2620
    %3798 = vmatpush.bf16.msra.mxu0 %v2612
    %3799 = vmatpush.bf16.msra.mxu0 %v2604
    %3800 = vmatpush.bf16.msra.mxu0 %v2596
    %3801 = vmatpush.bf16.msra.mxu0 %v2588
    %3802 = vmatpush.bf16.msra.mxu0 %v2580
    %3803 = vmatpush.bf16.msra.mxu0 %v2572
    %3804 = vmatpush.bf16.msra.mxu0 %v2564
    %3805 = vmatmul.bf16.gmra.mxu0 %v107
    %v3806 = vpop.f32.mrf.mxu0
    %v3807 = vadd.f32 %v3794, %v3806
    %v3808 = vpop.f32.mrf.mxu0
    %3809 = vdwg.mxu0
    %3810 = vmatpush.bf16.msra.mxu0 %v2684
    %3811 = vmatpush.bf16.msra.mxu0 %v2676
    %3812 = vmatpush.bf16.msra.mxu0 %v2668
    %3813 = vmatpush.bf16.msra.mxu0 %v2660
    %3814 = vmatpush.bf16.msra.mxu0 %v2652
    %3815 = vmatpush.bf16.msra.mxu0 %v2644
    %3816 = vmatpush.bf16.msra.mxu0 %v2636
    %3817 = vmatpush.bf16.msra.mxu0 %v2628
    %3818 = vmatmul.bf16.gmra.mxu0 %v108
    %v3819 = vpop.f32.mrf.mxu0
    %v3820 = vadd.f32 %v3807, %v3819
    %v3821 = vpop.f32.mrf.mxu0
    %3822 = vdwg.mxu0
    %3823 = vmatpush.bf16.msra.mxu0 %v2237
    %3824 = vmatpush.bf16.msra.mxu0 %v2229
    %3825 = vmatpush.bf16.msra.mxu0 %v2221
    %3826 = vmatpush.bf16.msra.mxu0 %v2213
    %3827 = vmatpush.bf16.msra.mxu0 %v2205
    %3828 = vmatpush.bf16.msra.mxu0 %v2197
    %3829 = vmatpush.bf16.msra.mxu0 %v2189
    %3830 = vmatpush.bf16.msra.mxu0 %v2181
    %3831 = vmatmul.bf16.gmra.mxu0 %v101
    %v3832 = vpop.f32.mrf.mxu0
    %v3833 = vadd.f32 %v629, %v3832
    %v3834 = vpop.f32.mrf.mxu0
    %3835 = vdwg.mxu0
    %3836 = vmatpush.bf16.msra.mxu0 %v2301
    %3837 = vmatpush.bf16.msra.mxu0 %v2293
    %3838 = vmatpush.bf16.msra.mxu0 %v2285
    %3839 = vmatpush.bf16.msra.mxu0 %v2277
    %3840 = vmatpush.bf16.msra.mxu0 %v2269
    %3841 = vmatpush.bf16.msra.mxu0 %v2261
    %3842 = vmatpush.bf16.msra.mxu0 %v2253
    %3843 = vmatpush.bf16.msra.mxu0 %v2245
    %3844 = vmatmul.bf16.gmra.mxu0 %v102
    %v3845 = vpop.f32.mrf.mxu0
    %v3846 = vadd.f32 %v3833, %v3845
    %v3847 = vpop.f32.mrf.mxu0
    %3848 = vdwg.mxu0
    %3849 = vmatpush.bf16.msra.mxu0 %v2365
    %3850 = vmatpush.bf16.msra.mxu0 %v2357
    %3851 = vmatpush.bf16.msra.mxu0 %v2349
    %3852 = vmatpush.bf16.msra.mxu0 %v2341
    %3853 = vmatpush.bf16.msra.mxu0 %v2333
    %3854 = vmatpush.bf16.msra.mxu0 %v2325
    %3855 = vmatpush.bf16.msra.mxu0 %v2317
    %3856 = vmatpush.bf16.msra.mxu0 %v2309
    %3857 = vmatmul.bf16.gmra.mxu0 %v103
    %v3858 = vpop.f32.mrf.mxu0
    %v3859 = vadd.f32 %v3846, %v3858
    %v3860 = vpop.f32.mrf.mxu0
    %3861 = vdwg.mxu0
    %3862 = vmatpush.bf16.msra.mxu0 %v2429
    %3863 = vmatpush.bf16.msra.mxu0 %v2421
    %3864 = vmatpush.bf16.msra.mxu0 %v2413
    %3865 = vmatpush.bf16.msra.mxu0 %v2405
    %3866 = vmatpush.bf16.msra.mxu0 %v2397
    %3867 = vmatpush.bf16.msra.mxu0 %v2389
    %3868 = vmatpush.bf16.msra.mxu0 %v2381
    %3869 = vmatpush.bf16.msra.mxu0 %v2373
    %3870 = vmatmul.bf16.gmra.mxu0 %v104
    %v3871 = vpop.f32.mrf.mxu0
    %v3872 = vadd.f32 %v3859, %v3871
    %v3873 = vpop.f32.mrf.mxu0
    %3874 = vdwg.mxu0
    %3875 = vmatpush.bf16.msra.mxu0 %v2493
    %3876 = vmatpush.bf16.msra.mxu0 %v2485
    %3877 = vmatpush.bf16.msra.mxu0 %v2477
    %3878 = vmatpush.bf16.msra.mxu0 %v2469
    %3879 = vmatpush.bf16.msra.mxu0 %v2461
    %3880 = vmatpush.bf16.msra.mxu0 %v2453
    %3881 = vmatpush.bf16.msra.mxu0 %v2445
    %3882 = vmatpush.bf16.msra.mxu0 %v2437
    %3883 = vmatmul.bf16.gmra.mxu0 %v105
    %v3884 = vpop.f32.mrf.mxu0
    %v3885 = vadd.f32 %v3872, %v3884
    %v3886 = vpop.f32.mrf.mxu0
    %3887 = vdwg.mxu0
    %3888 = vmatpush.bf16.msra.mxu0 %v2557
    %3889 = vmatpush.bf16.msra.mxu0 %v2549
    %3890 = vmatpush.bf16.msra.mxu0 %v2541
    %3891 = vmatpush.bf16.msra.mxu0 %v2533
    %3892 = vmatpush.bf16.msra.mxu0 %v2525
    %3893 = vmatpush.bf16.msra.mxu0 %v2517
    %3894 = vmatpush.bf16.msra.mxu0 %v2509
    %3895 = vmatpush.bf16.msra.mxu0 %v2501
    %3896 = vmatmul.bf16.gmra.mxu0 %v106
    %v3897 = vpop.f32.mrf.mxu0
    %v3898 = vadd.f32 %v3885, %v3897
    %v3899 = vpop.f32.mrf.mxu0
    %3900 = vdwg.mxu0
    %3901 = vmatpush.bf16.msra.mxu0 %v2621
    %3902 = vmatpush.bf16.msra.mxu0 %v2613
    %3903 = vmatpush.bf16.msra.mxu0 %v2605
    %3904 = vmatpush.bf16.msra.mxu0 %v2597
    %3905 = vmatpush.bf16.msra.mxu0 %v2589
    %3906 = vmatpush.bf16.msra.mxu0 %v2581
    %3907 = vmatpush.bf16.msra.mxu0 %v2573
    %3908 = vmatpush.bf16.msra.mxu0 %v2565
    %3909 = vmatmul.bf16.gmra.mxu0 %v107
    %v3910 = vpop.f32.mrf.mxu0
    %v3911 = vadd.f32 %v3898, %v3910
    %v3912 = vpop.f32.mrf.mxu0
    %3913 = vdwg.mxu0
    %3914 = vmatpush.bf16.msra.mxu0 %v2685
    %3915 = vmatpush.bf16.msra.mxu0 %v2677
    %3916 = vmatpush.bf16.msra.mxu0 %v2669
    %3917 = vmatpush.bf16.msra.mxu0 %v2661
    %3918 = vmatpush.bf16.msra.mxu0 %v2653
    %3919 = vmatpush.bf16.msra.mxu0 %v2645
    %3920 = vmatpush.bf16.msra.mxu0 %v2637
    %3921 = vmatpush.bf16.msra.mxu0 %v2629
    %3922 = vmatmul.bf16.gmra.mxu0 %v108
    %v3923 = vpop.f32.mrf.mxu0
    %v3924 = vadd.f32 %v3911, %v3923
    %v3925 = vpop.f32.mrf.mxu0
    %3926 = vdwg.mxu0
    %3927 = vmatpush.bf16.msra.mxu0 %v2238
    %3928 = vmatpush.bf16.msra.mxu0 %v2230
    %3929 = vmatpush.bf16.msra.mxu0 %v2222
    %3930 = vmatpush.bf16.msra.mxu0 %v2214
    %3931 = vmatpush.bf16.msra.mxu0 %v2206
    %3932 = vmatpush.bf16.msra.mxu0 %v2198
    %3933 = vmatpush.bf16.msra.mxu0 %v2190
    %3934 = vmatpush.bf16.msra.mxu0 %v2182
    %3935 = vmatmul.bf16.gmra.mxu0 %v101
    %v3936 = vpop.f32.mrf.mxu0
    %v3937 = vadd.f32 %v630, %v3936
    %v3938 = vpop.f32.mrf.mxu0
    %3939 = vdwg.mxu0
    %3940 = vmatpush.bf16.msra.mxu0 %v2302
    %3941 = vmatpush.bf16.msra.mxu0 %v2294
    %3942 = vmatpush.bf16.msra.mxu0 %v2286
    %3943 = vmatpush.bf16.msra.mxu0 %v2278
    %3944 = vmatpush.bf16.msra.mxu0 %v2270
    %3945 = vmatpush.bf16.msra.mxu0 %v2262
    %3946 = vmatpush.bf16.msra.mxu0 %v2254
    %3947 = vmatpush.bf16.msra.mxu0 %v2246
    %3948 = vmatmul.bf16.gmra.mxu0 %v102
    %v3949 = vpop.f32.mrf.mxu0
    %v3950 = vadd.f32 %v3937, %v3949
    %v3951 = vpop.f32.mrf.mxu0
    %3952 = vdwg.mxu0
    %3953 = vmatpush.bf16.msra.mxu0 %v2366
    %3954 = vmatpush.bf16.msra.mxu0 %v2358
    %3955 = vmatpush.bf16.msra.mxu0 %v2350
    %3956 = vmatpush.bf16.msra.mxu0 %v2342
    %3957 = vmatpush.bf16.msra.mxu0 %v2334
    %3958 = vmatpush.bf16.msra.mxu0 %v2326
    %3959 = vmatpush.bf16.msra.mxu0 %v2318
    %3960 = vmatpush.bf16.msra.mxu0 %v2310
    %3961 = vmatmul.bf16.gmra.mxu0 %v103
    %v3962 = vpop.f32.mrf.mxu0
    %v3963 = vadd.f32 %v3950, %v3962
    %v3964 = vpop.f32.mrf.mxu0
    %3965 = vdwg.mxu0
    %3966 = vmatpush.bf16.msra.mxu0 %v2430
    %3967 = vmatpush.bf16.msra.mxu0 %v2422
    %3968 = vmatpush.bf16.msra.mxu0 %v2414
    %3969 = vmatpush.bf16.msra.mxu0 %v2406
    %3970 = vmatpush.bf16.msra.mxu0 %v2398
    %3971 = vmatpush.bf16.msra.mxu0 %v2390
    %3972 = vmatpush.bf16.msra.mxu0 %v2382
    %3973 = vmatpush.bf16.msra.mxu0 %v2374
    %3974 = vmatmul.bf16.gmra.mxu0 %v104
    %v3975 = vpop.f32.mrf.mxu0
    %v3976 = vadd.f32 %v3963, %v3975
    %v3977 = vpop.f32.mrf.mxu0
    %3978 = vdwg.mxu0
    %3979 = vmatpush.bf16.msra.mxu0 %v2494
    %3980 = vmatpush.bf16.msra.mxu0 %v2486
    %3981 = vmatpush.bf16.msra.mxu0 %v2478
    %3982 = vmatpush.bf16.msra.mxu0 %v2470
    %3983 = vmatpush.bf16.msra.mxu0 %v2462
    %3984 = vmatpush.bf16.msra.mxu0 %v2454
    %3985 = vmatpush.bf16.msra.mxu0 %v2446
    %3986 = vmatpush.bf16.msra.mxu0 %v2438
    %3987 = vmatmul.bf16.gmra.mxu0 %v105
    %v3988 = vpop.f32.mrf.mxu0
    %v3989 = vadd.f32 %v3976, %v3988
    %v3990 = vpop.f32.mrf.mxu0
    %3991 = vdwg.mxu0
    %3992 = vmatpush.bf16.msra.mxu0 %v2558
    %3993 = vmatpush.bf16.msra.mxu0 %v2550
    %3994 = vmatpush.bf16.msra.mxu0 %v2542
    %3995 = vmatpush.bf16.msra.mxu0 %v2534
    %3996 = vmatpush.bf16.msra.mxu0 %v2526
    %3997 = vmatpush.bf16.msra.mxu0 %v2518
    %3998 = vmatpush.bf16.msra.mxu0 %v2510
    %3999 = vmatpush.bf16.msra.mxu0 %v2502
    %4000 = vmatmul.bf16.gmra.mxu0 %v106
    %v4001 = vpop.f32.mrf.mxu0
    %v4002 = vadd.f32 %v3989, %v4001
    %v4003 = vpop.f32.mrf.mxu0
    %4004 = vdwg.mxu0
    %4005 = vmatpush.bf16.msra.mxu0 %v2622
    %4006 = vmatpush.bf16.msra.mxu0 %v2614
    %4007 = vmatpush.bf16.msra.mxu0 %v2606
    %4008 = vmatpush.bf16.msra.mxu0 %v2598
    %4009 = vmatpush.bf16.msra.mxu0 %v2590
    %4010 = vmatpush.bf16.msra.mxu0 %v2582
    %4011 = vmatpush.bf16.msra.mxu0 %v2574
    %4012 = vmatpush.bf16.msra.mxu0 %v2566
    %4013 = vmatmul.bf16.gmra.mxu0 %v107
    %v4014 = vpop.f32.mrf.mxu0
    %v4015 = vadd.f32 %v4002, %v4014
    %v4016 = vpop.f32.mrf.mxu0
    %4017 = vdwg.mxu0
    %4018 = vmatpush.bf16.msra.mxu0 %v2686
    %4019 = vmatpush.bf16.msra.mxu0 %v2678
    %4020 = vmatpush.bf16.msra.mxu0 %v2670
    %4021 = vmatpush.bf16.msra.mxu0 %v2662
    %4022 = vmatpush.bf16.msra.mxu0 %v2654
    %4023 = vmatpush.bf16.msra.mxu0 %v2646
    %4024 = vmatpush.bf16.msra.mxu0 %v2638
    %4025 = vmatpush.bf16.msra.mxu0 %v2630
    %4026 = vmatmul.bf16.gmra.mxu0 %v108
    %v4027 = vpop.f32.mrf.mxu0
    %v4028 = vadd.f32 %v4015, %v4027
    %v4029 = vpop.f32.mrf.mxu0
    %4030 = vdwg.mxu0
    %v4031 = vmax.f32 %v3300, 0.0
    %v4032 = vmax.f32 %v3404, 0.0
    %v4033 = vmax.f32 %v3508, 0.0
    %v4034 = vmax.f32 %v3612, 0.0
    %v4035 = vmax.f32 %v3716, 0.0
    %v4036 = vmax.f32 %v3820, 0.0
    %v4037 = vmax.f32 %v3924, 0.0
    %v4038 = vmax.f32 %v4028, 0.0
    %v4039 = vpack.c.bf16 %v4031, %v4031
    %v4040 = vpack.c.bf16 %v4032, %v4032
    %v4041 = vpack.c.bf16 %v4033, %v4033
    %v4042 = vpack.c.bf16 %v4034, %v4034
    %v4043 = vpack.c.bf16 %v4035, %v4035
    %v4044 = vpack.c.bf16 %v4036, %v4036
    %v4045 = vpack.c.bf16 %v4037, %v4037
    %v4046 = vpack.c.bf16 %v4038, %v4038
    %v4047 = vld [vmem:[#allocation8] sm:$0xf]
    %v4048 = vld [vmem:[#allocation8 + $0x4] sm:$0xf]
    %v4049 = vld [vmem:[#allocation8 + $0x8] sm:$0xf]
    %v4050 = vld [vmem:[#allocation8 + $0xc] sm:$0xf]
    %v4051 = vld [vmem:[#allocation8 + $0x10] sm:$0xf]
    %v4052 = vld [vmem:[#allocation8 + $0x14] sm:$0xf]
    %v4053 = vld [vmem:[#allocation8 + $0x18] sm:$0xf]
    %v4054 = vld [vmem:[#allocation8 + $0x1c] sm:$0xf]
    %v4055 = vld [vmem:[#allocation8 + $0x20] sm:$0xf]
    %v4056 = vld [vmem:[#allocation8 + $0x24] sm:$0xf]
    %v4057 = vld [vmem:[#allocation8 + $0x28] sm:$0xf]
    %v4058 = vld [vmem:[#allocation8 + $0x2c] sm:$0xf]
    %v4059 = vld [vmem:[#allocation8 + $0x30] sm:$0xf]
    %v4060 = vld [vmem:[#allocation8 + $0x34] sm:$0xf]
    %v4061 = vld [vmem:[#allocation8 + $0x38] sm:$0xf]
    %v4062 = vld [vmem:[#allocation8 + $0x3c] sm:$0xf]
    %v4063 = vld [vmem:[#allocation8 + $0x40] sm:$0xf]
    %v4064 = vld [vmem:[#allocation8 + $0x44] sm:$0xf]
    %v4065 = vld [vmem:[#allocation8 + $0x48] sm:$0xf]
    %v4066 = vld [vmem:[#allocation8 + $0x4c] sm:$0xf]
    %v4067 = vld [vmem:[#allocation8 + $0x50] sm:$0xf]
    %v4068 = vld [vmem:[#allocation8 + $0x54] sm:$0xf]
    %v4069 = vld [vmem:[#allocation8 + $0x58] sm:$0xf]
    %v4070 = vld [vmem:[#allocation8 + $0x5c] sm:$0xf]
    %v4071 = vld [vmem:[#allocation8 + $0x60] sm:$0xf]
    %v4072 = vld [vmem:[#allocation8 + $0x64] sm:$0xf]
    %v4073 = vld [vmem:[#allocation8 + $0x68] sm:$0xf]
    %v4074 = vld [vmem:[#allocation8 + $0x6c] sm:$0xf]
    %v4075 = vld [vmem:[#allocation8 + $0x70] sm:$0xf]
    %v4076 = vld [vmem:[#allocation8 + $0x74] sm:$0xf]
    %v4077 = vld [vmem:[#allocation8 + $0x78] sm:$0xf]
    %v4078 = vld [vmem:[#allocation8 + $0x7c] sm:$0xf]
    %v4079 = vld [vmem:[#allocation8 + $0x80] sm:$0xf]
    %v4080 = vld [vmem:[#allocation8 + $0x84] sm:$0xf]
    %v4081 = vld [vmem:[#allocation8 + $0x88] sm:$0xf]
    %v4082 = vld [vmem:[#allocation8 + $0x8c] sm:$0xf]
    %v4083 = vld [vmem:[#allocation8 + $0x90] sm:$0xf]
    %v4084 = vld [vmem:[#allocation8 + $0x94] sm:$0xf]
    %v4085 = vld [vmem:[#allocation8 + $0x98] sm:$0xf]
    %v4086 = vld [vmem:[#allocation8 + $0x9c] sm:$0xf]
    %v4087 = vld [vmem:[#allocation8 + $0xa0] sm:$0xf]
    %v4088 = vld [vmem:[#allocation8 + $0xa4] sm:$0xf]
    %v4089 = vld [vmem:[#allocation8 + $0xa8] sm:$0xf]
    %v4090 = vld [vmem:[#allocation8 + $0xac] sm:$0xf]
    %v4091 = vld [vmem:[#allocation8 + $0xb0] sm:$0xf]
    %v4092 = vld [vmem:[#allocation8 + $0xb4] sm:$0xf]
    %v4093 = vld [vmem:[#allocation8 + $0xb8] sm:$0xf]
    %v4094 = vld [vmem:[#allocation8 + $0xbc] sm:$0xf]
    %v4095 = vld [vmem:[#allocation8 + $0xc0] sm:$0xf]
    %v4096 = vld [vmem:[#allocation8 + $0xc4] sm:$0xf]
    %v4097 = vld [vmem:[#allocation8 + $0xc8] sm:$0xf]
    %v4098 = vld [vmem:[#allocation8 + $0xcc] sm:$0xf]
    %v4099 = vld [vmem:[#allocation8 + $0xd0] sm:$0xf]
    %v4100 = vld [vmem:[#allocation8 + $0xd4] sm:$0xf]
    %v4101 = vld [vmem:[#allocation8 + $0xd8] sm:$0xf]
    %v4102 = vld [vmem:[#allocation8 + $0xdc] sm:$0xf]
    %v4103 = vld [vmem:[#allocation8 + $0xe0] sm:$0xf]
    %v4104 = vld [vmem:[#allocation8 + $0xe4] sm:$0xf]
    %v4105 = vld [vmem:[#allocation8 + $0xe8] sm:$0xf]
    %v4106 = vld [vmem:[#allocation8 + $0xec] sm:$0xf]
    %v4107 = vld [vmem:[#allocation8 + $0xf0] sm:$0xf]
    %v4108 = vld [vmem:[#allocation8 + $0xf4] sm:$0xf]
    %v4109 = vld [vmem:[#allocation8 + $0xf8] sm:$0xf]
    %v4110 = vld [vmem:[#allocation8 + $0xfc] sm:$0xf]
    %v4111 = vld [vmem:[#allocation8 + $0x100] sm:$0xf]
    %v4112 = vld [vmem:[#allocation8 + $0x104] sm:$0xf]
    %v4113 = vld [vmem:[#allocation8 + $0x108] sm:$0xf]
    %v4114 = vld [vmem:[#allocation8 + $0x10c] sm:$0xf]
    %v4115 = vld [vmem:[#allocation8 + $0x110] sm:$0xf]
    %v4116 = vld [vmem:[#allocation8 + $0x114] sm:$0xf]
    %v4117 = vld [vmem:[#allocation8 + $0x118] sm:$0xf]
    %v4118 = vld [vmem:[#allocation8 + $0x11c] sm:$0xf]
    %v4119 = vld [vmem:[#allocation8 + $0x120] sm:$0xf]
    %v4120 = vld [vmem:[#allocation8 + $0x124] sm:$0xf]
    %v4121 = vld [vmem:[#allocation8 + $0x128] sm:$0xf]
    %v4122 = vld [vmem:[#allocation8 + $0x12c] sm:$0xf]
    %v4123 = vld [vmem:[#allocation8 + $0x130] sm:$0xf]
    %v4124 = vld [vmem:[#allocation8 + $0x134] sm:$0xf]
    %v4125 = vld [vmem:[#allocation8 + $0x138] sm:$0xf]
    %v4126 = vld [vmem:[#allocation8 + $0x13c] sm:$0xf]
    %v4127 = vld [vmem:[#allocation8 + $0x140] sm:$0xf]
    %v4128 = vld [vmem:[#allocation8 + $0x144] sm:$0xf]
    %v4129 = vld [vmem:[#allocation8 + $0x148] sm:$0xf]
    %v4130 = vld [vmem:[#allocation8 + $0x14c] sm:$0xf]
    %v4131 = vld [vmem:[#allocation8 + $0x150] sm:$0xf]
    %v4132 = vld [vmem:[#allocation8 + $0x154] sm:$0xf]
    %v4133 = vld [vmem:[#allocation8 + $0x158] sm:$0xf]
    %v4134 = vld [vmem:[#allocation8 + $0x15c] sm:$0xf]
    %v4135 = vld [vmem:[#allocation8 + $0x160] sm:$0xf]
    %v4136 = vld [vmem:[#allocation8 + $0x164] sm:$0xf]
    %v4137 = vld [vmem:[#allocation8 + $0x168] sm:$0xf]
    %v4138 = vld [vmem:[#allocation8 + $0x16c] sm:$0xf]
    %v4139 = vld [vmem:[#allocation8 + $0x170] sm:$0xf]
    %v4140 = vld [vmem:[#allocation8 + $0x174] sm:$0xf]
    %v4141 = vld [vmem:[#allocation8 + $0x178] sm:$0xf]
    %v4142 = vld [vmem:[#allocation8 + $0x17c] sm:$0xf]
    %v4143 = vld [vmem:[#allocation8 + $0x180] sm:$0xf]
    %v4144 = vld [vmem:[#allocation8 + $0x184] sm:$0xf]
    %v4145 = vld [vmem:[#allocation8 + $0x188] sm:$0xf]
    %v4146 = vld [vmem:[#allocation8 + $0x18c] sm:$0xf]
    %v4147 = vld [vmem:[#allocation8 + $0x190] sm:$0xf]
    %v4148 = vld [vmem:[#allocation8 + $0x194] sm:$0xf]
    %v4149 = vld [vmem:[#allocation8 + $0x198] sm:$0xf]
    %v4150 = vld [vmem:[#allocation8 + $0x19c] sm:$0xf]
    %v4151 = vld [vmem:[#allocation8 + $0x1a0] sm:$0xf]
    %v4152 = vld [vmem:[#allocation8 + $0x1a4] sm:$0xf]
    %v4153 = vld [vmem:[#allocation8 + $0x1a8] sm:$0xf]
    %v4154 = vld [vmem:[#allocation8 + $0x1ac] sm:$0xf]
    %v4155 = vld [vmem:[#allocation8 + $0x1b0] sm:$0xf]
    %v4156 = vld [vmem:[#allocation8 + $0x1b4] sm:$0xf]
    %v4157 = vld [vmem:[#allocation8 + $0x1b8] sm:$0xf]
    %v4158 = vld [vmem:[#allocation8 + $0x1bc] sm:$0xf]
    %v4159 = vld [vmem:[#allocation8 + $0x1c0] sm:$0xf]
    %v4160 = vld [vmem:[#allocation8 + $0x1c4] sm:$0xf]
    %v4161 = vld [vmem:[#allocation8 + $0x1c8] sm:$0xf]
    %v4162 = vld [vmem:[#allocation8 + $0x1cc] sm:$0xf]
    %v4163 = vld [vmem:[#allocation8 + $0x1d0] sm:$0xf]
    %v4164 = vld [vmem:[#allocation8 + $0x1d4] sm:$0xf]
    %v4165 = vld [vmem:[#allocation8 + $0x1d8] sm:$0xf]
    %v4166 = vld [vmem:[#allocation8 + $0x1dc] sm:$0xf]
    %v4167 = vld [vmem:[#allocation8 + $0x1e0] sm:$0xf]
    %v4168 = vld [vmem:[#allocation8 + $0x1e4] sm:$0xf]
    %v4169 = vld [vmem:[#allocation8 + $0x1e8] sm:$0xf]
    %v4170 = vld [vmem:[#allocation8 + $0x1ec] sm:$0xf]
    %v4171 = vld [vmem:[#allocation8 + $0x1f0] sm:$0xf]
    %v4172 = vld [vmem:[#allocation8 + $0x1f4] sm:$0xf]
    %v4173 = vld [vmem:[#allocation8 + $0x1f8] sm:$0xf]
    %v4174 = vld [vmem:[#allocation8 + $0x1fc] sm:$0xf]
    %v4175 = vld [vmem:[#allocation10] sm:$0x1]
    %v4177 = vperm.slane %v4175, 0
    %v4307 = vunpack.c.l.b16 %v4047
    %v4308 = vunpack.c.l.b16 %v4048
    %v4309 = vunpack.c.l.b16 %v4049
    %v4310 = vunpack.c.l.b16 %v4050
    %v4311 = vunpack.c.l.b16 %v4051
    %v4312 = vunpack.c.l.b16 %v4052
    %v4313 = vunpack.c.l.b16 %v4053
    %v4314 = vunpack.c.l.b16 %v4054
    %v4315 = vunpack.c.l.b16 %v4055
    %v4316 = vunpack.c.l.b16 %v4056
    %v4317 = vunpack.c.l.b16 %v4057
    %v4318 = vunpack.c.l.b16 %v4058
    %v4319 = vunpack.c.l.b16 %v4059
    %v4320 = vunpack.c.l.b16 %v4060
    %v4321 = vunpack.c.l.b16 %v4061
    %v4322 = vunpack.c.l.b16 %v4062
    %v4323 = vunpack.c.l.b16 %v4063
    %v4324 = vunpack.c.l.b16 %v4064
    %v4325 = vunpack.c.l.b16 %v4065
    %v4326 = vunpack.c.l.b16 %v4066
    %v4327 = vunpack.c.l.b16 %v4067
    %v4328 = vunpack.c.l.b16 %v4068
    %v4329 = vunpack.c.l.b16 %v4069
    %v4330 = vunpack.c.l.b16 %v4070
    %v4331 = vunpack.c.l.b16 %v4071
    %v4332 = vunpack.c.l.b16 %v4072
    %v4333 = vunpack.c.l.b16 %v4073
    %v4334 = vunpack.c.l.b16 %v4074
    %v4335 = vunpack.c.l.b16 %v4075
    %v4336 = vunpack.c.l.b16 %v4076
    %v4337 = vunpack.c.l.b16 %v4077
    %v4338 = vunpack.c.l.b16 %v4078
    %v4339 = vunpack.c.l.b16 %v4079
    %v4340 = vunpack.c.l.b16 %v4080
    %v4341 = vunpack.c.l.b16 %v4081
    %v4342 = vunpack.c.l.b16 %v4082
    %v4343 = vunpack.c.l.b16 %v4083
    %v4344 = vunpack.c.l.b16 %v4084
    %v4345 = vunpack.c.l.b16 %v4085
    %v4346 = vunpack.c.l.b16 %v4086
    %v4347 = vunpack.c.l.b16 %v4087
    %v4348 = vunpack.c.l.b16 %v4088
    %v4349 = vunpack.c.l.b16 %v4089
    %v4350 = vunpack.c.l.b16 %v4090
    %v4351 = vunpack.c.l.b16 %v4091
    %v4352 = vunpack.c.l.b16 %v4092
    %v4353 = vunpack.c.l.b16 %v4093
    %v4354 = vunpack.c.l.b16 %v4094
    %v4355 = vunpack.c.l.b16 %v4095
    %v4356 = vunpack.c.l.b16 %v4096
    %v4357 = vunpack.c.l.b16 %v4097
    %v4358 = vunpack.c.l.b16 %v4098
    %v4359 = vunpack.c.l.b16 %v4099
    %v4360 = vunpack.c.l.b16 %v4100
    %v4361 = vunpack.c.l.b16 %v4101
    %v4362 = vunpack.c.l.b16 %v4102
    %v4363 = vunpack.c.l.b16 %v4103
    %v4364 = vunpack.c.l.b16 %v4104
    %v4365 = vunpack.c.l.b16 %v4105
    %v4366 = vunpack.c.l.b16 %v4106
    %v4367 = vunpack.c.l.b16 %v4107
    %v4368 = vunpack.c.l.b16 %v4108
    %v4369 = vunpack.c.l.b16 %v4109
    %v4370 = vunpack.c.l.b16 %v4110
    %v4371 = vunpack.c.l.b16 %v4111
    %v4372 = vunpack.c.l.b16 %v4112
    %v4373 = vunpack.c.l.b16 %v4113
    %v4374 = vunpack.c.l.b16 %v4114
    %v4375 = vunpack.c.l.b16 %v4115
    %v4376 = vunpack.c.l.b16 %v4116
    %v4377 = vunpack.c.l.b16 %v4117
    %v4378 = vunpack.c.l.b16 %v4118
    %v4379 = vunpack.c.l.b16 %v4119
    %v4380 = vunpack.c.l.b16 %v4120
    %v4381 = vunpack.c.l.b16 %v4121
    %v4382 = vunpack.c.l.b16 %v4122
    %v4383 = vunpack.c.l.b16 %v4123
    %v4384 = vunpack.c.l.b16 %v4124
    %v4385 = vunpack.c.l.b16 %v4125
    %v4386 = vunpack.c.l.b16 %v4126
    %v4387 = vunpack.c.l.b16 %v4127
    %v4388 = vunpack.c.l.b16 %v4128
    %v4389 = vunpack.c.l.b16 %v4129
    %v4390 = vunpack.c.l.b16 %v4130
    %v4391 = vunpack.c.l.b16 %v4131
    %v4392 = vunpack.c.l.b16 %v4132
    %v4393 = vunpack.c.l.b16 %v4133
    %v4394 = vunpack.c.l.b16 %v4134
    %v4395 = vunpack.c.l.b16 %v4135
    %v4396 = vunpack.c.l.b16 %v4136
    %v4397 = vunpack.c.l.b16 %v4137
    %v4398 = vunpack.c.l.b16 %v4138
    %v4399 = vunpack.c.l.b16 %v4139
    %v4400 = vunpack.c.l.b16 %v4140
    %v4401 = vunpack.c.l.b16 %v4141
    %v4402 = vunpack.c.l.b16 %v4142
    %v4403 = vunpack.c.l.b16 %v4143
    %v4404 = vunpack.c.l.b16 %v4144
    %v4405 = vunpack.c.l.b16 %v4145
    %v4406 = vunpack.c.l.b16 %v4146
    %v4407 = vunpack.c.l.b16 %v4147
    %v4408 = vunpack.c.l.b16 %v4148
    %v4409 = vunpack.c.l.b16 %v4149
    %v4410 = vunpack.c.l.b16 %v4150
    %v4411 = vunpack.c.l.b16 %v4151
    %v4412 = vunpack.c.l.b16 %v4152
    %v4413 = vunpack.c.l.b16 %v4153
    %v4414 = vunpack.c.l.b16 %v4154
    %v4415 = vunpack.c.l.b16 %v4155
    %v4416 = vunpack.c.l.b16 %v4156
    %v4417 = vunpack.c.l.b16 %v4157
    %v4418 = vunpack.c.l.b16 %v4158
    %v4419 = vunpack.c.l.b16 %v4159
    %v4420 = vunpack.c.l.b16 %v4160
    %v4421 = vunpack.c.l.b16 %v4161
    %v4422 = vunpack.c.l.b16 %v4162
    %v4423 = vunpack.c.l.b16 %v4163
    %v4424 = vunpack.c.l.b16 %v4164
    %v4425 = vunpack.c.l.b16 %v4165
    %v4426 = vunpack.c.l.b16 %v4166
    %v4427 = vunpack.c.l.b16 %v4167
    %v4428 = vunpack.c.l.b16 %v4168
    %v4429 = vunpack.c.l.b16 %v4169
    %v4430 = vunpack.c.l.b16 %v4170
    %v4431 = vunpack.c.l.b16 %v4171
    %v4432 = vunpack.c.l.b16 %v4172
    %v4433 = vunpack.c.l.b16 %v4173
    %v4434 = vunpack.c.l.b16 %v4174
    %v4435 = vpack.c.b16 %v4308, %v4307
    %v4436 = vpack.c.b16 %v4310, %v4309
    %v4437 = vpack.c.b16 %v4312, %v4311
    %v4438 = vpack.c.b16 %v4314, %v4313
    %v4439 = vpack.c.b16 %v4316, %v4315
    %v4440 = vpack.c.b16 %v4318, %v4317
    %v4441 = vpack.c.b16 %v4320, %v4319
    %v4442 = vpack.c.b16 %v4322, %v4321
    %v4443 = vpack.c.b16 %v4324, %v4323
    %v4444 = vpack.c.b16 %v4326, %v4325
    %v4445 = vpack.c.b16 %v4328, %v4327
    %v4446 = vpack.c.b16 %v4330, %v4329
    %v4447 = vpack.c.b16 %v4332, %v4331
    %v4448 = vpack.c.b16 %v4334, %v4333
    %v4449 = vpack.c.b16 %v4336, %v4335
    %v4450 = vpack.c.b16 %v4338, %v4337
    %v4451 = vpack.c.b16 %v4340, %v4339
    %v4452 = vpack.c.b16 %v4342, %v4341
    %v4453 = vpack.c.b16 %v4344, %v4343
    %v4454 = vpack.c.b16 %v4346, %v4345
    %v4455 = vpack.c.b16 %v4348, %v4347
    %v4456 = vpack.c.b16 %v4350, %v4349
    %v4457 = vpack.c.b16 %v4352, %v4351
    %v4458 = vpack.c.b16 %v4354, %v4353
    %v4459 = vpack.c.b16 %v4356, %v4355
    %v4460 = vpack.c.b16 %v4358, %v4357
    %v4461 = vpack.c.b16 %v4360, %v4359
    %v4462 = vpack.c.b16 %v4362, %v4361
    %v4463 = vpack.c.b16 %v4364, %v4363
    %v4464 = vpack.c.b16 %v4366, %v4365
    %v4465 = vpack.c.b16 %v4368, %v4367
    %v4466 = vpack.c.b16 %v4370, %v4369
    %v4467 = vpack.c.b16 %v4372, %v4371
    %v4468 = vpack.c.b16 %v4374, %v4373
    %v4469 = vpack.c.b16 %v4376, %v4375
    %v4470 = vpack.c.b16 %v4378, %v4377
    %v4471 = vpack.c.b16 %v4380, %v4379
    %v4472 = vpack.c.b16 %v4382, %v4381
    %v4473 = vpack.c.b16 %v4384, %v4383
    %v4474 = vpack.c.b16 %v4386, %v4385
    %v4475 = vpack.c.b16 %v4388, %v4387
    %v4476 = vpack.c.b16 %v4390, %v4389
    %v4477 = vpack.c.b16 %v4392, %v4391
    %v4478 = vpack.c.b16 %v4394, %v4393
    %v4479 = vpack.c.b16 %v4396, %v4395
    %v4480 = vpack.c.b16 %v4398, %v4397
    %v4481 = vpack.c.b16 %v4400, %v4399
    %v4482 = vpack.c.b16 %v4402, %v4401
    %v4483 = vpack.c.b16 %v4404, %v4403
    %v4484 = vpack.c.b16 %v4406, %v4405
    %v4485 = vpack.c.b16 %v4408, %v4407
    %v4486 = vpack.c.b16 %v4410, %v4409
    %v4487 = vpack.c.b16 %v4412, %v4411
    %v4488 = vpack.c.b16 %v4414, %v4413
    %v4489 = vpack.c.b16 %v4416, %v4415
    %v4490 = vpack.c.b16 %v4418, %v4417
    %v4491 = vpack.c.b16 %v4420, %v4419
    %v4492 = vpack.c.b16 %v4422, %v4421
    %v4493 = vpack.c.b16 %v4424, %v4423
    %v4494 = vpack.c.b16 %v4426, %v4425
    %v4495 = vpack.c.b16 %v4428, %v4427
    %v4496 = vpack.c.b16 %v4430, %v4429
    %v4497 = vpack.c.b16 %v4432, %v4431
    %v4498 = vpack.c.b16 %v4434, %v4433
    %4563 = vmatpush.bf16.msra.mxu0 %v4442
    %4564 = vmatpush.bf16.msra.mxu0 %v4441
    %4565 = vmatpush.bf16.msra.mxu0 %v4440
    %4566 = vmatpush.bf16.msra.mxu0 %v4439
    %4567 = vmatpush.bf16.msra.mxu0 %v4438
    %4568 = vmatpush.bf16.msra.mxu0 %v4437
    %4569 = vmatpush.bf16.msra.mxu0 %v4436
    %4570 = vmatpush.bf16.msra.mxu0 %v4435
    %4571 = vmatmul.bf16.gmra.mxu0 %v4039
    %v4572 = vpop.f32.mrf.mxu0
    %v4573 = vadd.f32 %v4177, %v4572
    %v4574 = vpop.f32.mrf.mxu0
    %4575 = vdwg.mxu0
    %4576 = vmatpush.bf16.msra.mxu0 %v4450
    %4577 = vmatpush.bf16.msra.mxu0 %v4449
    %4578 = vmatpush.bf16.msra.mxu0 %v4448
    %4579 = vmatpush.bf16.msra.mxu0 %v4447
    %4580 = vmatpush.bf16.msra.mxu0 %v4446
    %4581 = vmatpush.bf16.msra.mxu0 %v4445
    %4582 = vmatpush.bf16.msra.mxu0 %v4444
    %4583 = vmatpush.bf16.msra.mxu0 %v4443
    %4584 = vmatmul.bf16.gmra.mxu0 %v4040
    %v4585 = vpop.f32.mrf.mxu0
    %v4586 = vadd.f32 %v4573, %v4585
    %v4587 = vpop.f32.mrf.mxu0
    %4588 = vdwg.mxu0
    %4589 = vmatpush.bf16.msra.mxu0 %v4458
    %4590 = vmatpush.bf16.msra.mxu0 %v4457
    %4591 = vmatpush.bf16.msra.mxu0 %v4456
    %4592 = vmatpush.bf16.msra.mxu0 %v4455
    %4593 = vmatpush.bf16.msra.mxu0 %v4454
    %4594 = vmatpush.bf16.msra.mxu0 %v4453
    %4595 = vmatpush.bf16.msra.mxu0 %v4452
    %4596 = vmatpush.bf16.msra.mxu0 %v4451
    %4597 = vmatmul.bf16.gmra.mxu0 %v4041
    %v4598 = vpop.f32.mrf.mxu0
    %v4599 = vadd.f32 %v4586, %v4598
    %v4600 = vpop.f32.mrf.mxu0
    %4601 = vdwg.mxu0
    %4602 = vmatpush.bf16.msra.mxu0 %v4466
    %4603 = vmatpush.bf16.msra.mxu0 %v4465
    %4604 = vmatpush.bf16.msra.mxu0 %v4464
    %4605 = vmatpush.bf16.msra.mxu0 %v4463
    %4606 = vmatpush.bf16.msra.mxu0 %v4462
    %4607 = vmatpush.bf16.msra.mxu0 %v4461
    %4608 = vmatpush.bf16.msra.mxu0 %v4460
    %4609 = vmatpush.bf16.msra.mxu0 %v4459
    %4610 = vmatmul.bf16.gmra.mxu0 %v4042
    %v4611 = vpop.f32.mrf.mxu0
    %v4612 = vadd.f32 %v4599, %v4611
    %v4613 = vpop.f32.mrf.mxu0
    %4614 = vdwg.mxu0
    %4615 = vmatpush.bf16.msra.mxu0 %v4474
    %4616 = vmatpush.bf16.msra.mxu0 %v4473
    %4617 = vmatpush.bf16.msra.mxu0 %v4472
    %4618 = vmatpush.bf16.msra.mxu0 %v4471
    %4619 = vmatpush.bf16.msra.mxu0 %v4470
    %4620 = vmatpush.bf16.msra.mxu0 %v4469
    %4621 = vmatpush.bf16.msra.mxu0 %v4468
    %4622 = vmatpush.bf16.msra.mxu0 %v4467
    %4623 = vmatmul.bf16.gmra.mxu0 %v4043
    %v4624 = vpop.f32.mrf.mxu0
    %v4625 = vadd.f32 %v4612, %v4624
    %v4626 = vpop.f32.mrf.mxu0
    %4627 = vdwg.mxu0
    %4628 = vmatpush.bf16.msra.mxu0 %v4482
    %4629 = vmatpush.bf16.msra.mxu0 %v4481
    %4630 = vmatpush.bf16.msra.mxu0 %v4480
    %4631 = vmatpush.bf16.msra.mxu0 %v4479
    %4632 = vmatpush.bf16.msra.mxu0 %v4478
    %4633 = vmatpush.bf16.msra.mxu0 %v4477
    %4634 = vmatpush.bf16.msra.mxu0 %v4476
    %4635 = vmatpush.bf16.msra.mxu0 %v4475
    %4636 = vmatmul.bf16.gmra.mxu0 %v4044
    %v4637 = vpop.f32.mrf.mxu0
    %v4638 = vadd.f32 %v4625, %v4637
    %v4639 = vpop.f32.mrf.mxu0
    %4640 = vdwg.mxu0
    %4641 = vmatpush.bf16.msra.mxu0 %v4490
    %4642 = vmatpush.bf16.msra.mxu0 %v4489
    %4643 = vmatpush.bf16.msra.mxu0 %v4488
    %4644 = vmatpush.bf16.msra.mxu0 %v4487
    %4645 = vmatpush.bf16.msra.mxu0 %v4486
    %4646 = vmatpush.bf16.msra.mxu0 %v4485
    %4647 = vmatpush.bf16.msra.mxu0 %v4484
    %4648 = vmatpush.bf16.msra.mxu0 %v4483
    %4649 = vmatmul.bf16.gmra.mxu0 %v4045
    %v4650 = vpop.f32.mrf.mxu0
    %v4651 = vadd.f32 %v4638, %v4650
    %v4652 = vpop.f32.mrf.mxu0
    %4653 = vdwg.mxu0
    %4654 = vmatpush.bf16.msra.mxu0 %v4498
    %4655 = vmatpush.bf16.msra.mxu0 %v4497
    %4656 = vmatpush.bf16.msra.mxu0 %v4496
    %4657 = vmatpush.bf16.msra.mxu0 %v4495
    %4658 = vmatpush.bf16.msra.mxu0 %v4494
    %4659 = vmatpush.bf16.msra.mxu0 %v4493
    %4660 = vmatpush.bf16.msra.mxu0 %v4492
    %4661 = vmatpush.bf16.msra.mxu0 %v4491
    %4662 = vmatmul.bf16.gmra.mxu0 %v4046
    %v4663 = vpop.f32.mrf.mxu0
    %v4664 = vadd.f32 %v4651, %v4663
    %v4665 = vpop.f32.mrf.mxu0
    %4666 = vdwg.mxu0
    %4667 = vst [vmem:[#allocation11] sm:$0xff] %v4664
    // Predicated region
    $region42: #{tpu_custom_call.1} parent=1 // pred_check
      _
    $region43: #{tpu_custom_call.1} parent=1 // pred_check_branch
      %4669 = sbr.rel (0) target = $region45
    $region44: #{tpu_custom_call.1} parent=1 // pred_region
      %4671 = vsyncadd [#allocation4], 0
      %s4673 = sshll.u32 [#allocation11], 4
      %s4674 = int_to_ptr.vmem [resolvable:$true] %s4673
      %s4675 = sshll.u32 %s5, 4
      %s4676 = int_to_ptr.hbm [resolvable:$true] %s4675
      %4678 = dma.vmem_to_hbm [thread:$0]  %s4674, 128, %s4676, [#allocation4]
    $region45: #{tpu_custom_call.1} parent=1 // pred_fallthru
      _
    // Predicated region
    $region46: #{tpu_custom_call.1} parent=1 // pred_check
      _
    $region47: #{tpu_custom_call.1} parent=1 // pred_check_branch
      %4680 = sbr.rel (0) target = $region49
    $region48: #{tpu_custom_call.1} parent=1 // pred_region
      %4682 = dma.done [#allocation4], 128
    $region49: #{tpu_custom_call.1} parent=1 // pred_fallthru
      _
    %4683 = vsyncpa [#allocation3], 1
    %4684 = vsyncpa [#allocation6], 1
    %4685 = vsyncpa [#allocation9], 1
    %4686 = vsyncpa [#allocation4], 1

</llo_original>
